<compile_context>
chip_gen: v7x
topology: tpu7x:2x2x1
jax: 0.10.0
libtpu: 0.0.40
codegen_flags: <defaults>
</compile_context>

<pallas_src>
import jax
import jax.numpy as jnp
from jax import lax
from jax.experimental import pallas as pl
from jax.experimental.pallas import tpu as pltpu

# Small, module-consistent sizes (the real module uses vocab_size_trg=30522;
# we shrink the vocab so the synthetic fc1 weight stays small).
SEQ = 80
VOCAB = 512
IN_FEATURES = SEQ * VOCAB          # K = 40960
HIDDEN = 128

TK = 10240                         # reduction tile (multiple of 128)
NK = -(-IN_FEATURES // TK)         # grid steps (ceil div)
K_PAD = NK * TK                    # padded reduction length

# Actual double-buffered VMEM footprint + headroom (review: don't reserve 32 MiB).
_VMEM_LIMIT = 2 * (TK * HIDDEN * 2) + 2 * (TK * 4) + (2 << 20)


def _baseline_kernel(x_ref, w1_ref, b1_ref, w3_ref, b3_ref, o_ref, acc_ref):
    # x_ref  : (1, TK)          f32  slice of the flattened (padded) input
    # w1_ref : (1, TK, HIDDEN)  bf16 pre-packed fc1 weight tile (contiguous burst)
    # b1_ref : (1, HIDDEN) f32, w3_ref : (1, HIDDEN) f32, b3_ref : (1, 1) f32
    # o_ref  : (1, 1)           f32  final scalar output
    # acc_ref: (1, HIDDEN)      f32  persistent fc1 accumulator
    k = pl.program_id(0)

    @pl.when(k == 0)
    def _():
        acc_ref[...] = jnp.zeros_like(acc_ref)

    # (1, TK) @ (TK, HIDDEN) on the MXU, f32 accumulation.
    x_tile = x_ref[...].astype(jnp.bfloat16)
    acc_ref[...] += jnp.dot(x_tile, w1_ref[0],
                            preferred_element_type=jnp.float32)

    # Fused epilogue on the last reduction step: +b1, ReLU, fc3 (128->1), +b3.
    @pl.when(k == pl.num_programs(0) - 1)
    def _():
        h = jnp.maximum(acc_ref[...] + b1_ref[...], 0.0)       # (1, HIDDEN)
        y = jnp.sum(h * w3_ref[...], axis=1, keepdims=True)    # (1, 1)
        o_ref[...] = y + b3_ref[...]


def _fused_forward(x_row, w1_packed, b1, w3, b3):
    return pl.pallas_call(
        _baseline_kernel,
        out_shape=jax.ShapeDtypeStruct((1, 1), jnp.float32),
        grid_spec=pltpu.PrefetchScalarGridSpec(
            num_scalar_prefetch=0,
            grid=(NK,),
            in_specs=[
                # x tile: (1, TK) slice of the flattened input row (f32).
                pl.BlockSpec((1, TK), lambda k: (0, k)),
                # W1 tile: one contiguous (TK, HIDDEN) bf16 slab per grid step.
                pl.BlockSpec((1, TK, HIDDEN), lambda k: (k, 0, 0)),
                # Tiny resident operands for the fused epilogue.
                pl.BlockSpec((1, HIDDEN), lambda k: (0, 0)),
                pl.BlockSpec((1, HIDDEN), lambda k: (0, 0)),
                pl.BlockSpec((1, 1), lambda k: (0, 0)),
            ],
            out_specs=pl.BlockSpec((1, 1), lambda k: (0, 0)),
            scratch_shapes=[pltpu.VMEM((1, HIDDEN), jnp.float32)],
        ),
        compiler_params=pltpu.CompilerParams(
            dimension_semantics=("arbitrary",),   # pure reduction grid
            vmem_limit_bytes=_VMEM_LIMIT,
        ),
    )(x_row, w1_packed, b1, w3, b3)


def prepare_params(w1, b1, w3, b3):
    """One-time parameter packing, outside the per-call hot path.

    W1 (native PyTorch (HIDDEN, K) layout) is zero-padded along K, cast to
    bf16 (halves the HBM weight stream; accumulation stays f32), and re-packed
    grid-step-major as (NK, TK, HIDDEN) so each grid step is a single
    contiguous HBM burst feeding a non-transposed MXU matvec.
    """
    w1 = w1.astype(jnp.float32)
    if K_PAD != IN_FEATURES:
        w1 = jnp.pad(w1, ((0, 0), (0, K_PAD - IN_FEATURES)))
    w1_packed = (
        w1.reshape(HIDDEN, NK, TK).transpose(1, 2, 0).astype(jnp.bfloat16)
    )                                                     # (NK, TK, HIDDEN)
    return dict(
        w1=w1_packed,
        b1=b1.astype(jnp.float32).reshape(1, HIDDEN),
        w3=w3.astype(jnp.float32).reshape(1, HIDDEN),
        b3=b3.astype(jnp.float32).reshape(1, 1),
    )


@jax.jit
def baseline_estimator_forward(x, params):
    # x.view(-1) -> (1, K) row vector; stays f32 (cast to bf16 happens in-kernel).
    x_row = x.reshape(1, -1).astype(jnp.float32)
    if K_PAD != IN_FEATURES:
        x_row = jnp.pad(x_row, ((0, 0), (0, K_PAD - IN_FEATURES)))
    y = _fused_forward(x_row, params["w1"], params["b1"],
                       params["w3"], params["b3"])
    return y[0, 0]                                        # scalar (== .squeeze())


if __name__ == "__main__":
    key = jax.random.PRNGKey(0)
    k_x, k_w1, k_b1, k_w3, k_b3 = jax.random.split(key, 5)

    # Deterministic synthetic parameters (PyTorch-like uniform fan-in init).
    bound1 = 1.0 / (IN_FEATURES ** 0.5)
    bound3 = 1.0 / (HIDDEN ** 0.5)
    w1 = jax.random.uniform(k_w1, (HIDDEN, IN_FEATURES), jnp.float32, -bound1, bound1)
    b1 = jax.random.uniform(k_b1, (HIDDEN,), jnp.float32, -bound1, bound1)
    w3 = jax.random.uniform(k_w3, (1, HIDDEN), jnp.float32, -bound3, bound3)
    b3 = jax.random.uniform(k_b3, (1,), jnp.float32, -bound3, bound3)

    # Example input: (80, VOCAB) logits-like tensor, flattened by the forward.
    x = jax.random.normal(k_x, (SEQ, VOCAB), jnp.float32)

    params = prepare_params(w1, b1, w3, b3)
    y = baseline_estimator_forward(x, params)
    y = jax.block_until_ready(y)

    # Reference in plain JAX, mirroring the kernel's bf16 storage + f32 accumulation.
    x_q = x.reshape(-1).astype(jnp.bfloat16).astype(jnp.float32)
    w1_q = w1.astype(jnp.bfloat16).astype(jnp.float32)
    h_ref = jnp.maximum(x_q @ w1_q.T + b1, 0.0)
    y_ref = (h_ref @ w3.T + b3).squeeze()
    assert jnp.allclose(y, y_ref, rtol=1e-2, atol=1e-2), (y, y_ref)

    print("KERNEL_OK")
</pallas_src>

<mosaic_0001>
module attributes {stable_mosaic.version = 11 : i64} {
  func.func @_baseline_kernel(%arg0: i32, %arg1: memref<1x10240xf32, #tpu.memory_space<vmem>>, %arg2: memref<1x10240x128xbf16, #tpu.memory_space<vmem>>, %arg3: memref<1x128xf32, #tpu.memory_space<vmem>>, %arg4: memref<1x128xf32, #tpu.memory_space<vmem>>, %arg5: memref<1x1xf32, #tpu.memory_space<vmem>>, %arg6: memref<1x1xf32, #tpu.memory_space<vmem>>, %arg7: memref<1x128xf32, #tpu.memory_space<vmem>>) attributes {dimension_semantics = [#tpu.dimension_semantics<arbitrary>], iteration_bounds = array<i64: 4>, scalar_prefetch = 0 : i64, scratch_operands = 1 : i64, tpu.core_type = #tpu.core_type<tc>, window_params = [{transform_indices = @transform_0, window_bounds = array<i64: 1, 10240>}, {transform_indices = @transform_1, window_bounds = array<i64: 1, 10240, 128>}, {pipeline_mode = #tpu.pipeline_mode<synchronous>, transform_indices = @transform_2, window_bounds = array<i64: 1, 128>}, {pipeline_mode = #tpu.pipeline_mode<synchronous>, transform_indices = @transform_3, window_bounds = array<i64: 1, 128>}, {pipeline_mode = #tpu.pipeline_mode<synchronous>, transform_indices = @transform_4, window_bounds = array<i64: 1, 1>}, {pipeline_mode = #tpu.pipeline_mode<synchronous>, transform_indices = @transform_5, window_bounds = array<i64: 1, 1>}]} {
    %c0_i32 = arith.constant 0 : i32
    %0 = arith.cmpi eq, %arg0, %c0_i32 : i32
    %1 = arith.extui %0 : i1 to i32
    %c0_i32_0 = arith.constant 0 : i32
    %2 = arith.cmpi ne, %1, %c0_i32_0 : i32
    scf.if %2 {
      %cst_10 = arith.constant 0.000000e+00 : f32
      %14 = vector.broadcast %cst_10 : f32 to vector<1x128xf32>
      %c0_11 = arith.constant 0 : index
      %c0_12 = arith.constant 0 : index
      %15 = vector.load %arg7[%c0_11, %c0_12] : memref<1x128xf32, #tpu.memory_space<vmem>>, vector<1x128xf32>
      tpu.vector_store %arg7[%c0_11, %c0_12], %14 {strides = array<i32>} : memref<1x128xf32, #tpu.memory_space<vmem>>, vector<1x128xf32>,
    } else {
    }
    %c0 = arith.constant 0 : index
    %c0_1 = arith.constant 0 : index
    %3 = vector.load %arg1[%c0, %c0_1] : memref<1x10240xf32, #tpu.memory_space<vmem>>, vector<1x10240xf32>
    %4 = arith.truncf %3 : vector<1x10240xf32> to vector<1x10240xbf16>
    %c0_2 = arith.constant 0 : index
    %c0_3 = arith.constant 0 : index
    %5 = vector.load %arg7[%c0_2, %c0_3] : memref<1x128xf32, #tpu.memory_space<vmem>>, vector<1x128xf32>
    %c0_4 = arith.constant 0 : index
    %c0_5 = arith.constant 0 : index
    %c0_6 = arith.constant 0 : index
    %6 = vector.load %arg2[%c0_4, %c0_5, %c0_6] : memref<1x10240x128xbf16, #tpu.memory_space<vmem>>, vector<1x10240x128xbf16>
    %7 = vector.shape_cast %6 : vector<1x10240x128xbf16> to vector<10240x128xbf16>
    %cst = arith.constant dense<0.000000e+00> : vector<1x128xf32>
    %8 = tpu.matmul %4, %7, %cst {dimension_numbers = #tpu.dot_dimension_numbers<[1], [0], [0], [1], [0, 0, 1, 1], [], []>} : vector<1x10240xbf16>, vector<10240x128xbf16>, vector<1x128xf32> -> vector<1x128xf32>
    %9 = arith.addf %5, %8 : vector<1x128xf32>
    %c0_7 = arith.constant 0 : index
    %c0_8 = arith.constant 0 : index
    %10 = vector.load %arg7[%c0_7, %c0_8] : memref<1x128xf32, #tpu.memory_space<vmem>>, vector<1x128xf32>
    tpu.vector_store %arg7[%c0_7, %c0_8], %9 {strides = array<i32>} : memref<1x128xf32, #tpu.memory_space<vmem>>, vector<1x128xf32>,
    %c3_i32 = arith.constant 3 : i32
    %11 = arith.cmpi eq, %arg0, %c3_i32 : i32
    %12 = arith.extui %11 : i1 to i32
    %c0_i32_9 = arith.constant 0 : i32
    %13 = arith.cmpi ne, %12, %c0_i32_9 : i32
    scf.if %13 {
      %c0_10 = arith.constant 0 : index
      %c0_11 = arith.constant 0 : index
      %14 = vector.load %arg7[%c0_10, %c0_11] : memref<1x128xf32, #tpu.memory_space<vmem>>, vector<1x128xf32>
      %c0_12 = arith.constant 0 : index
      %c0_13 = arith.constant 0 : index
      %15 = vector.load %arg3[%c0_12, %c0_13] : memref<1x128xf32, #tpu.memory_space<vmem>>, vector<1x128xf32>
      %16 = arith.addf %14, %15 : vector<1x128xf32>
      %cst_14 = arith.constant 0.000000e+00 : f32
      %17 = vector.broadcast %cst_14 : f32 to vector<1x128xf32>
      %18 = arith.maximumf %16, %17 : vector<1x128xf32>
      %c0_15 = arith.constant 0 : index
      %c0_16 = arith.constant 0 : index
      %19 = vector.load %arg4[%c0_15, %c0_16] : memref<1x128xf32, #tpu.memory_space<vmem>>, vector<1x128xf32>
      %20 = arith.mulf %18, %19 : vector<1x128xf32>
      %cst_17 = arith.constant dense<0.000000e+00> : vector<1xf32>
      %21 = vector.multi_reduction <add>, %20, %cst_17 [1] : vector<1x128xf32> to vector<1xf32>
      %22 = vector.shape_cast %21 : vector<1xf32> to vector<1x1xf32>
      %c0_18 = arith.constant 0 : index
      %c0_19 = arith.constant 0 : index
      %23 = vector.load %arg5[%c0_18, %c0_19] : memref<1x1xf32, #tpu.memory_space<vmem>>, vector<1x1xf32>
      %24 = arith.addf %22, %23 : vector<1x1xf32>
      %c0_20 = arith.constant 0 : index
      %c0_21 = arith.constant 0 : index
      %25 = vector.load %arg6[%c0_20, %c0_21] : memref<1x1xf32, #tpu.memory_space<vmem>>, vector<1x1xf32>
      tpu.vector_store %arg6[%c0_20, %c0_21], %24 {strides = array<i32>} : memref<1x1xf32, #tpu.memory_space<vmem>>, vector<1x1xf32>,
    } else {
    }
    return
  }
  func.func @transform_0(%arg0: i32) -> (i32, i32) {
    %c0_i32 = arith.constant 0 : i32
    %c0_i32_0 = arith.constant 0 : i32
    return %c0_i32, %arg0 : i32, i32
  }
  func.func @transform_1(%arg0: i32) -> (i32, i32, i32) {
    %c0_i32 = arith.constant 0 : i32
    %c0_i32_0 = arith.constant 0 : i32
    %c0_i32_1 = arith.constant 0 : i32
    return %arg0, %c0_i32, %c0_i32_0 : i32, i32, i32
  }
  func.func @transform_2(%arg0: i32) -> (i32, i32) {
    %c0_i32 = arith.constant 0 : i32
    %c0_i32_0 = arith.constant 0 : i32
    %c0_i32_1 = arith.constant 0 : i32
    return %c0_i32, %c0_i32_0 : i32, i32
  }
  func.func @transform_3(%arg0: i32) -> (i32, i32) {
    %c0_i32 = arith.constant 0 : i32
    %c0_i32_0 = arith.constant 0 : i32
    %c0_i32_1 = arith.constant 0 : i32
    return %c0_i32, %c0_i32_0 : i32, i32
  }
  func.func @transform_4(%arg0: i32) -> (i32, i32) {
    %c0_i32 = arith.constant 0 : i32
    %c0_i32_0 = arith.constant 0 : i32
    %c0_i32_1 = arith.constant 0 : i32
    return %c0_i32, %c0_i32_0 : i32, i32
  }
  func.func @transform_5(%arg0: i32) -> (i32, i32) {
    %c0_i32 = arith.constant 0 : i32
    %c0_i32_0 = arith.constant 0 : i32
    %c0_i32_1 = arith.constant 0 : i32
    return %c0_i32, %c0_i32_0 : i32, i32
  }
}

</mosaic_0001>

<llo_original>
// kernel: baseline_estimator_forward.1
$region0: #{baseline_estimator_forward.1}
  #allocation0 [shape = 'u32[]', space=smem, size = 0x4, offset = 0x4, fixed_abs, tag = 'smem constant byte address 0x4 - core index']
  #allocation1 [shape = 'u32[144,128]{1,0:T(1,128)}', space=vmem, size = 0x12000, scoped, tag = 'internal scratch']
  #allocation2 [shape = 'f32[1,128]{1,0:T(1,128)}', space=vmem, size = 0x200, scoped, tag = 'scratch operand']
  #allocation3 [shape = 'f32[1,1]{1,0:T(1,128)S(1)}', space=vmem, size = 0x200, scoped, tag = 'scoped memory for baseline_estimator_forward.1']
  %s0 = inlined_call_operand.vmem [shape: f32[1,40960], index: 0, kind: input, shape index: {}]
  %s1 = inlined_call_operand.hbm [shape: bf16[4,10240,128], index: 1, kind: input, shape index: {}]
  %s2 = inlined_call_operand.hbm [shape: f32[1,128], index: 2, kind: input, shape index: {}]
  %s3 = inlined_call_operand.hbm [shape: f32[1,128], index: 3, kind: input, shape index: {}]
  %s4 = inlined_call_operand.<no memory space> [shape: f32[1,1], index: 4, kind: input, shape index: {}]
  %s5 = inlined_call_operand.hbm [shape: f32[1,1], index: 5, kind: output, shape index: {}]
  %s6 = sld [smem:[#allocation0]]
  $region73: #{baseline_estimator_forward.1} parent=0
    _
  %s8 = ssub.s32 1, %s6
  %s9 = scalar_select 0, %s8, %s6
  %v10 = vstv %s4
  %11 = vst [vmem:[#allocation3] sm:$0x1] %v10
  $region1: #{baseline_estimator_forward.1} parent=0
    #allocation4 [shape = 'u8[5242880]{0}', space=vmem, size = 0x500000, scoped, tag = 'input window, operand 1']
    #allocation5 [shape = 's32[2]{0}', space=sflag, size = 0x8, scoped, tag = 'scoped memory for baseline_estimator_forward.1']
    #allocation6 [shape = 's32[2]{0}', space=sflag, size = 0x8, scoped, tag = 'scoped memory for baseline_estimator_forward.1']
    #allocation7 [shape = 'u8[512]{0}', space=vmem, size = 0x400, scoped, tag = 'input window, operand 2, single buffered']
    #allocation8 [shape = 's32[1]{0}', space=sflag, size = 0x4, scoped, tag = 'scoped memory for baseline_estimator_forward.1']
    #allocation9 [shape = 'u8[512]{0}', space=vmem, size = 0x400, scoped, tag = 'input window, operand 3, single buffered']
    #allocation10 [shape = 'u8[512]{0}', space=vmem, size = 0x400, scoped, tag = 'output window, operand 0, single buffered']
    %12 = vsyncpa [#allocation5], 0
    %s13 = scalar_lea.sflag [#allocation5], 1
    %14 = vsyncpa %s13, 0
    %15 = vsyncpa [#allocation8], 0
    %16 = vsyncpa [#allocation6], 0
    loop: start=0, step=1, limit=6
    $region2: #{baseline_estimator_forward.1} parent=1 // loop_pre_header
      _
    $region3: #{baseline_estimator_forward.1} parent=1 // loop_header
      %s18 = sphi 0, %s22
      %p19 = scmp.ge.s32.totalorder %s18, 6
      %s28 = sphi 0, %s30
      %s31 = sphi 0, %s28
      %s32 = sphi 0, %s31
      %s48 = sphi 0, %s32
      %s54 = sphi 0, %s56
      %s57 = sphi 0, %s54
      %s58 = sphi 0, %s57
      %s74 = sphi 0, %s58
      %s78 = sphi 0, %s78
      %s80 = sphi 0, %s78
      %s81 = sphi 0, %s80
      %s95 = sphi 0, %s81
      %s99 = sphi 0, %s99
      %s101 = sphi 0, %s99
      %s102 = sphi 0, %s101
      %s116 = sphi 0, %s102
      %s120 = sphi 0, %s120
      %s122 = sphi 0, %s120
      %s123 = sphi 0, %s122
      %s137 = sphi 0, %s123
      %s141 = sphi 0, %s141
      %s143 = sphi 0, %s141
      %s144 = sphi 0, %s143
      %s158 = sphi 0, %s144
    $region4: #{baseline_estimator_forward.1} parent=1 // loop_header_branch
      %21 = sbr.rel (%p19) target = $region8
    $region5: #{baseline_estimator_forward.1} parent=1 // loop_body
      %s23 = ssub.s32 %s18, 1
      %s24 = ssub.s32 %s18, 2
      %s25 = sadd.s32 %s18, 1
      %s26 = ssub.s32 %s18, %s25
      %p27 = scmp.eq.s32.totalorder %s26, 0
      %s29 = sadd.s32 %s28, 1
      %s30 = scalar_select %p27, %s28, %s29
      %p33 = pneg %p27
      %p34 = scmp.eq.s32.totalorder %s18, 3
      %p35 = por %p33, %p34
      %p36 = scmp.ne.s32.totalorder %s28, %s31
      %p37 = scmp.eq.s32.totalorder %s18, 0
      %p38 = por %p36, %p37
      %p39 = scmp.ne.s32.totalorder %s28, %s31
      %p40 = scmp.eq.s32.totalorder %s23, 3
      %p41 = por %p39, %p40
      %p42 = scmp.ne.s32.totalorder %s31, %s32
      %p43 = scmp.eq.s32.totalorder %s23, 0
      %p44 = por %p42, %p43
      %p45 = scmp.ne.s32.totalorder %s31, %s32
      %p46 = scmp.eq.s32.totalorder %s24, 3
      %p47 = por %p45, %p46
      %p49 = scmp.ne.s32.totalorder %s32, %s48
      %p50 = scmp.eq.s32.totalorder %s24, 0
      %p51 = por %p49, %p50
      %s52 = ssub.s32 %s18, %s25
      %p53 = scmp.eq.s32.totalorder %s52, 0
      %s55 = sadd.s32 %s54, 1
      %s56 = scalar_select %p53, %s54, %s55
      %p59 = pneg %p53
      %p60 = scmp.eq.s32.totalorder %s18, 3
      %p61 = por %p59, %p60
      %p62 = scmp.ne.s32.totalorder %s54, %s57
      %p63 = scmp.eq.s32.totalorder %s18, 0
      %p64 = por %p62, %p63
      %p65 = scmp.ne.s32.totalorder %s54, %s57
      %p66 = scmp.eq.s32.totalorder %s23, 3
      %p67 = por %p65, %p66
      %p68 = scmp.ne.s32.totalorder %s57, %s58
      %p69 = scmp.eq.s32.totalorder %s23, 0
      %p70 = por %p68, %p69
      %p71 = scmp.ne.s32.totalorder %s57, %s58
      %p72 = scmp.eq.s32.totalorder %s24, 3
      %p73 = por %p71, %p72
      %p75 = scmp.ne.s32.totalorder %s58, %s74
      %p76 = scmp.eq.s32.totalorder %s24, 0
      %p77 = por %p75, %p76
      %s79 = sadd.s32 %s78, 1
      %p82 = scmp.eq.s32.totalorder %s18, 3
      %p83 = scmp.ne.s32.totalorder %s78, %s80
      %p84 = scmp.eq.s32.totalorder %s18, 0
      %p85 = por %p83, %p84
      %p86 = scmp.ne.s32.totalorder %s78, %s80
      %p87 = scmp.eq.s32.totalorder %s23, 3
      %p88 = por %p86, %p87
      %p89 = scmp.ne.s32.totalorder %s80, %s81
      %p90 = scmp.eq.s32.totalorder %s23, 0
      %p91 = por %p89, %p90
      %p92 = scmp.ne.s32.totalorder %s80, %s81
      %p93 = scmp.eq.s32.totalorder %s24, 3
      %p94 = por %p92, %p93
      %p96 = scmp.ne.s32.totalorder %s81, %s95
      %p97 = scmp.eq.s32.totalorder %s24, 0
      %p98 = por %p96, %p97
      %s100 = sadd.s32 %s99, 1
      %p103 = scmp.eq.s32.totalorder %s18, 3
      %p104 = scmp.ne.s32.totalorder %s99, %s101
      %p105 = scmp.eq.s32.totalorder %s18, 0
      %p106 = por %p104, %p105
      %p107 = scmp.ne.s32.totalorder %s99, %s101
      %p108 = scmp.eq.s32.totalorder %s23, 3
      %p109 = por %p107, %p108
      %p110 = scmp.ne.s32.totalorder %s101, %s102
      %p111 = scmp.eq.s32.totalorder %s23, 0
      %p112 = por %p110, %p111
      %p113 = scmp.ne.s32.totalorder %s101, %s102
      %p114 = scmp.eq.s32.totalorder %s24, 3
      %p115 = por %p113, %p114
      %p117 = scmp.ne.s32.totalorder %s102, %s116
      %p118 = scmp.eq.s32.totalorder %s24, 0
      %p119 = por %p117, %p118
      %s121 = sadd.s32 %s120, 1
      %p124 = scmp.eq.s32.totalorder %s18, 3
      %p125 = scmp.ne.s32.totalorder %s120, %s122
      %p126 = scmp.eq.s32.totalorder %s18, 0
      %p127 = por %p125, %p126
      %p128 = scmp.ne.s32.totalorder %s120, %s122
      %p129 = scmp.eq.s32.totalorder %s23, 3
      %p130 = por %p128, %p129
      %p131 = scmp.ne.s32.totalorder %s122, %s123
      %p132 = scmp.eq.s32.totalorder %s23, 0
      %p133 = por %p131, %p132
      %p134 = scmp.ne.s32.totalorder %s122, %s123
      %p135 = scmp.eq.s32.totalorder %s24, 3
      %p136 = por %p134, %p135
      %p138 = scmp.ne.s32.totalorder %s123, %s137
      %p139 = scmp.eq.s32.totalorder %s24, 0
      %p140 = por %p138, %p139
      %s142 = sadd.s32 %s141, 1
      %p145 = scmp.eq.s32.totalorder %s18, 3
      %p146 = scmp.ne.s32.totalorder %s141, %s143
      %p147 = scmp.eq.s32.totalorder %s18, 0
      %p148 = por %p146, %p147
      %p149 = scmp.ne.s32.totalorder %s141, %s143
      %p150 = scmp.eq.s32.totalorder %s23, 3
      %p151 = por %p149, %p150
      %p152 = scmp.ne.s32.totalorder %s143, %s144
      %p153 = scmp.eq.s32.totalorder %s23, 0
      %p154 = por %p152, %p153
      %p155 = scmp.ne.s32.totalorder %s143, %s144
      %p156 = scmp.eq.s32.totalorder %s24, 3
      %p157 = por %p155, %p156
      %p159 = scmp.ne.s32.totalorder %s144, %s158
      %p160 = scmp.eq.s32.totalorder %s24, 0
      %p161 = por %p159, %p160
      %p162 = scmp.le.s32.totalorder 1, %s18
      %p163 = scmp.lt.s32.totalorder %s18, 5
      %p164 = pnand %p162, %p163
      %p165 = pneg %p164
      // Predicated region
      $region9: #{baseline_estimator_forward.1} parent=5 // pred_check
        _
      $region10: #{baseline_estimator_forward.1} parent=5 // pred_check_branch
        %167 = sbr.rel (%p164) target = $region12
      $region11: #{baseline_estimator_forward.1} parent=5 // pred_region
        %s168 = ssub.s32 %s18, 1
        // Predicated region
        $region13: #{baseline_estimator_forward.1} parent=11 // pred_check
          %p169 = pneg %p91
        $region14: #{baseline_estimator_forward.1} parent=11 // pred_check_branch
          %171 = sbr.rel (%p169) target = $region16
        $region15: #{baseline_estimator_forward.1} parent=11 // pred_region
          %s173 = ssub.s32 16, 16
          %174 = vsyncadd [#allocation8], %s173
          %s176 = sshll.u32 [#allocation7], 4
          %s177 = int_to_ptr.vmem [resolvable:$true] %s176
          %179 = dma.hbm_to_vmem [thread:$0]  %s2, 16, %s177, [#allocation8]
        $region16: #{baseline_estimator_forward.1} parent=11 // pred_fallthru
          _
        // Predicated region
        $region17: #{baseline_estimator_forward.1} parent=11 // pred_check
          %p180 = pneg %p112
        $region18: #{baseline_estimator_forward.1} parent=11 // pred_check_branch
          %182 = sbr.rel (%p180) target = $region20
        $region19: #{baseline_estimator_forward.1} parent=11 // pred_region
          %s184 = ssub.s32 16, 16
          %185 = vsyncadd [#allocation8], %s184
          %s187 = sshll.u32 [#allocation9], 4
          %s188 = int_to_ptr.vmem [resolvable:$true] %s187
          %190 = dma.hbm_to_vmem [thread:$0]  %s3, 16, %s188, [#allocation8]
        $region20: #{baseline_estimator_forward.1} parent=11 // pred_fallthru
          _
        // Predicated region
        $region21: #{baseline_estimator_forward.1} parent=11 // pred_check
          %p191 = pneg %p133
        $region22: #{baseline_estimator_forward.1} parent=11 // pred_check_branch
          %193 = sbr.rel (%p191) target = $region24
        $region23: #{baseline_estimator_forward.1} parent=11 // pred_region
          _
        $region24: #{baseline_estimator_forward.1} parent=11 // pred_fallthru
          _
      $region12: #{baseline_estimator_forward.1} parent=5 // pred_fallthru
        _
      %p194 = scmp.lt.s32.totalorder %s18, 4
      // Predicated region
      $region25: #{baseline_estimator_forward.1} parent=5 // pred_check
        %p195 = pneg %p194
      $region26: #{baseline_estimator_forward.1} parent=5 // pred_check_branch
        %197 = sbr.rel (%p195) target = $region28
      $region27: #{baseline_estimator_forward.1} parent=5 // pred_region
        // Predicated region
        $region29: #{baseline_estimator_forward.1} parent=27 // pred_check
          %p198 = pneg %p38
        $region30: #{baseline_estimator_forward.1} parent=27 // pred_check_branch
          %200 = sbr.rel (%p198) target = $region32
        $region31: #{baseline_estimator_forward.1} parent=27 // pred_region
          %s201 = smul.u32 80, %s18
          %p202 = scmp.lt.s32.totalorder %s201, 319
          %s203 = scalar_select %p202, %s201, 319
          %s204 = scalar_lea.vmem %s0, %s203
          %s205 = smul.u32 80, %s18
        $region32: #{baseline_estimator_forward.1} parent=27 // pred_fallthru
          _
        // Predicated region
        $region33: #{baseline_estimator_forward.1} parent=27 // pred_check
          %p206 = pneg %p64
        $region34: #{baseline_estimator_forward.1} parent=27 // pred_check_branch
          %208 = sbr.rel (%p206) target = $region36
        $region35: #{baseline_estimator_forward.1} parent=27 // pred_region
          %s209 = sand.u32 %s54, 1
          %s210 = scalar_lea.sflag [#allocation5], %s209
          %s211 = sand.u32 %s54, 1
          %s212 = smul.addr %s211, 5120
          %s213 = scalar_lea.vmem [#allocation4], %s212
          %s215 = ssub.s32 81920, 81920
          %216 = vsyncadd %s210, %s215
          %s217 = smul.addr %s18, 1280
          %s218 = smul.addr %s217, 64
          %s219 = scalar_lea.hbm %s1, %s218
          %s220 = sshll.u32 %s213, 4
          %s221 = int_to_ptr.vmem [resolvable:$true] %s220
          %226 = dma.hbm_to_vmem [thread:$0]  %s219, 81920, %s221, %s210, 64, 64, 4
        $region36: #{baseline_estimator_forward.1} parent=27 // pred_fallthru
          _
      $region28: #{baseline_estimator_forward.1} parent=5 // pred_fallthru
        _
      %p227 = scmp.le.s32.totalorder 1, %s18
      %p228 = scmp.lt.s32.totalorder %s18, 5
      %p229 = pnand %p227, %p228
      %p230 = pneg %p229
      // Predicated region
      $region37: #{baseline_estimator_forward.1} parent=5 // pred_check
        _
      $region38: #{baseline_estimator_forward.1} parent=5 // pred_check_branch
        %232 = sbr.rel (%p229) target = $region40
      $region39: #{baseline_estimator_forward.1} parent=5 // pred_region
        %s233 = ssub.s32 %s18, 1
        %s234 = sand.u32 %s57, 1
        %s235 = scalar_lea.sflag [#allocation5], %s234
        %s236 = sand.u32 %s57, 1
        %s237 = smul.addr %s236, 5120
        %s238 = scalar_lea.vmem [#allocation4], %s237
        // Predicated region
        $region41: #{baseline_estimator_forward.1} parent=39 // pred_check
          %p239 = pneg %p70
        $region42: #{baseline_estimator_forward.1} parent=39 // pred_check_branch
          %241 = sbr.rel (%p239) target = $region44
        $region43: #{baseline_estimator_forward.1} parent=39 // pred_region
          %242 = dma.done %s235, 81920
        $region44: #{baseline_estimator_forward.1} parent=39 // pred_fallthru
          _
        // Predicated region
        $region45: #{baseline_estimator_forward.1} parent=39 // pred_check
          %p243 = pneg %p91
        $region46: #{baseline_estimator_forward.1} parent=39 // pred_check_branch
          %245 = sbr.rel (%p243) target = $region48
        $region47: #{baseline_estimator_forward.1} parent=39 // pred_region
          %246 = dma.done [#allocation8], 16
        $region48: #{baseline_estimator_forward.1} parent=39 // pred_fallthru
          _
        // Predicated region
        $region49: #{baseline_estimator_forward.1} parent=39 // pred_check
          %p247 = pneg %p112
        $region50: #{baseline_estimator_forward.1} parent=39 // pred_check_branch
          %249 = sbr.rel (%p247) target = $region52
        $region51: #{baseline_estimator_forward.1} parent=39 // pred_region
          %250 = dma.done [#allocation8], 16
        $region52: #{baseline_estimator_forward.1} parent=39 // pred_fallthru
          _
        %s251 = smul.u32 80, %s23
        %p252 = scmp.lt.s32.totalorder %s251, 319
        %s253 = scalar_select %p252, %s251, 319
        %s254 = scalar_lea.vmem %s0, %s253
        %p255 = pneg %p44
        %p256 = pneg %p41
        %s257 = sand.u32 %s57, 1
        %s258 = scalar_lea.sflag [#allocation5], %s257
        %s259 = sand.u32 %s57, 1
        %s260 = smul.addr %s259, 5120
        %s261 = scalar_lea.vmem [#allocation4], %s260
        %p262 = pneg %p70
        %p263 = pneg %p67
        %p264 = pneg %p91
        %p265 = pneg %p88
        %p266 = pneg %p112
        %p267 = pneg %p109
        %p268 = pneg %p133
        %p269 = pneg %p130
        %p270 = pneg %p154
        %p271 = pneg %p151
        %s272 = smul.u32 80, %s23
        %p273 = scmp.lt.s32.totalorder %s272, 319
        %s274 = scalar_select %p273, %s272, 319
        %s275 = scalar_lea.vmem %s0, %s274
        %s276 = smul.u32 80, %s23
        %p278 = scmp.eq.s32.totalorder %s23, 0
        // Predicated region
        $region53: #{baseline_estimator_forward.1} parent=39 // pred_check
          %p279 = pneg %p278
        $region54: #{baseline_estimator_forward.1} parent=39 // pred_check_branch
          %281 = sbr.rel (%p279) target = $region56
        $region55: #{baseline_estimator_forward.1} parent=39 // pred_region
          %282 = vst [vmem:[#allocation2] sm:$0x1] 0.0
        $region56: #{baseline_estimator_forward.1} parent=39 // pred_fallthru
          _
        %v283 = vld [vmem:[%s275] sm:$0xff]
        %v284 = vld [vmem:[%s275 + $0x8] sm:$0xff]
        %v285 = vld [vmem:[%s275 + $0x10] sm:$0xff]
        %v286 = vld [vmem:[%s275 + $0x18] sm:$0xff]
        %v287 = vld [vmem:[%s275 + $0x20] sm:$0xff]
        %v288 = vld [vmem:[%s275 + $0x28] sm:$0xff]
        %v289 = vld [vmem:[%s275 + $0x30] sm:$0xff]
        %v290 = vld [vmem:[%s275 + $0x38] sm:$0xff]
        %v291 = vld [vmem:[%s275 + $0x40] sm:$0xff]
        %v292 = vld [vmem:[%s275 + $0x48] sm:$0xff]
        %v303 = vlaneseq
        %v304 = vshrl.u32 %v303, 7
        %v305 = vsub.s32 0, %v304
        %v306 = vrot.slane %v283, %v305
        %v307 = vlaneseq
        %v308 = vshrl.u32 %v307, 7
        %v309 = vsub.s32 1, %v308
        %v310 = vrot.slane %v283, %v309
        %v311 = vlaneseq
        %v312 = vshrl.u32 %v311, 7
        %v313 = vsub.s32 2, %v312
        %v314 = vrot.slane %v283, %v313
        %v315 = vlaneseq
        %v316 = vshrl.u32 %v315, 7
        %v317 = vsub.s32 3, %v316
        %v318 = vrot.slane %v283, %v317
        %v319 = vlaneseq
        %v320 = vshrl.u32 %v319, 7
        %v321 = vsub.s32 4, %v320
        %v322 = vrot.slane %v283, %v321
        %v323 = vlaneseq
        %v324 = vshrl.u32 %v323, 7
        %v325 = vsub.s32 5, %v324
        %v326 = vrot.slane %v283, %v325
        %v327 = vlaneseq
        %v328 = vshrl.u32 %v327, 7
        %v329 = vsub.s32 6, %v328
        %v330 = vrot.slane %v283, %v329
        %v331 = vlaneseq
        %v332 = vshrl.u32 %v331, 7
        %v333 = vsub.s32 7, %v332
        %v334 = vrot.slane %v283, %v333
        %v335 = vlaneseq
        %v336 = vshrl.u32 %v335, 7
        %v337 = vsub.s32 0, %v336
        %v338 = vrot.slane %v284, %v337
        %v339 = vlaneseq
        %v340 = vshrl.u32 %v339, 7
        %v341 = vsub.s32 1, %v340
        %v342 = vrot.slane %v284, %v341
        %v343 = vlaneseq
        %v344 = vshrl.u32 %v343, 7
        %v345 = vsub.s32 2, %v344
        %v346 = vrot.slane %v284, %v345
        %v347 = vlaneseq
        %v348 = vshrl.u32 %v347, 7
        %v349 = vsub.s32 3, %v348
        %v350 = vrot.slane %v284, %v349
        %v351 = vlaneseq
        %v352 = vshrl.u32 %v351, 7
        %v353 = vsub.s32 4, %v352
        %v354 = vrot.slane %v284, %v353
        %v355 = vlaneseq
        %v356 = vshrl.u32 %v355, 7
        %v357 = vsub.s32 5, %v356
        %v358 = vrot.slane %v284, %v357
        %v359 = vlaneseq
        %v360 = vshrl.u32 %v359, 7
        %v361 = vsub.s32 6, %v360
        %v362 = vrot.slane %v284, %v361
        %v363 = vlaneseq
        %v364 = vshrl.u32 %v363, 7
        %v365 = vsub.s32 7, %v364
        %v366 = vrot.slane %v284, %v365
        %v367 = vlaneseq
        %v368 = vshrl.u32 %v367, 7
        %v369 = vsub.s32 0, %v368
        %v370 = vrot.slane %v285, %v369
        %v371 = vlaneseq
        %v372 = vshrl.u32 %v371, 7
        %v373 = vsub.s32 1, %v372
        %v374 = vrot.slane %v285, %v373
        %v375 = vlaneseq
        %v376 = vshrl.u32 %v375, 7
        %v377 = vsub.s32 2, %v376
        %v378 = vrot.slane %v285, %v377
        %v379 = vlaneseq
        %v380 = vshrl.u32 %v379, 7
        %v381 = vsub.s32 3, %v380
        %v382 = vrot.slane %v285, %v381
        %v383 = vlaneseq
        %v384 = vshrl.u32 %v383, 7
        %v385 = vsub.s32 4, %v384
        %v386 = vrot.slane %v285, %v385
        %v387 = vlaneseq
        %v388 = vshrl.u32 %v387, 7
        %v389 = vsub.s32 5, %v388
        %v390 = vrot.slane %v285, %v389
        %v391 = vlaneseq
        %v392 = vshrl.u32 %v391, 7
        %v393 = vsub.s32 6, %v392
        %v394 = vrot.slane %v285, %v393
        %v395 = vlaneseq
        %v396 = vshrl.u32 %v395, 7
        %v397 = vsub.s32 7, %v396
        %v398 = vrot.slane %v285, %v397
        %v399 = vlaneseq
        %v400 = vshrl.u32 %v399, 7
        %v401 = vsub.s32 0, %v400
        %v402 = vrot.slane %v286, %v401
        %v403 = vlaneseq
        %v404 = vshrl.u32 %v403, 7
        %v405 = vsub.s32 1, %v404
        %v406 = vrot.slane %v286, %v405
        %v407 = vlaneseq
        %v408 = vshrl.u32 %v407, 7
        %v409 = vsub.s32 2, %v408
        %v410 = vrot.slane %v286, %v409
        %v411 = vlaneseq
        %v412 = vshrl.u32 %v411, 7
        %v413 = vsub.s32 3, %v412
        %v414 = vrot.slane %v286, %v413
        %v415 = vlaneseq
        %v416 = vshrl.u32 %v415, 7
        %v417 = vsub.s32 4, %v416
        %v418 = vrot.slane %v286, %v417
        %v419 = vlaneseq
        %v420 = vshrl.u32 %v419, 7
        %v421 = vsub.s32 5, %v420
        %v422 = vrot.slane %v286, %v421
        %v423 = vlaneseq
        %v424 = vshrl.u32 %v423, 7
        %v425 = vsub.s32 6, %v424
        %v426 = vrot.slane %v286, %v425
        %v427 = vlaneseq
        %v428 = vshrl.u32 %v427, 7
        %v429 = vsub.s32 7, %v428
        %v430 = vrot.slane %v286, %v429
        %v431 = vlaneseq
        %v432 = vshrl.u32 %v431, 7
        %v433 = vsub.s32 0, %v432
        %v434 = vrot.slane %v287, %v433
        %v435 = vlaneseq
        %v436 = vshrl.u32 %v435, 7
        %v437 = vsub.s32 1, %v436
        %v438 = vrot.slane %v287, %v437
        %v439 = vlaneseq
        %v440 = vshrl.u32 %v439, 7
        %v441 = vsub.s32 2, %v440
        %v442 = vrot.slane %v287, %v441
        %v443 = vlaneseq
        %v444 = vshrl.u32 %v443, 7
        %v445 = vsub.s32 3, %v444
        %v446 = vrot.slane %v287, %v445
        %v447 = vlaneseq
        %v448 = vshrl.u32 %v447, 7
        %v449 = vsub.s32 4, %v448
        %v450 = vrot.slane %v287, %v449
        %v451 = vlaneseq
        %v452 = vshrl.u32 %v451, 7
        %v453 = vsub.s32 5, %v452
        %v454 = vrot.slane %v287, %v453
        %v455 = vlaneseq
        %v456 = vshrl.u32 %v455, 7
        %v457 = vsub.s32 6, %v456
        %v458 = vrot.slane %v287, %v457
        %v459 = vlaneseq
        %v460 = vshrl.u32 %v459, 7
        %v461 = vsub.s32 7, %v460
        %v462 = vrot.slane %v287, %v461
        %v463 = vlaneseq
        %v464 = vshrl.u32 %v463, 7
        %v465 = vsub.s32 0, %v464
        %v466 = vrot.slane %v288, %v465
        %v467 = vlaneseq
        %v468 = vshrl.u32 %v467, 7
        %v469 = vsub.s32 1, %v468
        %v470 = vrot.slane %v288, %v469
        %v471 = vlaneseq
        %v472 = vshrl.u32 %v471, 7
        %v473 = vsub.s32 2, %v472
        %v474 = vrot.slane %v288, %v473
        %v475 = vlaneseq
        %v476 = vshrl.u32 %v475, 7
        %v477 = vsub.s32 3, %v476
        %v478 = vrot.slane %v288, %v477
        %v479 = vlaneseq
        %v480 = vshrl.u32 %v479, 7
        %v481 = vsub.s32 4, %v480
        %v482 = vrot.slane %v288, %v481
        %v483 = vlaneseq
        %v484 = vshrl.u32 %v483, 7
        %v485 = vsub.s32 5, %v484
        %v486 = vrot.slane %v288, %v485
        %v487 = vlaneseq
        %v488 = vshrl.u32 %v487, 7
        %v489 = vsub.s32 6, %v488
        %v490 = vrot.slane %v288, %v489
        %v491 = vlaneseq
        %v492 = vshrl.u32 %v491, 7
        %v493 = vsub.s32 7, %v492
        %v494 = vrot.slane %v288, %v493
        %v495 = vlaneseq
        %v496 = vshrl.u32 %v495, 7
        %v497 = vsub.s32 0, %v496
        %v498 = vrot.slane %v289, %v497
        %v499 = vlaneseq
        %v500 = vshrl.u32 %v499, 7
        %v501 = vsub.s32 1, %v500
        %v502 = vrot.slane %v289, %v501
        %v503 = vlaneseq
        %v504 = vshrl.u32 %v503, 7
        %v505 = vsub.s32 2, %v504
        %v506 = vrot.slane %v289, %v505
        %v507 = vlaneseq
        %v508 = vshrl.u32 %v507, 7
        %v509 = vsub.s32 3, %v508
        %v510 = vrot.slane %v289, %v509
        %v511 = vlaneseq
        %v512 = vshrl.u32 %v511, 7
        %v513 = vsub.s32 4, %v512
        %v514 = vrot.slane %v289, %v513
        %v515 = vlaneseq
        %v516 = vshrl.u32 %v515, 7
        %v517 = vsub.s32 5, %v516
        %v518 = vrot.slane %v289, %v517
        %v519 = vlaneseq
        %v520 = vshrl.u32 %v519, 7
        %v521 = vsub.s32 6, %v520
        %v522 = vrot.slane %v289, %v521
        %v523 = vlaneseq
        %v524 = vshrl.u32 %v523, 7
        %v525 = vsub.s32 7, %v524
        %v526 = vrot.slane %v289, %v525
        %v527 = vlaneseq
        %v528 = vshrl.u32 %v527, 7
        %v529 = vsub.s32 0, %v528
        %v530 = vrot.slane %v290, %v529
        %v531 = vlaneseq
        %v532 = vshrl.u32 %v531, 7
        %v533 = vsub.s32 1, %v532
        %v534 = vrot.slane %v290, %v533
        %v535 = vlaneseq
        %v536 = vshrl.u32 %v535, 7
        %v537 = vsub.s32 2, %v536
        %v538 = vrot.slane %v290, %v537
        %v539 = vlaneseq
        %v540 = vshrl.u32 %v539, 7
        %v541 = vsub.s32 3, %v540
        %v542 = vrot.slane %v290, %v541
        %v543 = vlaneseq
        %v544 = vshrl.u32 %v543, 7
        %v545 = vsub.s32 4, %v544
        %v546 = vrot.slane %v290, %v545
        %v547 = vlaneseq
        %v548 = vshrl.u32 %v547, 7
        %v549 = vsub.s32 5, %v548
        %v550 = vrot.slane %v290, %v549
        %v551 = vlaneseq
        %v552 = vshrl.u32 %v551, 7
        %v553 = vsub.s32 6, %v552
        %v554 = vrot.slane %v290, %v553
        %v555 = vlaneseq
        %v556 = vshrl.u32 %v555, 7
        %v557 = vsub.s32 7, %v556
        %v558 = vrot.slane %v290, %v557
        %v559 = vlaneseq
        %v560 = vshrl.u32 %v559, 7
        %v561 = vsub.s32 0, %v560
        %v562 = vrot.slane %v291, %v561
        %v563 = vlaneseq
        %v564 = vshrl.u32 %v563, 7
        %v565 = vsub.s32 1, %v564
        %v566 = vrot.slane %v291, %v565
        %v567 = vlaneseq
        %v568 = vshrl.u32 %v567, 7
        %v569 = vsub.s32 2, %v568
        %v570 = vrot.slane %v291, %v569
        %v571 = vlaneseq
        %v572 = vshrl.u32 %v571, 7
        %v573 = vsub.s32 3, %v572
        %v574 = vrot.slane %v291, %v573
        %v575 = vlaneseq
        %v576 = vshrl.u32 %v575, 7
        %v577 = vsub.s32 4, %v576
        %v578 = vrot.slane %v291, %v577
        %v579 = vlaneseq
        %v580 = vshrl.u32 %v579, 7
        %v581 = vsub.s32 5, %v580
        %v582 = vrot.slane %v291, %v581
        %v583 = vlaneseq
        %v584 = vshrl.u32 %v583, 7
        %v585 = vsub.s32 6, %v584
        %v586 = vrot.slane %v291, %v585
        %v587 = vlaneseq
        %v588 = vshrl.u32 %v587, 7
        %v589 = vsub.s32 7, %v588
        %v590 = vrot.slane %v291, %v589
        %v591 = vlaneseq
        %v592 = vshrl.u32 %v591, 7
        %v593 = vsub.s32 0, %v592
        %v594 = vrot.slane %v292, %v593
        %v595 = vlaneseq
        %v596 = vshrl.u32 %v595, 7
        %v597 = vsub.s32 1, %v596
        %v598 = vrot.slane %v292, %v597
        %v599 = vlaneseq
        %v600 = vshrl.u32 %v599, 7
        %v601 = vsub.s32 2, %v600
        %v602 = vrot.slane %v292, %v601
        %v603 = vlaneseq
        %v604 = vshrl.u32 %v603, 7
        %v605 = vsub.s32 3, %v604
        %v606 = vrot.slane %v292, %v605
        %v607 = vlaneseq
        %v608 = vshrl.u32 %v607, 7
        %v609 = vsub.s32 4, %v608
        %v610 = vrot.slane %v292, %v609
        %v611 = vlaneseq
        %v612 = vshrl.u32 %v611, 7
        %v613 = vsub.s32 5, %v612
        %v614 = vrot.slane %v292, %v613
        %v615 = vlaneseq
        %v616 = vshrl.u32 %v615, 7
        %v617 = vsub.s32 6, %v616
        %v618 = vrot.slane %v292, %v617
        %v619 = vlaneseq
        %v620 = vshrl.u32 %v619, 7
        %v621 = vsub.s32 7, %v620
        %v622 = vrot.slane %v292, %v621
        %v703 = vpack.c.bf16 %v306, %v306
        %v704 = vpack.c.bf16 %v310, %v310
        %v705 = vpack.c.bf16 %v314, %v314
        %v706 = vpack.c.bf16 %v318, %v318
        %v707 = vpack.c.bf16 %v322, %v322
        %v708 = vpack.c.bf16 %v326, %v326
        %v709 = vpack.c.bf16 %v330, %v330
        %v710 = vpack.c.bf16 %v334, %v334
        %v711 = vpack.c.bf16 %v338, %v338
        %v712 = vpack.c.bf16 %v342, %v342
        %v713 = vpack.c.bf16 %v346, %v346
        %v714 = vpack.c.bf16 %v350, %v350
        %v715 = vpack.c.bf16 %v354, %v354
        %v716 = vpack.c.bf16 %v358, %v358
        %v717 = vpack.c.bf16 %v362, %v362
        %v718 = vpack.c.bf16 %v366, %v366
        %v719 = vpack.c.bf16 %v370, %v370
        %v720 = vpack.c.bf16 %v374, %v374
        %v721 = vpack.c.bf16 %v378, %v378
        %v722 = vpack.c.bf16 %v382, %v382
        %v723 = vpack.c.bf16 %v386, %v386
        %v724 = vpack.c.bf16 %v390, %v390
        %v725 = vpack.c.bf16 %v394, %v394
        %v726 = vpack.c.bf16 %v398, %v398
        %v727 = vpack.c.bf16 %v402, %v402
        %v728 = vpack.c.bf16 %v406, %v406
        %v729 = vpack.c.bf16 %v410, %v410
        %v730 = vpack.c.bf16 %v414, %v414
        %v731 = vpack.c.bf16 %v418, %v418
        %v732 = vpack.c.bf16 %v422, %v422
        %v733 = vpack.c.bf16 %v426, %v426
        %v734 = vpack.c.bf16 %v430, %v430
        %v735 = vpack.c.bf16 %v434, %v434
        %v736 = vpack.c.bf16 %v438, %v438
        %v737 = vpack.c.bf16 %v442, %v442
        %v738 = vpack.c.bf16 %v446, %v446
        %v739 = vpack.c.bf16 %v450, %v450
        %v740 = vpack.c.bf16 %v454, %v454
        %v741 = vpack.c.bf16 %v458, %v458
        %v742 = vpack.c.bf16 %v462, %v462
        %v743 = vpack.c.bf16 %v466, %v466
        %v744 = vpack.c.bf16 %v470, %v470
        %v745 = vpack.c.bf16 %v474, %v474
        %v746 = vpack.c.bf16 %v478, %v478
        %v747 = vpack.c.bf16 %v482, %v482
        %v748 = vpack.c.bf16 %v486, %v486
        %v749 = vpack.c.bf16 %v490, %v490
        %v750 = vpack.c.bf16 %v494, %v494
        %v751 = vpack.c.bf16 %v498, %v498
        %v752 = vpack.c.bf16 %v502, %v502
        %v753 = vpack.c.bf16 %v506, %v506
        %v754 = vpack.c.bf16 %v510, %v510
        %v755 = vpack.c.bf16 %v514, %v514
        %v756 = vpack.c.bf16 %v518, %v518
        %v757 = vpack.c.bf16 %v522, %v522
        %v758 = vpack.c.bf16 %v526, %v526
        %v759 = vpack.c.bf16 %v530, %v530
        %v760 = vpack.c.bf16 %v534, %v534
        %v761 = vpack.c.bf16 %v538, %v538
        %v762 = vpack.c.bf16 %v542, %v542
        %v763 = vpack.c.bf16 %v546, %v546
        %v764 = vpack.c.bf16 %v550, %v550
        %v765 = vpack.c.bf16 %v554, %v554
        %v766 = vpack.c.bf16 %v558, %v558
        %v767 = vpack.c.bf16 %v562, %v562
        %v768 = vpack.c.bf16 %v566, %v566
        %v769 = vpack.c.bf16 %v570, %v570
        %v770 = vpack.c.bf16 %v574, %v574
        %v771 = vpack.c.bf16 %v578, %v578
        %v772 = vpack.c.bf16 %v582, %v582
        %v773 = vpack.c.bf16 %v586, %v586
        %v774 = vpack.c.bf16 %v590, %v590
        %v775 = vpack.c.bf16 %v594, %v594
        %v776 = vpack.c.bf16 %v598, %v598
        %v777 = vpack.c.bf16 %v602, %v602
        %v778 = vpack.c.bf16 %v606, %v606
        %v779 = vpack.c.bf16 %v610, %v610
        %v780 = vpack.c.bf16 %v614, %v614
        %v781 = vpack.c.bf16 %v618, %v618
        %v782 = vpack.c.bf16 %v622, %v622
        %v783 = vld [vmem:[#allocation2] sm:$0x1]
        %v784 = vld [vmem:[%s238] sm:$0xf]
        %v785 = vld [vmem:[%s238 + $0x4] sm:$0xf]
        %v786 = vld [vmem:[%s238 + $0x8] sm:$0xf]
        %v787 = vld [vmem:[%s238 + $0xc] sm:$0xf]
        %v788 = vld [vmem:[%s238 + $0x10] sm:$0xf]
        %v789 = vld [vmem:[%s238 + $0x14] sm:$0xf]
        %v790 = vld [vmem:[%s238 + $0x18] sm:$0xf]
        %v791 = vld [vmem:[%s238 + $0x1c] sm:$0xf]
        %v792 = vld [vmem:[%s238 + $0x20] sm:$0xf]
        %v793 = vld [vmem:[%s238 + $0x24] sm:$0xf]
        %v794 = vld [vmem:[%s238 + $0x28] sm:$0xf]
        %v795 = vld [vmem:[%s238 + $0x2c] sm:$0xf]
        %v796 = vld [vmem:[%s238 + $0x30] sm:$0xf]
        %v797 = vld [vmem:[%s238 + $0x34] sm:$0xf]
        %v798 = vld [vmem:[%s238 + $0x38] sm:$0xf]
        %v799 = vld [vmem:[%s238 + $0x3c] sm:$0xf]
        %v800 = vld [vmem:[%s238 + $0x40] sm:$0xf]
        %v801 = vld [vmem:[%s238 + $0x44] sm:$0xf]
        %v802 = vld [vmem:[%s238 + $0x48] sm:$0xf]
        %v803 = vld [vmem:[%s238 + $0x4c] sm:$0xf]
        %v804 = vld [vmem:[%s238 + $0x50] sm:$0xf]
        %v805 = vld [vmem:[%s238 + $0x54] sm:$0xf]
        %v806 = vld [vmem:[%s238 + $0x58] sm:$0xf]
        %v807 = vld [vmem:[%s238 + $0x5c] sm:$0xf]
        %v808 = vld [vmem:[%s238 + $0x60] sm:$0xf]
        %v809 = vld [vmem:[%s238 + $0x64] sm:$0xf]
        %v810 = vld [vmem:[%s238 + $0x68] sm:$0xf]
        %v811 = vld [vmem:[%s238 + $0x6c] sm:$0xf]
        %v812 = vld [vmem:[%s238 + $0x70] sm:$0xf]
        %v813 = vld [vmem:[%s238 + $0x74] sm:$0xf]
        %v814 = vld [vmem:[%s238 + $0x78] sm:$0xf]
        %v815 = vld [vmem:[%s238 + $0x7c] sm:$0xf]
        %v816 = vld [vmem:[%s238 + $0x80] sm:$0xf]
        %v817 = vld [vmem:[%s238 + $0x84] sm:$0xf]
        %v818 = vld [vmem:[%s238 + $0x88] sm:$0xf]
        %v819 = vld [vmem:[%s238 + $0x8c] sm:$0xf]
        %v820 = vld [vmem:[%s238 + $0x90] sm:$0xf]
        %v821 = vld [vmem:[%s238 + $0x94] sm:$0xf]
        %v822 = vld [vmem:[%s238 + $0x98] sm:$0xf]
        %v823 = vld [vmem:[%s238 + $0x9c] sm:$0xf]
        %v824 = vld [vmem:[%s238 + $0xa0] sm:$0xf]
        %v825 = vld [vmem:[%s238 + $0xa4] sm:$0xf]
        %v826 = vld [vmem:[%s238 + $0xa8] sm:$0xf]
        %v827 = vld [vmem:[%s238 + $0xac] sm:$0xf]
        %v828 = vld [vmem:[%s238 + $0xb0] sm:$0xf]
        %v829 = vld [vmem:[%s238 + $0xb4] sm:$0xf]
        %v830 = vld [vmem:[%s238 + $0xb8] sm:$0xf]
        %v831 = vld [vmem:[%s238 + $0xbc] sm:$0xf]
        %v832 = vld [vmem:[%s238 + $0xc0] sm:$0xf]
        %v833 = vld [vmem:[%s238 + $0xc4] sm:$0xf]
        %v834 = vld [vmem:[%s238 + $0xc8] sm:$0xf]
        %v835 = vld [vmem:[%s238 + $0xcc] sm:$0xf]
        %v836 = vld [vmem:[%s238 + $0xd0] sm:$0xf]
        %v837 = vld [vmem:[%s238 + $0xd4] sm:$0xf]
        %v838 = vld [vmem:[%s238 + $0xd8] sm:$0xf]
        %v839 = vld [vmem:[%s238 + $0xdc] sm:$0xf]
        %v840 = vld [vmem:[%s238 + $0xe0] sm:$0xf]
        %v841 = vld [vmem:[%s238 + $0xe4] sm:$0xf]
        %v842 = vld [vmem:[%s238 + $0xe8] sm:$0xf]
        %v843 = vld [vmem:[%s238 + $0xec] sm:$0xf]
        %v844 = vld [vmem:[%s238 + $0xf0] sm:$0xf]
        %v845 = vld [vmem:[%s238 + $0xf4] sm:$0xf]
        %v846 = vld [vmem:[%s238 + $0xf8] sm:$0xf]
        %v847 = vld [vmem:[%s238 + $0xfc] sm:$0xf]
        %v848 = vld [vmem:[%s238 + $0x100] sm:$0xf]
        %v849 = vld [vmem:[%s238 + $0x104] sm:$0xf]
        %v850 = vld [vmem:[%s238 + $0x108] sm:$0xf]
        %v851 = vld [vmem:[%s238 + $0x10c] sm:$0xf]
        %v852 = vld [vmem:[%s238 + $0x110] sm:$0xf]
        %v853 = vld [vmem:[%s238 + $0x114] sm:$0xf]
        %v854 = vld [vmem:[%s238 + $0x118] sm:$0xf]
        %v855 = vld [vmem:[%s238 + $0x11c] sm:$0xf]
        %v856 = vld [vmem:[%s238 + $0x120] sm:$0xf]
        %v857 = vld [vmem:[%s238 + $0x124] sm:$0xf]
        %v858 = vld [vmem:[%s238 + $0x128] sm:$0xf]
        %v859 = vld [vmem:[%s238 + $0x12c] sm:$0xf]
        %v860 = vld [vmem:[%s238 + $0x130] sm:$0xf]
        %v861 = vld [vmem:[%s238 + $0x134] sm:$0xf]
        %v862 = vld [vmem:[%s238 + $0x138] sm:$0xf]
        %v863 = vld [vmem:[%s238 + $0x13c] sm:$0xf]
        %v864 = vld [vmem:[%s238 + $0x140] sm:$0xf]
        %v865 = vld [vmem:[%s238 + $0x144] sm:$0xf]
        %v866 = vld [vmem:[%s238 + $0x148] sm:$0xf]
        %v867 = vld [vmem:[%s238 + $0x14c] sm:$0xf]
        %v868 = vld [vmem:[%s238 + $0x150] sm:$0xf]
        %v869 = vld [vmem:[%s238 + $0x154] sm:$0xf]
        %v870 = vld [vmem:[%s238 + $0x158] sm:$0xf]
        %v871 = vld [vmem:[%s238 + $0x15c] sm:$0xf]
        %v872 = vld [vmem:[%s238 + $0x160] sm:$0xf]
        %v873 = vld [vmem:[%s238 + $0x164] sm:$0xf]
        %v874 = vld [vmem:[%s238 + $0x168] sm:$0xf]
        %v875 = vld [vmem:[%s238 + $0x16c] sm:$0xf]
        %v876 = vld [vmem:[%s238 + $0x170] sm:$0xf]
        %v877 = vld [vmem:[%s238 + $0x174] sm:$0xf]
        %v878 = vld [vmem:[%s238 + $0x178] sm:$0xf]
        %v879 = vld [vmem:[%s238 + $0x17c] sm:$0xf]
        %v880 = vld [vmem:[%s238 + $0x180] sm:$0xf]
        %v881 = vld [vmem:[%s238 + $0x184] sm:$0xf]
        %v882 = vld [vmem:[%s238 + $0x188] sm:$0xf]
        %v883 = vld [vmem:[%s238 + $0x18c] sm:$0xf]
        %v884 = vld [vmem:[%s238 + $0x190] sm:$0xf]
        %v885 = vld [vmem:[%s238 + $0x194] sm:$0xf]
        %v886 = vld [vmem:[%s238 + $0x198] sm:$0xf]
        %v887 = vld [vmem:[%s238 + $0x19c] sm:$0xf]
        %v888 = vld [vmem:[%s238 + $0x1a0] sm:$0xf]
        %v889 = vld [vmem:[%s238 + $0x1a4] sm:$0xf]
        %v890 = vld [vmem:[%s238 + $0x1a8] sm:$0xf]
        %v891 = vld [vmem:[%s238 + $0x1ac] sm:$0xf]
        %v892 = vld [vmem:[%s238 + $0x1b0] sm:$0xf]
        %v893 = vld [vmem:[%s238 + $0x1b4] sm:$0xf]
        %v894 = vld [vmem:[%s238 + $0x1b8] sm:$0xf]
        %v895 = vld [vmem:[%s238 + $0x1bc] sm:$0xf]
        %v896 = vld [vmem:[%s238 + $0x1c0] sm:$0xf]
        %v897 = vld [vmem:[%s238 + $0x1c4] sm:$0xf]
        %v898 = vld [vmem:[%s238 + $0x1c8] sm:$0xf]
        %v899 = vld [vmem:[%s238 + $0x1cc] sm:$0xf]
        %v900 = vld [vmem:[%s238 + $0x1d0] sm:$0xf]
        %v901 = vld [vmem:[%s238 + $0x1d4] sm:$0xf]
        %v902 = vld [vmem:[%s238 + $0x1d8] sm:$0xf]
        %v903 = vld [vmem:[%s238 + $0x1dc] sm:$0xf]
        %v904 = vld [vmem:[%s238 + $0x1e0] sm:$0xf]
        %v905 = vld [vmem:[%s238 + $0x1e4] sm:$0xf]
        %v906 = vld [vmem:[%s238 + $0x1e8] sm:$0xf]
        %v907 = vld [vmem:[%s238 + $0x1ec] sm:$0xf]
        %v908 = vld [vmem:[%s238 + $0x1f0] sm:$0xf]
        %v909 = vld [vmem:[%s238 + $0x1f4] sm:$0xf]
        %v910 = vld [vmem:[%s238 + $0x1f8] sm:$0xf]
        %v911 = vld [vmem:[%s238 + $0x1fc] sm:$0xf]
        %v912 = vld [vmem:[%s238 + $0x200] sm:$0xf]
        %v913 = vld [vmem:[%s238 + $0x204] sm:$0xf]
        %v914 = vld [vmem:[%s238 + $0x208] sm:$0xf]
        %v915 = vld [vmem:[%s238 + $0x20c] sm:$0xf]
        %v916 = vld [vmem:[%s238 + $0x210] sm:$0xf]
        %v917 = vld [vmem:[%s238 + $0x214] sm:$0xf]
        %v918 = vld [vmem:[%s238 + $0x218] sm:$0xf]
        %v919 = vld [vmem:[%s238 + $0x21c] sm:$0xf]
        %v920 = vld [vmem:[%s238 + $0x220] sm:$0xf]
        %v921 = vld [vmem:[%s238 + $0x224] sm:$0xf]
        %v922 = vld [vmem:[%s238 + $0x228] sm:$0xf]
        %v923 = vld [vmem:[%s238 + $0x22c] sm:$0xf]
        %v924 = vld [vmem:[%s238 + $0x230] sm:$0xf]
        %v925 = vld [vmem:[%s238 + $0x234] sm:$0xf]
        %v926 = vld [vmem:[%s238 + $0x238] sm:$0xf]
        %v927 = vld [vmem:[%s238 + $0x23c] sm:$0xf]
        %v928 = vld [vmem:[%s238 + $0x240] sm:$0xf]
        %v929 = vld [vmem:[%s238 + $0x244] sm:$0xf]
        %v930 = vld [vmem:[%s238 + $0x248] sm:$0xf]
        %v931 = vld [vmem:[%s238 + $0x24c] sm:$0xf]
        %v932 = vld [vmem:[%s238 + $0x250] sm:$0xf]
        %v933 = vld [vmem:[%s238 + $0x254] sm:$0xf]
        %v934 = vld [vmem:[%s238 + $0x258] sm:$0xf]
        %v935 = vld [vmem:[%s238 + $0x25c] sm:$0xf]
        %v936 = vld [vmem:[%s238 + $0x260] sm:$0xf]
        %v937 = vld [vmem:[%s238 + $0x264] sm:$0xf]
        %v938 = vld [vmem:[%s238 + $0x268] sm:$0xf]
        %v939 = vld [vmem:[%s238 + $0x26c] sm:$0xf]
        %v940 = vld [vmem:[%s238 + $0x270] sm:$0xf]
        %v941 = vld [vmem:[%s238 + $0x274] sm:$0xf]
        %v942 = vld [vmem:[%s238 + $0x278] sm:$0xf]
        %v943 = vld [vmem:[%s238 + $0x27c] sm:$0xf]
        %v944 = vld [vmem:[%s238 + $0x280] sm:$0xf]
        %v945 = vld [vmem:[%s238 + $0x284] sm:$0xf]
        %v946 = vld [vmem:[%s238 + $0x288] sm:$0xf]
        %v947 = vld [vmem:[%s238 + $0x28c] sm:$0xf]
        %v948 = vld [vmem:[%s238 + $0x290] sm:$0xf]
        %v949 = vld [vmem:[%s238 + $0x294] sm:$0xf]
        %v950 = vld [vmem:[%s238 + $0x298] sm:$0xf]
        %v951 = vld [vmem:[%s238 + $0x29c] sm:$0xf]
        %v952 = vld [vmem:[%s238 + $0x2a0] sm:$0xf]
        %v953 = vld [vmem:[%s238 + $0x2a4] sm:$0xf]
        %v954 = vld [vmem:[%s238 + $0x2a8] sm:$0xf]
        %v955 = vld [vmem:[%s238 + $0x2ac] sm:$0xf]
        %v956 = vld [vmem:[%s238 + $0x2b0] sm:$0xf]
        %v957 = vld [vmem:[%s238 + $0x2b4] sm:$0xf]
        %v958 = vld [vmem:[%s238 + $0x2b8] sm:$0xf]
        %v959 = vld [vmem:[%s238 + $0x2bc] sm:$0xf]
        %v960 = vld [vmem:[%s238 + $0x2c0] sm:$0xf]
        %v961 = vld [vmem:[%s238 + $0x2c4] sm:$0xf]
        %v962 = vld [vmem:[%s238 + $0x2c8] sm:$0xf]
        %v963 = vld [vmem:[%s238 + $0x2cc] sm:$0xf]
        %v964 = vld [vmem:[%s238 + $0x2d0] sm:$0xf]
        %v965 = vld [vmem:[%s238 + $0x2d4] sm:$0xf]
        %v966 = vld [vmem:[%s238 + $0x2d8] sm:$0xf]
        %v967 = vld [vmem:[%s238 + $0x2dc] sm:$0xf]
        %v968 = vld [vmem:[%s238 + $0x2e0] sm:$0xf]
        %v969 = vld [vmem:[%s238 + $0x2e4] sm:$0xf]
        %v970 = vld [vmem:[%s238 + $0x2e8] sm:$0xf]
        %v971 = vld [vmem:[%s238 + $0x2ec] sm:$0xf]
        %v972 = vld [vmem:[%s238 + $0x2f0] sm:$0xf]
        %v973 = vld [vmem:[%s238 + $0x2f4] sm:$0xf]
        %v974 = vld [vmem:[%s238 + $0x2f8] sm:$0xf]
        %v975 = vld [vmem:[%s238 + $0x2fc] sm:$0xf]
        %v976 = vld [vmem:[%s238 + $0x300] sm:$0xf]
        %v977 = vld [vmem:[%s238 + $0x304] sm:$0xf]
        %v978 = vld [vmem:[%s238 + $0x308] sm:$0xf]
        %v979 = vld [vmem:[%s238 + $0x30c] sm:$0xf]
        %v980 = vld [vmem:[%s238 + $0x310] sm:$0xf]
        %v981 = vld [vmem:[%s238 + $0x314] sm:$0xf]
        %v982 = vld [vmem:[%s238 + $0x318] sm:$0xf]
        %v983 = vld [vmem:[%s238 + $0x31c] sm:$0xf]
        %v984 = vld [vmem:[%s238 + $0x320] sm:$0xf]
        %v985 = vld [vmem:[%s238 + $0x324] sm:$0xf]
        %v986 = vld [vmem:[%s238 + $0x328] sm:$0xf]
        %v987 = vld [vmem:[%s238 + $0x32c] sm:$0xf]
        %v988 = vld [vmem:[%s238 + $0x330] sm:$0xf]
        %v989 = vld [vmem:[%s238 + $0x334] sm:$0xf]
        %v990 = vld [vmem:[%s238 + $0x338] sm:$0xf]
        %v991 = vld [vmem:[%s238 + $0x33c] sm:$0xf]
        %v992 = vld [vmem:[%s238 + $0x340] sm:$0xf]
        %v993 = vld [vmem:[%s238 + $0x344] sm:$0xf]
        %v994 = vld [vmem:[%s238 + $0x348] sm:$0xf]
        %v995 = vld [vmem:[%s238 + $0x34c] sm:$0xf]
        %v996 = vld [vmem:[%s238 + $0x350] sm:$0xf]
        %v997 = vld [vmem:[%s238 + $0x354] sm:$0xf]
        %v998 = vld [vmem:[%s238 + $0x358] sm:$0xf]
        %v999 = vld [vmem:[%s238 + $0x35c] sm:$0xf]
        %v1000 = vld [vmem:[%s238 + $0x360] sm:$0xf]
        %v1001 = vld [vmem:[%s238 + $0x364] sm:$0xf]
        %v1002 = vld [vmem:[%s238 + $0x368] sm:$0xf]
        %v1003 = vld [vmem:[%s238 + $0x36c] sm:$0xf]
        %v1004 = vld [vmem:[%s238 + $0x370] sm:$0xf]
        %v1005 = vld [vmem:[%s238 + $0x374] sm:$0xf]
        %v1006 = vld [vmem:[%s238 + $0x378] sm:$0xf]
        %v1007 = vld [vmem:[%s238 + $0x37c] sm:$0xf]
        %v1008 = vld [vmem:[%s238 + $0x380] sm:$0xf]
        %v1009 = vld [vmem:[%s238 + $0x384] sm:$0xf]
        %v1010 = vld [vmem:[%s238 + $0x388] sm:$0xf]
        %v1011 = vld [vmem:[%s238 + $0x38c] sm:$0xf]
        %v1012 = vld [vmem:[%s238 + $0x390] sm:$0xf]
        %v1013 = vld [vmem:[%s238 + $0x394] sm:$0xf]
        %v1014 = vld [vmem:[%s238 + $0x398] sm:$0xf]
        %v1015 = vld [vmem:[%s238 + $0x39c] sm:$0xf]
        %v1016 = vld [vmem:[%s238 + $0x3a0] sm:$0xf]
        %v1017 = vld [vmem:[%s238 + $0x3a4] sm:$0xf]
        %v1018 = vld [vmem:[%s238 + $0x3a8] sm:$0xf]
        %v1019 = vld [vmem:[%s238 + $0x3ac] sm:$0xf]
        %v1020 = vld [vmem:[%s238 + $0x3b0] sm:$0xf]
        %v1021 = vld [vmem:[%s238 + $0x3b4] sm:$0xf]
        %v1022 = vld [vmem:[%s238 + $0x3b8] sm:$0xf]
        %v1023 = vld [vmem:[%s238 + $0x3bc] sm:$0xf]
        %v1024 = vld [vmem:[%s238 + $0x3c0] sm:$0xf]
        %v1025 = vld [vmem:[%s238 + $0x3c4] sm:$0xf]
        %v1026 = vld [vmem:[%s238 + $0x3c8] sm:$0xf]
        %v1027 = vld [vmem:[%s238 + $0x3cc] sm:$0xf]
        %v1028 = vld [vmem:[%s238 + $0x3d0] sm:$0xf]
        %v1029 = vld [vmem:[%s238 + $0x3d4] sm:$0xf]
        %v1030 = vld [vmem:[%s238 + $0x3d8] sm:$0xf]
        %v1031 = vld [vmem:[%s238 + $0x3dc] sm:$0xf]
        %v1032 = vld [vmem:[%s238 + $0x3e0] sm:$0xf]
        %v1033 = vld [vmem:[%s238 + $0x3e4] sm:$0xf]
        %v1034 = vld [vmem:[%s238 + $0x3e8] sm:$0xf]
        %v1035 = vld [vmem:[%s238 + $0x3ec] sm:$0xf]
        %v1036 = vld [vmem:[%s238 + $0x3f0] sm:$0xf]
        %v1037 = vld [vmem:[%s238 + $0x3f4] sm:$0xf]
        %v1038 = vld [vmem:[%s238 + $0x3f8] sm:$0xf]
        %v1039 = vld [vmem:[%s238 + $0x3fc] sm:$0xf]
        %v1040 = vld [vmem:[%s238 + $0x400] sm:$0xf]
        %v1041 = vld [vmem:[%s238 + $0x404] sm:$0xf]
        %v1042 = vld [vmem:[%s238 + $0x408] sm:$0xf]
        %v1043 = vld [vmem:[%s238 + $0x40c] sm:$0xf]
        %v1044 = vld [vmem:[%s238 + $0x410] sm:$0xf]
        %v1045 = vld [vmem:[%s238 + $0x414] sm:$0xf]
        %v1046 = vld [vmem:[%s238 + $0x418] sm:$0xf]
        %v1047 = vld [vmem:[%s238 + $0x41c] sm:$0xf]
        %v1048 = vld [vmem:[%s238 + $0x420] sm:$0xf]
        %v1049 = vld [vmem:[%s238 + $0x424] sm:$0xf]
        %v1050 = vld [vmem:[%s238 + $0x428] sm:$0xf]
        %v1051 = vld [vmem:[%s238 + $0x42c] sm:$0xf]
        %v1052 = vld [vmem:[%s238 + $0x430] sm:$0xf]
        %v1053 = vld [vmem:[%s238 + $0x434] sm:$0xf]
        %v1054 = vld [vmem:[%s238 + $0x438] sm:$0xf]
        %v1055 = vld [vmem:[%s238 + $0x43c] sm:$0xf]
        %v1056 = vld [vmem:[%s238 + $0x440] sm:$0xf]
        %v1057 = vld [vmem:[%s238 + $0x444] sm:$0xf]
        %v1058 = vld [vmem:[%s238 + $0x448] sm:$0xf]
        %v1059 = vld [vmem:[%s238 + $0x44c] sm:$0xf]
        %v1060 = vld [vmem:[%s238 + $0x450] sm:$0xf]
        %v1061 = vld [vmem:[%s238 + $0x454] sm:$0xf]
        %v1062 = vld [vmem:[%s238 + $0x458] sm:$0xf]
        %v1063 = vld [vmem:[%s238 + $0x45c] sm:$0xf]
        %v1064 = vld [vmem:[%s238 + $0x460] sm:$0xf]
        %v1065 = vld [vmem:[%s238 + $0x464] sm:$0xf]
        %v1066 = vld [vmem:[%s238 + $0x468] sm:$0xf]
        %v1067 = vld [vmem:[%s238 + $0x46c] sm:$0xf]
        %v1068 = vld [vmem:[%s238 + $0x470] sm:$0xf]
        %v1069 = vld [vmem:[%s238 + $0x474] sm:$0xf]
        %v1070 = vld [vmem:[%s238 + $0x478] sm:$0xf]
        %v1071 = vld [vmem:[%s238 + $0x47c] sm:$0xf]
        %v1072 = vld [vmem:[%s238 + $0x480] sm:$0xf]
        %v1073 = vld [vmem:[%s238 + $0x484] sm:$0xf]
        %v1074 = vld [vmem:[%s238 + $0x488] sm:$0xf]
        %v1075 = vld [vmem:[%s238 + $0x48c] sm:$0xf]
        %v1076 = vld [vmem:[%s238 + $0x490] sm:$0xf]
        %v1077 = vld [vmem:[%s238 + $0x494] sm:$0xf]
        %v1078 = vld [vmem:[%s238 + $0x498] sm:$0xf]
        %v1079 = vld [vmem:[%s238 + $0x49c] sm:$0xf]
        %v1080 = vld [vmem:[%s238 + $0x4a0] sm:$0xf]
        %v1081 = vld [vmem:[%s238 + $0x4a4] sm:$0xf]
        %v1082 = vld [vmem:[%s238 + $0x4a8] sm:$0xf]
        %v1083 = vld [vmem:[%s238 + $0x4ac] sm:$0xf]
        %v1084 = vld [vmem:[%s238 + $0x4b0] sm:$0xf]
        %v1085 = vld [vmem:[%s238 + $0x4b4] sm:$0xf]
        %v1086 = vld [vmem:[%s238 + $0x4b8] sm:$0xf]
        %v1087 = vld [vmem:[%s238 + $0x4bc] sm:$0xf]
        %v1088 = vld [vmem:[%s238 + $0x4c0] sm:$0xf]
        %v1089 = vld [vmem:[%s238 + $0x4c4] sm:$0xf]
        %v1090 = vld [vmem:[%s238 + $0x4c8] sm:$0xf]
        %v1091 = vld [vmem:[%s238 + $0x4cc] sm:$0xf]
        %v1092 = vld [vmem:[%s238 + $0x4d0] sm:$0xf]
        %v1093 = vld [vmem:[%s238 + $0x4d4] sm:$0xf]
        %v1094 = vld [vmem:[%s238 + $0x4d8] sm:$0xf]
        %v1095 = vld [vmem:[%s238 + $0x4dc] sm:$0xf]
        %v1096 = vld [vmem:[%s238 + $0x4e0] sm:$0xf]
        %v1097 = vld [vmem:[%s238 + $0x4e4] sm:$0xf]
        %v1098 = vld [vmem:[%s238 + $0x4e8] sm:$0xf]
        %v1099 = vld [vmem:[%s238 + $0x4ec] sm:$0xf]
        %v1100 = vld [vmem:[%s238 + $0x4f0] sm:$0xf]
        %v1101 = vld [vmem:[%s238 + $0x4f4] sm:$0xf]
        %v1102 = vld [vmem:[%s238 + $0x4f8] sm:$0xf]
        %v1103 = vld [vmem:[%s238 + $0x4fc] sm:$0xf]
        %v1104 = vld [vmem:[%s238 + $0x500] sm:$0xf]
        %v1105 = vld [vmem:[%s238 + $0x504] sm:$0xf]
        %v1106 = vld [vmem:[%s238 + $0x508] sm:$0xf]
        %v1107 = vld [vmem:[%s238 + $0x50c] sm:$0xf]
        %v1108 = vld [vmem:[%s238 + $0x510] sm:$0xf]
        %v1109 = vld [vmem:[%s238 + $0x514] sm:$0xf]
        %v1110 = vld [vmem:[%s238 + $0x518] sm:$0xf]
        %v1111 = vld [vmem:[%s238 + $0x51c] sm:$0xf]
        %v1112 = vld [vmem:[%s238 + $0x520] sm:$0xf]
        %v1113 = vld [vmem:[%s238 + $0x524] sm:$0xf]
        %v1114 = vld [vmem:[%s238 + $0x528] sm:$0xf]
        %v1115 = vld [vmem:[%s238 + $0x52c] sm:$0xf]
        %v1116 = vld [vmem:[%s238 + $0x530] sm:$0xf]
        %v1117 = vld [vmem:[%s238 + $0x534] sm:$0xf]
        %v1118 = vld [vmem:[%s238 + $0x538] sm:$0xf]
        %v1119 = vld [vmem:[%s238 + $0x53c] sm:$0xf]
        %v1120 = vld [vmem:[%s238 + $0x540] sm:$0xf]
        %v1121 = vld [vmem:[%s238 + $0x544] sm:$0xf]
        %v1122 = vld [vmem:[%s238 + $0x548] sm:$0xf]
        %v1123 = vld [vmem:[%s238 + $0x54c] sm:$0xf]
        %v1124 = vld [vmem:[%s238 + $0x550] sm:$0xf]
        %v1125 = vld [vmem:[%s238 + $0x554] sm:$0xf]
        %v1126 = vld [vmem:[%s238 + $0x558] sm:$0xf]
        %v1127 = vld [vmem:[%s238 + $0x55c] sm:$0xf]
        %v1128 = vld [vmem:[%s238 + $0x560] sm:$0xf]
        %v1129 = vld [vmem:[%s238 + $0x564] sm:$0xf]
        %v1130 = vld [vmem:[%s238 + $0x568] sm:$0xf]
        %v1131 = vld [vmem:[%s238 + $0x56c] sm:$0xf]
        %v1132 = vld [vmem:[%s238 + $0x570] sm:$0xf]
        %v1133 = vld [vmem:[%s238 + $0x574] sm:$0xf]
        %v1134 = vld [vmem:[%s238 + $0x578] sm:$0xf]
        %v1135 = vld [vmem:[%s238 + $0x57c] sm:$0xf]
        %v1136 = vld [vmem:[%s238 + $0x580] sm:$0xf]
        %v1137 = vld [vmem:[%s238 + $0x584] sm:$0xf]
        %v1138 = vld [vmem:[%s238 + $0x588] sm:$0xf]
        %v1139 = vld [vmem:[%s238 + $0x58c] sm:$0xf]
        %v1140 = vld [vmem:[%s238 + $0x590] sm:$0xf]
        %v1141 = vld [vmem:[%s238 + $0x594] sm:$0xf]
        %v1142 = vld [vmem:[%s238 + $0x598] sm:$0xf]
        %v1143 = vld [vmem:[%s238 + $0x59c] sm:$0xf]
        %v1144 = vld [vmem:[%s238 + $0x5a0] sm:$0xf]
        %v1145 = vld [vmem:[%s238 + $0x5a4] sm:$0xf]
        %v1146 = vld [vmem:[%s238 + $0x5a8] sm:$0xf]
        %v1147 = vld [vmem:[%s238 + $0x5ac] sm:$0xf]
        %v1148 = vld [vmem:[%s238 + $0x5b0] sm:$0xf]
        %v1149 = vld [vmem:[%s238 + $0x5b4] sm:$0xf]
        %v1150 = vld [vmem:[%s238 + $0x5b8] sm:$0xf]
        %v1151 = vld [vmem:[%s238 + $0x5bc] sm:$0xf]
        %v1152 = vld [vmem:[%s238 + $0x5c0] sm:$0xf]
        %v1153 = vld [vmem:[%s238 + $0x5c4] sm:$0xf]
        %v1154 = vld [vmem:[%s238 + $0x5c8] sm:$0xf]
        %v1155 = vld [vmem:[%s238 + $0x5cc] sm:$0xf]
        %v1156 = vld [vmem:[%s238 + $0x5d0] sm:$0xf]
        %v1157 = vld [vmem:[%s238 + $0x5d4] sm:$0xf]
        %v1158 = vld [vmem:[%s238 + $0x5d8] sm:$0xf]
        %v1159 = vld [vmem:[%s238 + $0x5dc] sm:$0xf]
        %v1160 = vld [vmem:[%s238 + $0x5e0] sm:$0xf]
        %v1161 = vld [vmem:[%s238 + $0x5e4] sm:$0xf]
        %v1162 = vld [vmem:[%s238 + $0x5e8] sm:$0xf]
        %v1163 = vld [vmem:[%s238 + $0x5ec] sm:$0xf]
        %v1164 = vld [vmem:[%s238 + $0x5f0] sm:$0xf]
        %v1165 = vld [vmem:[%s238 + $0x5f4] sm:$0xf]
        %v1166 = vld [vmem:[%s238 + $0x5f8] sm:$0xf]
        %v1167 = vld [vmem:[%s238 + $0x5fc] sm:$0xf]
        %v1168 = vld [vmem:[%s238 + $0x600] sm:$0xf]
        %v1169 = vld [vmem:[%s238 + $0x604] sm:$0xf]
        %v1170 = vld [vmem:[%s238 + $0x608] sm:$0xf]
        %v1171 = vld [vmem:[%s238 + $0x60c] sm:$0xf]
        %v1172 = vld [vmem:[%s238 + $0x610] sm:$0xf]
        %v1173 = vld [vmem:[%s238 + $0x614] sm:$0xf]
        %v1174 = vld [vmem:[%s238 + $0x618] sm:$0xf]
        %v1175 = vld [vmem:[%s238 + $0x61c] sm:$0xf]
        %v1176 = vld [vmem:[%s238 + $0x620] sm:$0xf]
        %v1177 = vld [vmem:[%s238 + $0x624] sm:$0xf]
        %v1178 = vld [vmem:[%s238 + $0x628] sm:$0xf]
        %v1179 = vld [vmem:[%s238 + $0x62c] sm:$0xf]
        %v1180 = vld [vmem:[%s238 + $0x630] sm:$0xf]
        %v1181 = vld [vmem:[%s238 + $0x634] sm:$0xf]
        %v1182 = vld [vmem:[%s238 + $0x638] sm:$0xf]
        %v1183 = vld [vmem:[%s238 + $0x63c] sm:$0xf]
        %v1184 = vld [vmem:[%s238 + $0x640] sm:$0xf]
        %v1185 = vld [vmem:[%s238 + $0x644] sm:$0xf]
        %v1186 = vld [vmem:[%s238 + $0x648] sm:$0xf]
        %v1187 = vld [vmem:[%s238 + $0x64c] sm:$0xf]
        %v1188 = vld [vmem:[%s238 + $0x650] sm:$0xf]
        %v1189 = vld [vmem:[%s238 + $0x654] sm:$0xf]
        %v1190 = vld [vmem:[%s238 + $0x658] sm:$0xf]
        %v1191 = vld [vmem:[%s238 + $0x65c] sm:$0xf]
        %v1192 = vld [vmem:[%s238 + $0x660] sm:$0xf]
        %v1193 = vld [vmem:[%s238 + $0x664] sm:$0xf]
        %v1194 = vld [vmem:[%s238 + $0x668] sm:$0xf]
        %v1195 = vld [vmem:[%s238 + $0x66c] sm:$0xf]
        %v1196 = vld [vmem:[%s238 + $0x670] sm:$0xf]
        %v1197 = vld [vmem:[%s238 + $0x674] sm:$0xf]
        %v1198 = vld [vmem:[%s238 + $0x678] sm:$0xf]
        %v1199 = vld [vmem:[%s238 + $0x67c] sm:$0xf]
        %v1200 = vld [vmem:[%s238 + $0x680] sm:$0xf]
        %v1201 = vld [vmem:[%s238 + $0x684] sm:$0xf]
        %v1202 = vld [vmem:[%s238 + $0x688] sm:$0xf]
        %v1203 = vld [vmem:[%s238 + $0x68c] sm:$0xf]
        %v1204 = vld [vmem:[%s238 + $0x690] sm:$0xf]
        %v1205 = vld [vmem:[%s238 + $0x694] sm:$0xf]
        %v1206 = vld [vmem:[%s238 + $0x698] sm:$0xf]
        %v1207 = vld [vmem:[%s238 + $0x69c] sm:$0xf]
        %v1208 = vld [vmem:[%s238 + $0x6a0] sm:$0xf]
        %v1209 = vld [vmem:[%s238 + $0x6a4] sm:$0xf]
        %v1210 = vld [vmem:[%s238 + $0x6a8] sm:$0xf]
        %v1211 = vld [vmem:[%s238 + $0x6ac] sm:$0xf]
        %v1212 = vld [vmem:[%s238 + $0x6b0] sm:$0xf]
        %v1213 = vld [vmem:[%s238 + $0x6b4] sm:$0xf]
        %v1214 = vld [vmem:[%s238 + $0x6b8] sm:$0xf]
        %v1215 = vld [vmem:[%s238 + $0x6bc] sm:$0xf]
        %v1216 = vld [vmem:[%s238 + $0x6c0] sm:$0xf]
        %v1217 = vld [vmem:[%s238 + $0x6c4] sm:$0xf]
        %v1218 = vld [vmem:[%s238 + $0x6c8] sm:$0xf]
        %v1219 = vld [vmem:[%s238 + $0x6cc] sm:$0xf]
        %v1220 = vld [vmem:[%s238 + $0x6d0] sm:$0xf]
        %v1221 = vld [vmem:[%s238 + $0x6d4] sm:$0xf]
        %v1222 = vld [vmem:[%s238 + $0x6d8] sm:$0xf]
        %v1223 = vld [vmem:[%s238 + $0x6dc] sm:$0xf]
        %v1224 = vld [vmem:[%s238 + $0x6e0] sm:$0xf]
        %v1225 = vld [vmem:[%s238 + $0x6e4] sm:$0xf]
        %v1226 = vld [vmem:[%s238 + $0x6e8] sm:$0xf]
        %v1227 = vld [vmem:[%s238 + $0x6ec] sm:$0xf]
        %v1228 = vld [vmem:[%s238 + $0x6f0] sm:$0xf]
        %v1229 = vld [vmem:[%s238 + $0x6f4] sm:$0xf]
        %v1230 = vld [vmem:[%s238 + $0x6f8] sm:$0xf]
        %v1231 = vld [vmem:[%s238 + $0x6fc] sm:$0xf]
        %v1232 = vld [vmem:[%s238 + $0x700] sm:$0xf]
        %v1233 = vld [vmem:[%s238 + $0x704] sm:$0xf]
        %v1234 = vld [vmem:[%s238 + $0x708] sm:$0xf]
        %v1235 = vld [vmem:[%s238 + $0x70c] sm:$0xf]
        %v1236 = vld [vmem:[%s238 + $0x710] sm:$0xf]
        %v1237 = vld [vmem:[%s238 + $0x714] sm:$0xf]
        %v1238 = vld [vmem:[%s238 + $0x718] sm:$0xf]
        %v1239 = vld [vmem:[%s238 + $0x71c] sm:$0xf]
        %v1240 = vld [vmem:[%s238 + $0x720] sm:$0xf]
        %v1241 = vld [vmem:[%s238 + $0x724] sm:$0xf]
        %v1242 = vld [vmem:[%s238 + $0x728] sm:$0xf]
        %v1243 = vld [vmem:[%s238 + $0x72c] sm:$0xf]
        %v1244 = vld [vmem:[%s238 + $0x730] sm:$0xf]
        %v1245 = vld [vmem:[%s238 + $0x734] sm:$0xf]
        %v1246 = vld [vmem:[%s238 + $0x738] sm:$0xf]
        %v1247 = vld [vmem:[%s238 + $0x73c] sm:$0xf]
        %v1248 = vld [vmem:[%s238 + $0x740] sm:$0xf]
        %v1249 = vld [vmem:[%s238 + $0x744] sm:$0xf]
        %v1250 = vld [vmem:[%s238 + $0x748] sm:$0xf]
        %v1251 = vld [vmem:[%s238 + $0x74c] sm:$0xf]
        %v1252 = vld [vmem:[%s238 + $0x750] sm:$0xf]
        %v1253 = vld [vmem:[%s238 + $0x754] sm:$0xf]
        %v1254 = vld [vmem:[%s238 + $0x758] sm:$0xf]
        %v1255 = vld [vmem:[%s238 + $0x75c] sm:$0xf]
        %v1256 = vld [vmem:[%s238 + $0x760] sm:$0xf]
        %v1257 = vld [vmem:[%s238 + $0x764] sm:$0xf]
        %v1258 = vld [vmem:[%s238 + $0x768] sm:$0xf]
        %v1259 = vld [vmem:[%s238 + $0x76c] sm:$0xf]
        %v1260 = vld [vmem:[%s238 + $0x770] sm:$0xf]
        %v1261 = vld [vmem:[%s238 + $0x774] sm:$0xf]
        %v1262 = vld [vmem:[%s238 + $0x778] sm:$0xf]
        %v1263 = vld [vmem:[%s238 + $0x77c] sm:$0xf]
        %v1264 = vld [vmem:[%s238 + $0x780] sm:$0xf]
        %v1265 = vld [vmem:[%s238 + $0x784] sm:$0xf]
        %v1266 = vld [vmem:[%s238 + $0x788] sm:$0xf]
        %v1267 = vld [vmem:[%s238 + $0x78c] sm:$0xf]
        %v1268 = vld [vmem:[%s238 + $0x790] sm:$0xf]
        %v1269 = vld [vmem:[%s238 + $0x794] sm:$0xf]
        %v1270 = vld [vmem:[%s238 + $0x798] sm:$0xf]
        %v1271 = vld [vmem:[%s238 + $0x79c] sm:$0xf]
        %v1272 = vld [vmem:[%s238 + $0x7a0] sm:$0xf]
        %v1273 = vld [vmem:[%s238 + $0x7a4] sm:$0xf]
        %v1274 = vld [vmem:[%s238 + $0x7a8] sm:$0xf]
        %v1275 = vld [vmem:[%s238 + $0x7ac] sm:$0xf]
        %v1276 = vld [vmem:[%s238 + $0x7b0] sm:$0xf]
        %v1277 = vld [vmem:[%s238 + $0x7b4] sm:$0xf]
        %v1278 = vld [vmem:[%s238 + $0x7b8] sm:$0xf]
        %v1279 = vld [vmem:[%s238 + $0x7bc] sm:$0xf]
        %v1280 = vld [vmem:[%s238 + $0x7c0] sm:$0xf]
        %v1281 = vld [vmem:[%s238 + $0x7c4] sm:$0xf]
        %v1282 = vld [vmem:[%s238 + $0x7c8] sm:$0xf]
        %v1283 = vld [vmem:[%s238 + $0x7cc] sm:$0xf]
        %v1284 = vld [vmem:[%s238 + $0x7d0] sm:$0xf]
        %v1285 = vld [vmem:[%s238 + $0x7d4] sm:$0xf]
        %v1286 = vld [vmem:[%s238 + $0x7d8] sm:$0xf]
        %v1287 = vld [vmem:[%s238 + $0x7dc] sm:$0xf]
        %v1288 = vld [vmem:[%s238 + $0x7e0] sm:$0xf]
        %v1289 = vld [vmem:[%s238 + $0x7e4] sm:$0xf]
        %v1290 = vld [vmem:[%s238 + $0x7e8] sm:$0xf]
        %v1291 = vld [vmem:[%s238 + $0x7ec] sm:$0xf]
        %v1292 = vld [vmem:[%s238 + $0x7f0] sm:$0xf]
        %v1293 = vld [vmem:[%s238 + $0x7f4] sm:$0xf]
        %v1294 = vld [vmem:[%s238 + $0x7f8] sm:$0xf]
        %v1295 = vld [vmem:[%s238 + $0x7fc] sm:$0xf]
        %v1296 = vld [vmem:[%s238 + $0x800] sm:$0xf]
        %v1297 = vld [vmem:[%s238 + $0x804] sm:$0xf]
        %v1298 = vld [vmem:[%s238 + $0x808] sm:$0xf]
        %v1299 = vld [vmem:[%s238 + $0x80c] sm:$0xf]
        %v1300 = vld [vmem:[%s238 + $0x810] sm:$0xf]
        %v1301 = vld [vmem:[%s238 + $0x814] sm:$0xf]
        %v1302 = vld [vmem:[%s238 + $0x818] sm:$0xf]
        %v1303 = vld [vmem:[%s238 + $0x81c] sm:$0xf]
        %v1304 = vld [vmem:[%s238 + $0x820] sm:$0xf]
        %v1305 = vld [vmem:[%s238 + $0x824] sm:$0xf]
        %v1306 = vld [vmem:[%s238 + $0x828] sm:$0xf]
        %v1307 = vld [vmem:[%s238 + $0x82c] sm:$0xf]
        %v1308 = vld [vmem:[%s238 + $0x830] sm:$0xf]
        %v1309 = vld [vmem:[%s238 + $0x834] sm:$0xf]
        %v1310 = vld [vmem:[%s238 + $0x838] sm:$0xf]
        %v1311 = vld [vmem:[%s238 + $0x83c] sm:$0xf]
        %v1312 = vld [vmem:[%s238 + $0x840] sm:$0xf]
        %v1313 = vld [vmem:[%s238 + $0x844] sm:$0xf]
        %v1314 = vld [vmem:[%s238 + $0x848] sm:$0xf]
        %v1315 = vld [vmem:[%s238 + $0x84c] sm:$0xf]
        %v1316 = vld [vmem:[%s238 + $0x850] sm:$0xf]
        %v1317 = vld [vmem:[%s238 + $0x854] sm:$0xf]
        %v1318 = vld [vmem:[%s238 + $0x858] sm:$0xf]
        %v1319 = vld [vmem:[%s238 + $0x85c] sm:$0xf]
        %v1320 = vld [vmem:[%s238 + $0x860] sm:$0xf]
        %v1321 = vld [vmem:[%s238 + $0x864] sm:$0xf]
        %v1322 = vld [vmem:[%s238 + $0x868] sm:$0xf]
        %v1323 = vld [vmem:[%s238 + $0x86c] sm:$0xf]
        %v1324 = vld [vmem:[%s238 + $0x870] sm:$0xf]
        %v1325 = vld [vmem:[%s238 + $0x874] sm:$0xf]
        %v1326 = vld [vmem:[%s238 + $0x878] sm:$0xf]
        %v1327 = vld [vmem:[%s238 + $0x87c] sm:$0xf]
        %v1328 = vld [vmem:[%s238 + $0x880] sm:$0xf]
        %v1329 = vld [vmem:[%s238 + $0x884] sm:$0xf]
        %v1330 = vld [vmem:[%s238 + $0x888] sm:$0xf]
        %v1331 = vld [vmem:[%s238 + $0x88c] sm:$0xf]
        %v1332 = vld [vmem:[%s238 + $0x890] sm:$0xf]
        %v1333 = vld [vmem:[%s238 + $0x894] sm:$0xf]
        %v1334 = vld [vmem:[%s238 + $0x898] sm:$0xf]
        %v1335 = vld [vmem:[%s238 + $0x89c] sm:$0xf]
        %v1336 = vld [vmem:[%s238 + $0x8a0] sm:$0xf]
        %v1337 = vld [vmem:[%s238 + $0x8a4] sm:$0xf]
        %v1338 = vld [vmem:[%s238 + $0x8a8] sm:$0xf]
        %v1339 = vld [vmem:[%s238 + $0x8ac] sm:$0xf]
        %v1340 = vld [vmem:[%s238 + $0x8b0] sm:$0xf]
        %v1341 = vld [vmem:[%s238 + $0x8b4] sm:$0xf]
        %v1342 = vld [vmem:[%s238 + $0x8b8] sm:$0xf]
        %v1343 = vld [vmem:[%s238 + $0x8bc] sm:$0xf]
        %v1344 = vld [vmem:[%s238 + $0x8c0] sm:$0xf]
        %v1345 = vld [vmem:[%s238 + $0x8c4] sm:$0xf]
        %v1346 = vld [vmem:[%s238 + $0x8c8] sm:$0xf]
        %v1347 = vld [vmem:[%s238 + $0x8cc] sm:$0xf]
        %v1348 = vld [vmem:[%s238 + $0x8d0] sm:$0xf]
        %v1349 = vld [vmem:[%s238 + $0x8d4] sm:$0xf]
        %v1350 = vld [vmem:[%s238 + $0x8d8] sm:$0xf]
        %v1351 = vld [vmem:[%s238 + $0x8dc] sm:$0xf]
        %v1352 = vld [vmem:[%s238 + $0x8e0] sm:$0xf]
        %v1353 = vld [vmem:[%s238 + $0x8e4] sm:$0xf]
        %v1354 = vld [vmem:[%s238 + $0x8e8] sm:$0xf]
        %v1355 = vld [vmem:[%s238 + $0x8ec] sm:$0xf]
        %v1356 = vld [vmem:[%s238 + $0x8f0] sm:$0xf]
        %v1357 = vld [vmem:[%s238 + $0x8f4] sm:$0xf]
        %v1358 = vld [vmem:[%s238 + $0x8f8] sm:$0xf]
        %v1359 = vld [vmem:[%s238 + $0x8fc] sm:$0xf]
        %v1360 = vld [vmem:[%s238 + $0x900] sm:$0xf]
        %v1361 = vld [vmem:[%s238 + $0x904] sm:$0xf]
        %v1362 = vld [vmem:[%s238 + $0x908] sm:$0xf]
        %v1363 = vld [vmem:[%s238 + $0x90c] sm:$0xf]
        %v1364 = vld [vmem:[%s238 + $0x910] sm:$0xf]
        %v1365 = vld [vmem:[%s238 + $0x914] sm:$0xf]
        %v1366 = vld [vmem:[%s238 + $0x918] sm:$0xf]
        %v1367 = vld [vmem:[%s238 + $0x91c] sm:$0xf]
        %v1368 = vld [vmem:[%s238 + $0x920] sm:$0xf]
        %v1369 = vld [vmem:[%s238 + $0x924] sm:$0xf]
        %v1370 = vld [vmem:[%s238 + $0x928] sm:$0xf]
        %v1371 = vld [vmem:[%s238 + $0x92c] sm:$0xf]
        %v1372 = vld [vmem:[%s238 + $0x930] sm:$0xf]
        %v1373 = vld [vmem:[%s238 + $0x934] sm:$0xf]
        %v1374 = vld [vmem:[%s238 + $0x938] sm:$0xf]
        %v1375 = vld [vmem:[%s238 + $0x93c] sm:$0xf]
        %v1376 = vld [vmem:[%s238 + $0x940] sm:$0xf]
        %v1377 = vld [vmem:[%s238 + $0x944] sm:$0xf]
        %v1378 = vld [vmem:[%s238 + $0x948] sm:$0xf]
        %v1379 = vld [vmem:[%s238 + $0x94c] sm:$0xf]
        %v1380 = vld [vmem:[%s238 + $0x950] sm:$0xf]
        %v1381 = vld [vmem:[%s238 + $0x954] sm:$0xf]
        %v1382 = vld [vmem:[%s238 + $0x958] sm:$0xf]
        %v1383 = vld [vmem:[%s238 + $0x95c] sm:$0xf]
        %v1384 = vld [vmem:[%s238 + $0x960] sm:$0xf]
        %v1385 = vld [vmem:[%s238 + $0x964] sm:$0xf]
        %v1386 = vld [vmem:[%s238 + $0x968] sm:$0xf]
        %v1387 = vld [vmem:[%s238 + $0x96c] sm:$0xf]
        %v1388 = vld [vmem:[%s238 + $0x970] sm:$0xf]
        %v1389 = vld [vmem:[%s238 + $0x974] sm:$0xf]
        %v1390 = vld [vmem:[%s238 + $0x978] sm:$0xf]
        %v1391 = vld [vmem:[%s238 + $0x97c] sm:$0xf]
        %v1392 = vld [vmem:[%s238 + $0x980] sm:$0xf]
        %v1393 = vld [vmem:[%s238 + $0x984] sm:$0xf]
        %v1394 = vld [vmem:[%s238 + $0x988] sm:$0xf]
        %v1395 = vld [vmem:[%s238 + $0x98c] sm:$0xf]
        %v1396 = vld [vmem:[%s238 + $0x990] sm:$0xf]
        %v1397 = vld [vmem:[%s238 + $0x994] sm:$0xf]
        %v1398 = vld [vmem:[%s238 + $0x998] sm:$0xf]
        %v1399 = vld [vmem:[%s238 + $0x99c] sm:$0xf]
        %v1400 = vld [vmem:[%s238 + $0x9a0] sm:$0xf]
        %v1401 = vld [vmem:[%s238 + $0x9a4] sm:$0xf]
        %v1402 = vld [vmem:[%s238 + $0x9a8] sm:$0xf]
        %v1403 = vld [vmem:[%s238 + $0x9ac] sm:$0xf]
        %v1404 = vld [vmem:[%s238 + $0x9b0] sm:$0xf]
        %v1405 = vld [vmem:[%s238 + $0x9b4] sm:$0xf]
        %v1406 = vld [vmem:[%s238 + $0x9b8] sm:$0xf]
        %v1407 = vld [vmem:[%s238 + $0x9bc] sm:$0xf]
        %v1408 = vld [vmem:[%s238 + $0x9c0] sm:$0xf]
        %v1409 = vld [vmem:[%s238 + $0x9c4] sm:$0xf]
        %v1410 = vld [vmem:[%s238 + $0x9c8] sm:$0xf]
        %v1411 = vld [vmem:[%s238 + $0x9cc] sm:$0xf]
        %v1412 = vld [vmem:[%s238 + $0x9d0] sm:$0xf]
        %v1413 = vld [vmem:[%s238 + $0x9d4] sm:$0xf]
        %v1414 = vld [vmem:[%s238 + $0x9d8] sm:$0xf]
        %v1415 = vld [vmem:[%s238 + $0x9dc] sm:$0xf]
        %v1416 = vld [vmem:[%s238 + $0x9e0] sm:$0xf]
        %v1417 = vld [vmem:[%s238 + $0x9e4] sm:$0xf]
        %v1418 = vld [vmem:[%s238 + $0x9e8] sm:$0xf]
        %v1419 = vld [vmem:[%s238 + $0x9ec] sm:$0xf]
        %v1420 = vld [vmem:[%s238 + $0x9f0] sm:$0xf]
        %v1421 = vld [vmem:[%s238 + $0x9f4] sm:$0xf]
        %v1422 = vld [vmem:[%s238 + $0x9f8] sm:$0xf]
        %v1423 = vld [vmem:[%s238 + $0x9fc] sm:$0xf]
        %v1424 = vld [vmem:[%s238 + $0xa00] sm:$0xf]
        %v1425 = vld [vmem:[%s238 + $0xa04] sm:$0xf]
        %v1426 = vld [vmem:[%s238 + $0xa08] sm:$0xf]
        %v1427 = vld [vmem:[%s238 + $0xa0c] sm:$0xf]
        %v1428 = vld [vmem:[%s238 + $0xa10] sm:$0xf]
        %v1429 = vld [vmem:[%s238 + $0xa14] sm:$0xf]
        %v1430 = vld [vmem:[%s238 + $0xa18] sm:$0xf]
        %v1431 = vld [vmem:[%s238 + $0xa1c] sm:$0xf]
        %v1432 = vld [vmem:[%s238 + $0xa20] sm:$0xf]
        %v1433 = vld [vmem:[%s238 + $0xa24] sm:$0xf]
        %v1434 = vld [vmem:[%s238 + $0xa28] sm:$0xf]
        %v1435 = vld [vmem:[%s238 + $0xa2c] sm:$0xf]
        %v1436 = vld [vmem:[%s238 + $0xa30] sm:$0xf]
        %v1437 = vld [vmem:[%s238 + $0xa34] sm:$0xf]
        %v1438 = vld [vmem:[%s238 + $0xa38] sm:$0xf]
        %v1439 = vld [vmem:[%s238 + $0xa3c] sm:$0xf]
        %v1440 = vld [vmem:[%s238 + $0xa40] sm:$0xf]
        %v1441 = vld [vmem:[%s238 + $0xa44] sm:$0xf]
        %v1442 = vld [vmem:[%s238 + $0xa48] sm:$0xf]
        %v1443 = vld [vmem:[%s238 + $0xa4c] sm:$0xf]
        %v1444 = vld [vmem:[%s238 + $0xa50] sm:$0xf]
        %v1445 = vld [vmem:[%s238 + $0xa54] sm:$0xf]
        %v1446 = vld [vmem:[%s238 + $0xa58] sm:$0xf]
        %v1447 = vld [vmem:[%s238 + $0xa5c] sm:$0xf]
        %v1448 = vld [vmem:[%s238 + $0xa60] sm:$0xf]
        %v1449 = vld [vmem:[%s238 + $0xa64] sm:$0xf]
        %v1450 = vld [vmem:[%s238 + $0xa68] sm:$0xf]
        %v1451 = vld [vmem:[%s238 + $0xa6c] sm:$0xf]
        %v1452 = vld [vmem:[%s238 + $0xa70] sm:$0xf]
        %v1453 = vld [vmem:[%s238 + $0xa74] sm:$0xf]
        %v1454 = vld [vmem:[%s238 + $0xa78] sm:$0xf]
        %v1455 = vld [vmem:[%s238 + $0xa7c] sm:$0xf]
        %v1456 = vld [vmem:[%s238 + $0xa80] sm:$0xf]
        %v1457 = vld [vmem:[%s238 + $0xa84] sm:$0xf]
        %v1458 = vld [vmem:[%s238 + $0xa88] sm:$0xf]
        %v1459 = vld [vmem:[%s238 + $0xa8c] sm:$0xf]
        %v1460 = vld [vmem:[%s238 + $0xa90] sm:$0xf]
        %v1461 = vld [vmem:[%s238 + $0xa94] sm:$0xf]
        %v1462 = vld [vmem:[%s238 + $0xa98] sm:$0xf]
        %v1463 = vld [vmem:[%s238 + $0xa9c] sm:$0xf]
        %v1464 = vld [vmem:[%s238 + $0xaa0] sm:$0xf]
        %v1465 = vld [vmem:[%s238 + $0xaa4] sm:$0xf]
        %v1466 = vld [vmem:[%s238 + $0xaa8] sm:$0xf]
        %v1467 = vld [vmem:[%s238 + $0xaac] sm:$0xf]
        %v1468 = vld [vmem:[%s238 + $0xab0] sm:$0xf]
        %v1469 = vld [vmem:[%s238 + $0xab4] sm:$0xf]
        %v1470 = vld [vmem:[%s238 + $0xab8] sm:$0xf]
        %v1471 = vld [vmem:[%s238 + $0xabc] sm:$0xf]
        %v1472 = vld [vmem:[%s238 + $0xac0] sm:$0xf]
        %v1473 = vld [vmem:[%s238 + $0xac4] sm:$0xf]
        %v1474 = vld [vmem:[%s238 + $0xac8] sm:$0xf]
        %v1475 = vld [vmem:[%s238 + $0xacc] sm:$0xf]
        %v1476 = vld [vmem:[%s238 + $0xad0] sm:$0xf]
        %v1477 = vld [vmem:[%s238 + $0xad4] sm:$0xf]
        %v1478 = vld [vmem:[%s238 + $0xad8] sm:$0xf]
        %v1479 = vld [vmem:[%s238 + $0xadc] sm:$0xf]
        %v1480 = vld [vmem:[%s238 + $0xae0] sm:$0xf]
        %v1481 = vld [vmem:[%s238 + $0xae4] sm:$0xf]
        %v1482 = vld [vmem:[%s238 + $0xae8] sm:$0xf]
        %v1483 = vld [vmem:[%s238 + $0xaec] sm:$0xf]
        %v1484 = vld [vmem:[%s238 + $0xaf0] sm:$0xf]
        %v1485 = vld [vmem:[%s238 + $0xaf4] sm:$0xf]
        %v1486 = vld [vmem:[%s238 + $0xaf8] sm:$0xf]
        %v1487 = vld [vmem:[%s238 + $0xafc] sm:$0xf]
        %v1488 = vld [vmem:[%s238 + $0xb00] sm:$0xf]
        %v1489 = vld [vmem:[%s238 + $0xb04] sm:$0xf]
        %v1490 = vld [vmem:[%s238 + $0xb08] sm:$0xf]
        %v1491 = vld [vmem:[%s238 + $0xb0c] sm:$0xf]
        %v1492 = vld [vmem:[%s238 + $0xb10] sm:$0xf]
        %v1493 = vld [vmem:[%s238 + $0xb14] sm:$0xf]
        %v1494 = vld [vmem:[%s238 + $0xb18] sm:$0xf]
        %v1495 = vld [vmem:[%s238 + $0xb1c] sm:$0xf]
        %v1496 = vld [vmem:[%s238 + $0xb20] sm:$0xf]
        %v1497 = vld [vmem:[%s238 + $0xb24] sm:$0xf]
        %v1498 = vld [vmem:[%s238 + $0xb28] sm:$0xf]
        %v1499 = vld [vmem:[%s238 + $0xb2c] sm:$0xf]
        %v1500 = vld [vmem:[%s238 + $0xb30] sm:$0xf]
        %v1501 = vld [vmem:[%s238 + $0xb34] sm:$0xf]
        %v1502 = vld [vmem:[%s238 + $0xb38] sm:$0xf]
        %v1503 = vld [vmem:[%s238 + $0xb3c] sm:$0xf]
        %v1504 = vld [vmem:[%s238 + $0xb40] sm:$0xf]
        %v1505 = vld [vmem:[%s238 + $0xb44] sm:$0xf]
        %v1506 = vld [vmem:[%s238 + $0xb48] sm:$0xf]
        %v1507 = vld [vmem:[%s238 + $0xb4c] sm:$0xf]
        %v1508 = vld [vmem:[%s238 + $0xb50] sm:$0xf]
        %v1509 = vld [vmem:[%s238 + $0xb54] sm:$0xf]
        %v1510 = vld [vmem:[%s238 + $0xb58] sm:$0xf]
        %v1511 = vld [vmem:[%s238 + $0xb5c] sm:$0xf]
        %v1512 = vld [vmem:[%s238 + $0xb60] sm:$0xf]
        %v1513 = vld [vmem:[%s238 + $0xb64] sm:$0xf]
        %v1514 = vld [vmem:[%s238 + $0xb68] sm:$0xf]
        %v1515 = vld [vmem:[%s238 + $0xb6c] sm:$0xf]
        %v1516 = vld [vmem:[%s238 + $0xb70] sm:$0xf]
        %v1517 = vld [vmem:[%s238 + $0xb74] sm:$0xf]
        %v1518 = vld [vmem:[%s238 + $0xb78] sm:$0xf]
        %v1519 = vld [vmem:[%s238 + $0xb7c] sm:$0xf]
        %v1520 = vld [vmem:[%s238 + $0xb80] sm:$0xf]
        %v1521 = vld [vmem:[%s238 + $0xb84] sm:$0xf]
        %v1522 = vld [vmem:[%s238 + $0xb88] sm:$0xf]
        %v1523 = vld [vmem:[%s238 + $0xb8c] sm:$0xf]
        %v1524 = vld [vmem:[%s238 + $0xb90] sm:$0xf]
        %v1525 = vld [vmem:[%s238 + $0xb94] sm:$0xf]
        %v1526 = vld [vmem:[%s238 + $0xb98] sm:$0xf]
        %v1527 = vld [vmem:[%s238 + $0xb9c] sm:$0xf]
        %v1528 = vld [vmem:[%s238 + $0xba0] sm:$0xf]
        %v1529 = vld [vmem:[%s238 + $0xba4] sm:$0xf]
        %v1530 = vld [vmem:[%s238 + $0xba8] sm:$0xf]
        %v1531 = vld [vmem:[%s238 + $0xbac] sm:$0xf]
        %v1532 = vld [vmem:[%s238 + $0xbb0] sm:$0xf]
        %v1533 = vld [vmem:[%s238 + $0xbb4] sm:$0xf]
        %v1534 = vld [vmem:[%s238 + $0xbb8] sm:$0xf]
        %v1535 = vld [vmem:[%s238 + $0xbbc] sm:$0xf]
        %v1536 = vld [vmem:[%s238 + $0xbc0] sm:$0xf]
        %v1537 = vld [vmem:[%s238 + $0xbc4] sm:$0xf]
        %v1538 = vld [vmem:[%s238 + $0xbc8] sm:$0xf]
        %v1539 = vld [vmem:[%s238 + $0xbcc] sm:$0xf]
        %v1540 = vld [vmem:[%s238 + $0xbd0] sm:$0xf]
        %v1541 = vld [vmem:[%s238 + $0xbd4] sm:$0xf]
        %v1542 = vld [vmem:[%s238 + $0xbd8] sm:$0xf]
        %v1543 = vld [vmem:[%s238 + $0xbdc] sm:$0xf]
        %v1544 = vld [vmem:[%s238 + $0xbe0] sm:$0xf]
        %v1545 = vld [vmem:[%s238 + $0xbe4] sm:$0xf]
        %v1546 = vld [vmem:[%s238 + $0xbe8] sm:$0xf]
        %v1547 = vld [vmem:[%s238 + $0xbec] sm:$0xf]
        %v1548 = vld [vmem:[%s238 + $0xbf0] sm:$0xf]
        %v1549 = vld [vmem:[%s238 + $0xbf4] sm:$0xf]
        %v1550 = vld [vmem:[%s238 + $0xbf8] sm:$0xf]
        %v1551 = vld [vmem:[%s238 + $0xbfc] sm:$0xf]
        %v1552 = vld [vmem:[%s238 + $0xc00] sm:$0xf]
        %v1553 = vld [vmem:[%s238 + $0xc04] sm:$0xf]
        %v1554 = vld [vmem:[%s238 + $0xc08] sm:$0xf]
        %v1555 = vld [vmem:[%s238 + $0xc0c] sm:$0xf]
        %v1556 = vld [vmem:[%s238 + $0xc10] sm:$0xf]
        %v1557 = vld [vmem:[%s238 + $0xc14] sm:$0xf]
        %v1558 = vld [vmem:[%s238 + $0xc18] sm:$0xf]
        %v1559 = vld [vmem:[%s238 + $0xc1c] sm:$0xf]
        %v1560 = vld [vmem:[%s238 + $0xc20] sm:$0xf]
        %v1561 = vld [vmem:[%s238 + $0xc24] sm:$0xf]
        %v1562 = vld [vmem:[%s238 + $0xc28] sm:$0xf]
        %v1563 = vld [vmem:[%s238 + $0xc2c] sm:$0xf]
        %v1564 = vld [vmem:[%s238 + $0xc30] sm:$0xf]
        %v1565 = vld [vmem:[%s238 + $0xc34] sm:$0xf]
        %v1566 = vld [vmem:[%s238 + $0xc38] sm:$0xf]
        %v1567 = vld [vmem:[%s238 + $0xc3c] sm:$0xf]
        %v1568 = vld [vmem:[%s238 + $0xc40] sm:$0xf]
        %v1569 = vld [vmem:[%s238 + $0xc44] sm:$0xf]
        %v1570 = vld [vmem:[%s238 + $0xc48] sm:$0xf]
        %v1571 = vld [vmem:[%s238 + $0xc4c] sm:$0xf]
        %v1572 = vld [vmem:[%s238 + $0xc50] sm:$0xf]
        %v1573 = vld [vmem:[%s238 + $0xc54] sm:$0xf]
        %v1574 = vld [vmem:[%s238 + $0xc58] sm:$0xf]
        %v1575 = vld [vmem:[%s238 + $0xc5c] sm:$0xf]
        %v1576 = vld [vmem:[%s238 + $0xc60] sm:$0xf]
        %v1577 = vld [vmem:[%s238 + $0xc64] sm:$0xf]
        %v1578 = vld [vmem:[%s238 + $0xc68] sm:$0xf]
        %v1579 = vld [vmem:[%s238 + $0xc6c] sm:$0xf]
        %v1580 = vld [vmem:[%s238 + $0xc70] sm:$0xf]
        %v1581 = vld [vmem:[%s238 + $0xc74] sm:$0xf]
        %v1582 = vld [vmem:[%s238 + $0xc78] sm:$0xf]
        %v1583 = vld [vmem:[%s238 + $0xc7c] sm:$0xf]
        %v1584 = vld [vmem:[%s238 + $0xc80] sm:$0xf]
        %v1585 = vld [vmem:[%s238 + $0xc84] sm:$0xf]
        %v1586 = vld [vmem:[%s238 + $0xc88] sm:$0xf]
        %v1587 = vld [vmem:[%s238 + $0xc8c] sm:$0xf]
        %v1588 = vld [vmem:[%s238 + $0xc90] sm:$0xf]
        %v1589 = vld [vmem:[%s238 + $0xc94] sm:$0xf]
        %v1590 = vld [vmem:[%s238 + $0xc98] sm:$0xf]
        %v1591 = vld [vmem:[%s238 + $0xc9c] sm:$0xf]
        %v1592 = vld [vmem:[%s238 + $0xca0] sm:$0xf]
        %v1593 = vld [vmem:[%s238 + $0xca4] sm:$0xf]
        %v1594 = vld [vmem:[%s238 + $0xca8] sm:$0xf]
        %v1595 = vld [vmem:[%s238 + $0xcac] sm:$0xf]
        %v1596 = vld [vmem:[%s238 + $0xcb0] sm:$0xf]
        %v1597 = vld [vmem:[%s238 + $0xcb4] sm:$0xf]
        %v1598 = vld [vmem:[%s238 + $0xcb8] sm:$0xf]
        %v1599 = vld [vmem:[%s238 + $0xcbc] sm:$0xf]
        %v1600 = vld [vmem:[%s238 + $0xcc0] sm:$0xf]
        %v1601 = vld [vmem:[%s238 + $0xcc4] sm:$0xf]
        %v1602 = vld [vmem:[%s238 + $0xcc8] sm:$0xf]
        %v1603 = vld [vmem:[%s238 + $0xccc] sm:$0xf]
        %v1604 = vld [vmem:[%s238 + $0xcd0] sm:$0xf]
        %v1605 = vld [vmem:[%s238 + $0xcd4] sm:$0xf]
        %v1606 = vld [vmem:[%s238 + $0xcd8] sm:$0xf]
        %v1607 = vld [vmem:[%s238 + $0xcdc] sm:$0xf]
        %v1608 = vld [vmem:[%s238 + $0xce0] sm:$0xf]
        %v1609 = vld [vmem:[%s238 + $0xce4] sm:$0xf]
        %v1610 = vld [vmem:[%s238 + $0xce8] sm:$0xf]
        %v1611 = vld [vmem:[%s238 + $0xcec] sm:$0xf]
        %v1612 = vld [vmem:[%s238 + $0xcf0] sm:$0xf]
        %v1613 = vld [vmem:[%s238 + $0xcf4] sm:$0xf]
        %v1614 = vld [vmem:[%s238 + $0xcf8] sm:$0xf]
        %v1615 = vld [vmem:[%s238 + $0xcfc] sm:$0xf]
        %v1616 = vld [vmem:[%s238 + $0xd00] sm:$0xf]
        %v1617 = vld [vmem:[%s238 + $0xd04] sm:$0xf]
        %v1618 = vld [vmem:[%s238 + $0xd08] sm:$0xf]
        %v1619 = vld [vmem:[%s238 + $0xd0c] sm:$0xf]
        %v1620 = vld [vmem:[%s238 + $0xd10] sm:$0xf]
        %v1621 = vld [vmem:[%s238 + $0xd14] sm:$0xf]
        %v1622 = vld [vmem:[%s238 + $0xd18] sm:$0xf]
        %v1623 = vld [vmem:[%s238 + $0xd1c] sm:$0xf]
        %v1624 = vld [vmem:[%s238 + $0xd20] sm:$0xf]
        %v1625 = vld [vmem:[%s238 + $0xd24] sm:$0xf]
        %v1626 = vld [vmem:[%s238 + $0xd28] sm:$0xf]
        %v1627 = vld [vmem:[%s238 + $0xd2c] sm:$0xf]
        %v1628 = vld [vmem:[%s238 + $0xd30] sm:$0xf]
        %v1629 = vld [vmem:[%s238 + $0xd34] sm:$0xf]
        %v1630 = vld [vmem:[%s238 + $0xd38] sm:$0xf]
        %v1631 = vld [vmem:[%s238 + $0xd3c] sm:$0xf]
        %v1632 = vld [vmem:[%s238 + $0xd40] sm:$0xf]
        %v1633 = vld [vmem:[%s238 + $0xd44] sm:$0xf]
        %v1634 = vld [vmem:[%s238 + $0xd48] sm:$0xf]
        %v1635 = vld [vmem:[%s238 + $0xd4c] sm:$0xf]
        %v1636 = vld [vmem:[%s238 + $0xd50] sm:$0xf]
        %v1637 = vld [vmem:[%s238 + $0xd54] sm:$0xf]
        %v1638 = vld [vmem:[%s238 + $0xd58] sm:$0xf]
        %v1639 = vld [vmem:[%s238 + $0xd5c] sm:$0xf]
        %v1640 = vld [vmem:[%s238 + $0xd60] sm:$0xf]
        %v1641 = vld [vmem:[%s238 + $0xd64] sm:$0xf]
        %v1642 = vld [vmem:[%s238 + $0xd68] sm:$0xf]
        %v1643 = vld [vmem:[%s238 + $0xd6c] sm:$0xf]
        %v1644 = vld [vmem:[%s238 + $0xd70] sm:$0xf]
        %v1645 = vld [vmem:[%s238 + $0xd74] sm:$0xf]
        %v1646 = vld [vmem:[%s238 + $0xd78] sm:$0xf]
        %v1647 = vld [vmem:[%s238 + $0xd7c] sm:$0xf]
        %v1648 = vld [vmem:[%s238 + $0xd80] sm:$0xf]
        %v1649 = vld [vmem:[%s238 + $0xd84] sm:$0xf]
        %v1650 = vld [vmem:[%s238 + $0xd88] sm:$0xf]
        %v1651 = vld [vmem:[%s238 + $0xd8c] sm:$0xf]
        %v1652 = vld [vmem:[%s238 + $0xd90] sm:$0xf]
        %v1653 = vld [vmem:[%s238 + $0xd94] sm:$0xf]
        %v1654 = vld [vmem:[%s238 + $0xd98] sm:$0xf]
        %v1655 = vld [vmem:[%s238 + $0xd9c] sm:$0xf]
        %v1656 = vld [vmem:[%s238 + $0xda0] sm:$0xf]
        %v1657 = vld [vmem:[%s238 + $0xda4] sm:$0xf]
        %v1658 = vld [vmem:[%s238 + $0xda8] sm:$0xf]
        %v1659 = vld [vmem:[%s238 + $0xdac] sm:$0xf]
        %v1660 = vld [vmem:[%s238 + $0xdb0] sm:$0xf]
        %v1661 = vld [vmem:[%s238 + $0xdb4] sm:$0xf]
        %v1662 = vld [vmem:[%s238 + $0xdb8] sm:$0xf]
        %v1663 = vld [vmem:[%s238 + $0xdbc] sm:$0xf]
        %v1664 = vld [vmem:[%s238 + $0xdc0] sm:$0xf]
        %v1665 = vld [vmem:[%s238 + $0xdc4] sm:$0xf]
        %v1666 = vld [vmem:[%s238 + $0xdc8] sm:$0xf]
        %v1667 = vld [vmem:[%s238 + $0xdcc] sm:$0xf]
        %v1668 = vld [vmem:[%s238 + $0xdd0] sm:$0xf]
        %v1669 = vld [vmem:[%s238 + $0xdd4] sm:$0xf]
        %v1670 = vld [vmem:[%s238 + $0xdd8] sm:$0xf]
        %v1671 = vld [vmem:[%s238 + $0xddc] sm:$0xf]
        %v1672 = vld [vmem:[%s238 + $0xde0] sm:$0xf]
        %v1673 = vld [vmem:[%s238 + $0xde4] sm:$0xf]
        %v1674 = vld [vmem:[%s238 + $0xde8] sm:$0xf]
        %v1675 = vld [vmem:[%s238 + $0xdec] sm:$0xf]
        %v1676 = vld [vmem:[%s238 + $0xdf0] sm:$0xf]
        %v1677 = vld [vmem:[%s238 + $0xdf4] sm:$0xf]
        %v1678 = vld [vmem:[%s238 + $0xdf8] sm:$0xf]
        %v1679 = vld [vmem:[%s238 + $0xdfc] sm:$0xf]
        %v1680 = vld [vmem:[%s238 + $0xe00] sm:$0xf]
        %v1681 = vld [vmem:[%s238 + $0xe04] sm:$0xf]
        %v1682 = vld [vmem:[%s238 + $0xe08] sm:$0xf]
        %v1683 = vld [vmem:[%s238 + $0xe0c] sm:$0xf]
        %v1684 = vld [vmem:[%s238 + $0xe10] sm:$0xf]
        %v1685 = vld [vmem:[%s238 + $0xe14] sm:$0xf]
        %v1686 = vld [vmem:[%s238 + $0xe18] sm:$0xf]
        %v1687 = vld [vmem:[%s238 + $0xe1c] sm:$0xf]
        %v1688 = vld [vmem:[%s238 + $0xe20] sm:$0xf]
        %v1689 = vld [vmem:[%s238 + $0xe24] sm:$0xf]
        %v1690 = vld [vmem:[%s238 + $0xe28] sm:$0xf]
        %v1691 = vld [vmem:[%s238 + $0xe2c] sm:$0xf]
        %v1692 = vld [vmem:[%s238 + $0xe30] sm:$0xf]
        %v1693 = vld [vmem:[%s238 + $0xe34] sm:$0xf]
        %v1694 = vld [vmem:[%s238 + $0xe38] sm:$0xf]
        %v1695 = vld [vmem:[%s238 + $0xe3c] sm:$0xf]
        %v1696 = vld [vmem:[%s238 + $0xe40] sm:$0xf]
        %v1697 = vld [vmem:[%s238 + $0xe44] sm:$0xf]
        %v1698 = vld [vmem:[%s238 + $0xe48] sm:$0xf]
        %v1699 = vld [vmem:[%s238 + $0xe4c] sm:$0xf]
        %v1700 = vld [vmem:[%s238 + $0xe50] sm:$0xf]
        %v1701 = vld [vmem:[%s238 + $0xe54] sm:$0xf]
        %v1702 = vld [vmem:[%s238 + $0xe58] sm:$0xf]
        %v1703 = vld [vmem:[%s238 + $0xe5c] sm:$0xf]
        %v1704 = vld [vmem:[%s238 + $0xe60] sm:$0xf]
        %v1705 = vld [vmem:[%s238 + $0xe64] sm:$0xf]
        %v1706 = vld [vmem:[%s238 + $0xe68] sm:$0xf]
        %v1707 = vld [vmem:[%s238 + $0xe6c] sm:$0xf]
        %v1708 = vld [vmem:[%s238 + $0xe70] sm:$0xf]
        %v1709 = vld [vmem:[%s238 + $0xe74] sm:$0xf]
        %v1710 = vld [vmem:[%s238 + $0xe78] sm:$0xf]
        %v1711 = vld [vmem:[%s238 + $0xe7c] sm:$0xf]
        %v1712 = vld [vmem:[%s238 + $0xe80] sm:$0xf]
        %v1713 = vld [vmem:[%s238 + $0xe84] sm:$0xf]
        %v1714 = vld [vmem:[%s238 + $0xe88] sm:$0xf]
        %v1715 = vld [vmem:[%s238 + $0xe8c] sm:$0xf]
        %v1716 = vld [vmem:[%s238 + $0xe90] sm:$0xf]
        %v1717 = vld [vmem:[%s238 + $0xe94] sm:$0xf]
        %v1718 = vld [vmem:[%s238 + $0xe98] sm:$0xf]
        %v1719 = vld [vmem:[%s238 + $0xe9c] sm:$0xf]
        %v1720 = vld [vmem:[%s238 + $0xea0] sm:$0xf]
        %v1721 = vld [vmem:[%s238 + $0xea4] sm:$0xf]
        %v1722 = vld [vmem:[%s238 + $0xea8] sm:$0xf]
        %v1723 = vld [vmem:[%s238 + $0xeac] sm:$0xf]
        %v1724 = vld [vmem:[%s238 + $0xeb0] sm:$0xf]
        %v1725 = vld [vmem:[%s238 + $0xeb4] sm:$0xf]
        %v1726 = vld [vmem:[%s238 + $0xeb8] sm:$0xf]
        %v1727 = vld [vmem:[%s238 + $0xebc] sm:$0xf]
        %v1728 = vld [vmem:[%s238 + $0xec0] sm:$0xf]
        %v1729 = vld [vmem:[%s238 + $0xec4] sm:$0xf]
        %v1730 = vld [vmem:[%s238 + $0xec8] sm:$0xf]
        %v1731 = vld [vmem:[%s238 + $0xecc] sm:$0xf]
        %v1732 = vld [vmem:[%s238 + $0xed0] sm:$0xf]
        %v1733 = vld [vmem:[%s238 + $0xed4] sm:$0xf]
        %v1734 = vld [vmem:[%s238 + $0xed8] sm:$0xf]
        %v1735 = vld [vmem:[%s238 + $0xedc] sm:$0xf]
        %v1736 = vld [vmem:[%s238 + $0xee0] sm:$0xf]
        %v1737 = vld [vmem:[%s238 + $0xee4] sm:$0xf]
        %v1738 = vld [vmem:[%s238 + $0xee8] sm:$0xf]
        %v1739 = vld [vmem:[%s238 + $0xeec] sm:$0xf]
        %v1740 = vld [vmem:[%s238 + $0xef0] sm:$0xf]
        %v1741 = vld [vmem:[%s238 + $0xef4] sm:$0xf]
        %v1742 = vld [vmem:[%s238 + $0xef8] sm:$0xf]
        %v1743 = vld [vmem:[%s238 + $0xefc] sm:$0xf]
        %v1744 = vld [vmem:[%s238 + $0xf00] sm:$0xf]
        %v1745 = vld [vmem:[%s238 + $0xf04] sm:$0xf]
        %v1746 = vld [vmem:[%s238 + $0xf08] sm:$0xf]
        %v1747 = vld [vmem:[%s238 + $0xf0c] sm:$0xf]
        %v1748 = vld [vmem:[%s238 + $0xf10] sm:$0xf]
        %v1749 = vld [vmem:[%s238 + $0xf14] sm:$0xf]
        %v1750 = vld [vmem:[%s238 + $0xf18] sm:$0xf]
        %v1751 = vld [vmem:[%s238 + $0xf1c] sm:$0xf]
        %v1752 = vld [vmem:[%s238 + $0xf20] sm:$0xf]
        %v1753 = vld [vmem:[%s238 + $0xf24] sm:$0xf]
        %v1754 = vld [vmem:[%s238 + $0xf28] sm:$0xf]
        %v1755 = vld [vmem:[%s238 + $0xf2c] sm:$0xf]
        %v1756 = vld [vmem:[%s238 + $0xf30] sm:$0xf]
        %v1757 = vld [vmem:[%s238 + $0xf34] sm:$0xf]
        %v1758 = vld [vmem:[%s238 + $0xf38] sm:$0xf]
        %v1759 = vld [vmem:[%s238 + $0xf3c] sm:$0xf]
        %v1760 = vld [vmem:[%s238 + $0xf40] sm:$0xf]
        %v1761 = vld [vmem:[%s238 + $0xf44] sm:$0xf]
        %v1762 = vld [vmem:[%s238 + $0xf48] sm:$0xf]
        %v1763 = vld [vmem:[%s238 + $0xf4c] sm:$0xf]
        %v1764 = vld [vmem:[%s238 + $0xf50] sm:$0xf]
        %v1765 = vld [vmem:[%s238 + $0xf54] sm:$0xf]
        %v1766 = vld [vmem:[%s238 + $0xf58] sm:$0xf]
        %v1767 = vld [vmem:[%s238 + $0xf5c] sm:$0xf]
        %v1768 = vld [vmem:[%s238 + $0xf60] sm:$0xf]
        %v1769 = vld [vmem:[%s238 + $0xf64] sm:$0xf]
        %v1770 = vld [vmem:[%s238 + $0xf68] sm:$0xf]
        %v1771 = vld [vmem:[%s238 + $0xf6c] sm:$0xf]
        %v1772 = vld [vmem:[%s238 + $0xf70] sm:$0xf]
        %v1773 = vld [vmem:[%s238 + $0xf74] sm:$0xf]
        %v1774 = vld [vmem:[%s238 + $0xf78] sm:$0xf]
        %v1775 = vld [vmem:[%s238 + $0xf7c] sm:$0xf]
        %v1776 = vld [vmem:[%s238 + $0xf80] sm:$0xf]
        %v1777 = vld [vmem:[%s238 + $0xf84] sm:$0xf]
        %v1778 = vld [vmem:[%s238 + $0xf88] sm:$0xf]
        %v1779 = vld [vmem:[%s238 + $0xf8c] sm:$0xf]
        %v1780 = vld [vmem:[%s238 + $0xf90] sm:$0xf]
        %v1781 = vld [vmem:[%s238 + $0xf94] sm:$0xf]
        %v1782 = vld [vmem:[%s238 + $0xf98] sm:$0xf]
        %v1783 = vld [vmem:[%s238 + $0xf9c] sm:$0xf]
        %v1784 = vld [vmem:[%s238 + $0xfa0] sm:$0xf]
        %v1785 = vld [vmem:[%s238 + $0xfa4] sm:$0xf]
        %v1786 = vld [vmem:[%s238 + $0xfa8] sm:$0xf]
        %v1787 = vld [vmem:[%s238 + $0xfac] sm:$0xf]
        %v1788 = vld [vmem:[%s238 + $0xfb0] sm:$0xf]
        %v1789 = vld [vmem:[%s238 + $0xfb4] sm:$0xf]
        %v1790 = vld [vmem:[%s238 + $0xfb8] sm:$0xf]
        %v1791 = vld [vmem:[%s238 + $0xfbc] sm:$0xf]
        %v1792 = vld [vmem:[%s238 + $0xfc0] sm:$0xf]
        %v1793 = vld [vmem:[%s238 + $0xfc4] sm:$0xf]
        %v1794 = vld [vmem:[%s238 + $0xfc8] sm:$0xf]
        %v1795 = vld [vmem:[%s238 + $0xfcc] sm:$0xf]
        %v1796 = vld [vmem:[%s238 + $0xfd0] sm:$0xf]
        %v1797 = vld [vmem:[%s238 + $0xfd4] sm:$0xf]
        %v1798 = vld [vmem:[%s238 + $0xfd8] sm:$0xf]
        %v1799 = vld [vmem:[%s238 + $0xfdc] sm:$0xf]
        %v1800 = vld [vmem:[%s238 + $0xfe0] sm:$0xf]
        %v1801 = vld [vmem:[%s238 + $0xfe4] sm:$0xf]
        %v1802 = vld [vmem:[%s238 + $0xfe8] sm:$0xf]
        %v1803 = vld [vmem:[%s238 + $0xfec] sm:$0xf]
        %v1804 = vld [vmem:[%s238 + $0xff0] sm:$0xf]
        %v1805 = vld [vmem:[%s238 + $0xff4] sm:$0xf]
        %v1806 = vld [vmem:[%s238 + $0xff8] sm:$0xf]
        %v1807 = vld [vmem:[%s238 + $0xffc] sm:$0xf]
        %v1808 = vld [vmem:[%s238 + $0x1000] sm:$0xf]
        %v1809 = vld [vmem:[%s238 + $0x1004] sm:$0xf]
        %v1810 = vld [vmem:[%s238 + $0x1008] sm:$0xf]
        %v1811 = vld [vmem:[%s238 + $0x100c] sm:$0xf]
        %v1812 = vld [vmem:[%s238 + $0x1010] sm:$0xf]
        %v1813 = vld [vmem:[%s238 + $0x1014] sm:$0xf]
        %v1814 = vld [vmem:[%s238 + $0x1018] sm:$0xf]
        %v1815 = vld [vmem:[%s238 + $0x101c] sm:$0xf]
        %v1816 = vld [vmem:[%s238 + $0x1020] sm:$0xf]
        %v1817 = vld [vmem:[%s238 + $0x1024] sm:$0xf]
        %v1818 = vld [vmem:[%s238 + $0x1028] sm:$0xf]
        %v1819 = vld [vmem:[%s238 + $0x102c] sm:$0xf]
        %v1820 = vld [vmem:[%s238 + $0x1030] sm:$0xf]
        %v1821 = vld [vmem:[%s238 + $0x1034] sm:$0xf]
        %v1822 = vld [vmem:[%s238 + $0x1038] sm:$0xf]
        %v1823 = vld [vmem:[%s238 + $0x103c] sm:$0xf]
        %v1824 = vld [vmem:[%s238 + $0x1040] sm:$0xf]
        %v1825 = vld [vmem:[%s238 + $0x1044] sm:$0xf]
        %v1826 = vld [vmem:[%s238 + $0x1048] sm:$0xf]
        %v1827 = vld [vmem:[%s238 + $0x104c] sm:$0xf]
        %v1828 = vld [vmem:[%s238 + $0x1050] sm:$0xf]
        %v1829 = vld [vmem:[%s238 + $0x1054] sm:$0xf]
        %v1830 = vld [vmem:[%s238 + $0x1058] sm:$0xf]
        %v1831 = vld [vmem:[%s238 + $0x105c] sm:$0xf]
        %v1832 = vld [vmem:[%s238 + $0x1060] sm:$0xf]
        %v1833 = vld [vmem:[%s238 + $0x1064] sm:$0xf]
        %v1834 = vld [vmem:[%s238 + $0x1068] sm:$0xf]
        %v1835 = vld [vmem:[%s238 + $0x106c] sm:$0xf]
        %v1836 = vld [vmem:[%s238 + $0x1070] sm:$0xf]
        %v1837 = vld [vmem:[%s238 + $0x1074] sm:$0xf]
        %v1838 = vld [vmem:[%s238 + $0x1078] sm:$0xf]
        %v1839 = vld [vmem:[%s238 + $0x107c] sm:$0xf]
        %v1840 = vld [vmem:[%s238 + $0x1080] sm:$0xf]
        %v1841 = vld [vmem:[%s238 + $0x1084] sm:$0xf]
        %v1842 = vld [vmem:[%s238 + $0x1088] sm:$0xf]
        %v1843 = vld [vmem:[%s238 + $0x108c] sm:$0xf]
        %v1844 = vld [vmem:[%s238 + $0x1090] sm:$0xf]
        %v1845 = vld [vmem:[%s238 + $0x1094] sm:$0xf]
        %v1846 = vld [vmem:[%s238 + $0x1098] sm:$0xf]
        %v1847 = vld [vmem:[%s238 + $0x109c] sm:$0xf]
        %v1848 = vld [vmem:[%s238 + $0x10a0] sm:$0xf]
        %v1849 = vld [vmem:[%s238 + $0x10a4] sm:$0xf]
        %v1850 = vld [vmem:[%s238 + $0x10a8] sm:$0xf]
        %v1851 = vld [vmem:[%s238 + $0x10ac] sm:$0xf]
        %v1852 = vld [vmem:[%s238 + $0x10b0] sm:$0xf]
        %v1853 = vld [vmem:[%s238 + $0x10b4] sm:$0xf]
        %v1854 = vld [vmem:[%s238 + $0x10b8] sm:$0xf]
        %v1855 = vld [vmem:[%s238 + $0x10bc] sm:$0xf]
        %v1856 = vld [vmem:[%s238 + $0x10c0] sm:$0xf]
        %v1857 = vld [vmem:[%s238 + $0x10c4] sm:$0xf]
        %v1858 = vld [vmem:[%s238 + $0x10c8] sm:$0xf]
        %v1859 = vld [vmem:[%s238 + $0x10cc] sm:$0xf]
        %v1860 = vld [vmem:[%s238 + $0x10d0] sm:$0xf]
        %v1861 = vld [vmem:[%s238 + $0x10d4] sm:$0xf]
        %v1862 = vld [vmem:[%s238 + $0x10d8] sm:$0xf]
        %v1863 = vld [vmem:[%s238 + $0x10dc] sm:$0xf]
        %v1864 = vld [vmem:[%s238 + $0x10e0] sm:$0xf]
        %v1865 = vld [vmem:[%s238 + $0x10e4] sm:$0xf]
        %v1866 = vld [vmem:[%s238 + $0x10e8] sm:$0xf]
        %v1867 = vld [vmem:[%s238 + $0x10ec] sm:$0xf]
        %v1868 = vld [vmem:[%s238 + $0x10f0] sm:$0xf]
        %v1869 = vld [vmem:[%s238 + $0x10f4] sm:$0xf]
        %v1870 = vld [vmem:[%s238 + $0x10f8] sm:$0xf]
        %v1871 = vld [vmem:[%s238 + $0x10fc] sm:$0xf]
        %v1872 = vld [vmem:[%s238 + $0x1100] sm:$0xf]
        %v1873 = vld [vmem:[%s238 + $0x1104] sm:$0xf]
        %v1874 = vld [vmem:[%s238 + $0x1108] sm:$0xf]
        %v1875 = vld [vmem:[%s238 + $0x110c] sm:$0xf]
        %v1876 = vld [vmem:[%s238 + $0x1110] sm:$0xf]
        %v1877 = vld [vmem:[%s238 + $0x1114] sm:$0xf]
        %v1878 = vld [vmem:[%s238 + $0x1118] sm:$0xf]
        %v1879 = vld [vmem:[%s238 + $0x111c] sm:$0xf]
        %v1880 = vld [vmem:[%s238 + $0x1120] sm:$0xf]
        %v1881 = vld [vmem:[%s238 + $0x1124] sm:$0xf]
        %v1882 = vld [vmem:[%s238 + $0x1128] sm:$0xf]
        %v1883 = vld [vmem:[%s238 + $0x112c] sm:$0xf]
        %v1884 = vld [vmem:[%s238 + $0x1130] sm:$0xf]
        %v1885 = vld [vmem:[%s238 + $0x1134] sm:$0xf]
        %v1886 = vld [vmem:[%s238 + $0x1138] sm:$0xf]
        %v1887 = vld [vmem:[%s238 + $0x113c] sm:$0xf]
        %v1888 = vld [vmem:[%s238 + $0x1140] sm:$0xf]
        %v1889 = vld [vmem:[%s238 + $0x1144] sm:$0xf]
        %v1890 = vld [vmem:[%s238 + $0x1148] sm:$0xf]
        %v1891 = vld [vmem:[%s238 + $0x114c] sm:$0xf]
        %v1892 = vld [vmem:[%s238 + $0x1150] sm:$0xf]
        %v1893 = vld [vmem:[%s238 + $0x1154] sm:$0xf]
        %v1894 = vld [vmem:[%s238 + $0x1158] sm:$0xf]
        %v1895 = vld [vmem:[%s238 + $0x115c] sm:$0xf]
        %v1896 = vld [vmem:[%s238 + $0x1160] sm:$0xf]
        %v1897 = vld [vmem:[%s238 + $0x1164] sm:$0xf]
        %v1898 = vld [vmem:[%s238 + $0x1168] sm:$0xf]
        %v1899 = vld [vmem:[%s238 + $0x116c] sm:$0xf]
        %v1900 = vld [vmem:[%s238 + $0x1170] sm:$0xf]
        %v1901 = vld [vmem:[%s238 + $0x1174] sm:$0xf]
        %v1902 = vld [vmem:[%s238 + $0x1178] sm:$0xf]
        %v1903 = vld [vmem:[%s238 + $0x117c] sm:$0xf]
        %v1904 = vld [vmem:[%s238 + $0x1180] sm:$0xf]
        %v1905 = vld [vmem:[%s238 + $0x1184] sm:$0xf]
        %v1906 = vld [vmem:[%s238 + $0x1188] sm:$0xf]
        %v1907 = vld [vmem:[%s238 + $0x118c] sm:$0xf]
        %v1908 = vld [vmem:[%s238 + $0x1190] sm:$0xf]
        %v1909 = vld [vmem:[%s238 + $0x1194] sm:$0xf]
        %v1910 = vld [vmem:[%s238 + $0x1198] sm:$0xf]
        %v1911 = vld [vmem:[%s238 + $0x119c] sm:$0xf]
        %v1912 = vld [vmem:[%s238 + $0x11a0] sm:$0xf]
        %v1913 = vld [vmem:[%s238 + $0x11a4] sm:$0xf]
        %v1914 = vld [vmem:[%s238 + $0x11a8] sm:$0xf]
        %v1915 = vld [vmem:[%s238 + $0x11ac] sm:$0xf]
        %v1916 = vld [vmem:[%s238 + $0x11b0] sm:$0xf]
        %v1917 = vld [vmem:[%s238 + $0x11b4] sm:$0xf]
        %v1918 = vld [vmem:[%s238 + $0x11b8] sm:$0xf]
        %v1919 = vld [vmem:[%s238 + $0x11bc] sm:$0xf]
        %v1920 = vld [vmem:[%s238 + $0x11c0] sm:$0xf]
        %v1921 = vld [vmem:[%s238 + $0x11c4] sm:$0xf]
        %v1922 = vld [vmem:[%s238 + $0x11c8] sm:$0xf]
        %v1923 = vld [vmem:[%s238 + $0x11cc] sm:$0xf]
        %v1924 = vld [vmem:[%s238 + $0x11d0] sm:$0xf]
        %v1925 = vld [vmem:[%s238 + $0x11d4] sm:$0xf]
        %v1926 = vld [vmem:[%s238 + $0x11d8] sm:$0xf]
        %v1927 = vld [vmem:[%s238 + $0x11dc] sm:$0xf]
        %v1928 = vld [vmem:[%s238 + $0x11e0] sm:$0xf]
        %v1929 = vld [vmem:[%s238 + $0x11e4] sm:$0xf]
        %v1930 = vld [vmem:[%s238 + $0x11e8] sm:$0xf]
        %v1931 = vld [vmem:[%s238 + $0x11ec] sm:$0xf]
        %v1932 = vld [vmem:[%s238 + $0x11f0] sm:$0xf]
        %v1933 = vld [vmem:[%s238 + $0x11f4] sm:$0xf]
        %v1934 = vld [vmem:[%s238 + $0x11f8] sm:$0xf]
        %v1935 = vld [vmem:[%s238 + $0x11fc] sm:$0xf]
        %v1936 = vld [vmem:[%s238 + $0x1200] sm:$0xf]
        %v1937 = vld [vmem:[%s238 + $0x1204] sm:$0xf]
        %v1938 = vld [vmem:[%s238 + $0x1208] sm:$0xf]
        %v1939 = vld [vmem:[%s238 + $0x120c] sm:$0xf]
        %v1940 = vld [vmem:[%s238 + $0x1210] sm:$0xf]
        %v1941 = vld [vmem:[%s238 + $0x1214] sm:$0xf]
        %v1942 = vld [vmem:[%s238 + $0x1218] sm:$0xf]
        %v1943 = vld [vmem:[%s238 + $0x121c] sm:$0xf]
        %v1944 = vld [vmem:[%s238 + $0x1220] sm:$0xf]
        %v1945 = vld [vmem:[%s238 + $0x1224] sm:$0xf]
        %v1946 = vld [vmem:[%s238 + $0x1228] sm:$0xf]
        %v1947 = vld [vmem:[%s238 + $0x122c] sm:$0xf]
        %v1948 = vld [vmem:[%s238 + $0x1230] sm:$0xf]
        %v1949 = vld [vmem:[%s238 + $0x1234] sm:$0xf]
        %v1950 = vld [vmem:[%s238 + $0x1238] sm:$0xf]
        %v1951 = vld [vmem:[%s238 + $0x123c] sm:$0xf]
        %v1952 = vld [vmem:[%s238 + $0x1240] sm:$0xf]
        %v1953 = vld [vmem:[%s238 + $0x1244] sm:$0xf]
        %v1954 = vld [vmem:[%s238 + $0x1248] sm:$0xf]
        %v1955 = vld [vmem:[%s238 + $0x124c] sm:$0xf]
        %v1956 = vld [vmem:[%s238 + $0x1250] sm:$0xf]
        %v1957 = vld [vmem:[%s238 + $0x1254] sm:$0xf]
        %v1958 = vld [vmem:[%s238 + $0x1258] sm:$0xf]
        %v1959 = vld [vmem:[%s238 + $0x125c] sm:$0xf]
        %v1960 = vld [vmem:[%s238 + $0x1260] sm:$0xf]
        %v1961 = vld [vmem:[%s238 + $0x1264] sm:$0xf]
        %v1962 = vld [vmem:[%s238 + $0x1268] sm:$0xf]
        %v1963 = vld [vmem:[%s238 + $0x126c] sm:$0xf]
        %v1964 = vld [vmem:[%s238 + $0x1270] sm:$0xf]
        %v1965 = vld [vmem:[%s238 + $0x1274] sm:$0xf]
        %v1966 = vld [vmem:[%s238 + $0x1278] sm:$0xf]
        %v1967 = vld [vmem:[%s238 + $0x127c] sm:$0xf]
        %v1968 = vld [vmem:[%s238 + $0x1280] sm:$0xf]
        %v1969 = vld [vmem:[%s238 + $0x1284] sm:$0xf]
        %v1970 = vld [vmem:[%s238 + $0x1288] sm:$0xf]
        %v1971 = vld [vmem:[%s238 + $0x128c] sm:$0xf]
        %v1972 = vld [vmem:[%s238 + $0x1290] sm:$0xf]
        %v1973 = vld [vmem:[%s238 + $0x1294] sm:$0xf]
        %v1974 = vld [vmem:[%s238 + $0x1298] sm:$0xf]
        %v1975 = vld [vmem:[%s238 + $0x129c] sm:$0xf]
        %v1976 = vld [vmem:[%s238 + $0x12a0] sm:$0xf]
        %v1977 = vld [vmem:[%s238 + $0x12a4] sm:$0xf]
        %v1978 = vld [vmem:[%s238 + $0x12a8] sm:$0xf]
        %v1979 = vld [vmem:[%s238 + $0x12ac] sm:$0xf]
        %v1980 = vld [vmem:[%s238 + $0x12b0] sm:$0xf]
        %v1981 = vld [vmem:[%s238 + $0x12b4] sm:$0xf]
        %v1982 = vld [vmem:[%s238 + $0x12b8] sm:$0xf]
        %v1983 = vld [vmem:[%s238 + $0x12bc] sm:$0xf]
        %v1984 = vld [vmem:[%s238 + $0x12c0] sm:$0xf]
        %v1985 = vld [vmem:[%s238 + $0x12c4] sm:$0xf]
        %v1986 = vld [vmem:[%s238 + $0x12c8] sm:$0xf]
        %v1987 = vld [vmem:[%s238 + $0x12cc] sm:$0xf]
        %v1988 = vld [vmem:[%s238 + $0x12d0] sm:$0xf]
        %v1989 = vld [vmem:[%s238 + $0x12d4] sm:$0xf]
        %v1990 = vld [vmem:[%s238 + $0x12d8] sm:$0xf]
        %v1991 = vld [vmem:[%s238 + $0x12dc] sm:$0xf]
        %v1992 = vld [vmem:[%s238 + $0x12e0] sm:$0xf]
        %v1993 = vld [vmem:[%s238 + $0x12e4] sm:$0xf]
        %v1994 = vld [vmem:[%s238 + $0x12e8] sm:$0xf]
        %v1995 = vld [vmem:[%s238 + $0x12ec] sm:$0xf]
        %v1996 = vld [vmem:[%s238 + $0x12f0] sm:$0xf]
        %v1997 = vld [vmem:[%s238 + $0x12f4] sm:$0xf]
        %v1998 = vld [vmem:[%s238 + $0x12f8] sm:$0xf]
        %v1999 = vld [vmem:[%s238 + $0x12fc] sm:$0xf]
        %v2000 = vld [vmem:[%s238 + $0x1300] sm:$0xf]
        %v2001 = vld [vmem:[%s238 + $0x1304] sm:$0xf]
        %v2002 = vld [vmem:[%s238 + $0x1308] sm:$0xf]
        %v2003 = vld [vmem:[%s238 + $0x130c] sm:$0xf]
        %v2004 = vld [vmem:[%s238 + $0x1310] sm:$0xf]
        %v2005 = vld [vmem:[%s238 + $0x1314] sm:$0xf]
        %v2006 = vld [vmem:[%s238 + $0x1318] sm:$0xf]
        %v2007 = vld [vmem:[%s238 + $0x131c] sm:$0xf]
        %v2008 = vld [vmem:[%s238 + $0x1320] sm:$0xf]
        %v2009 = vld [vmem:[%s238 + $0x1324] sm:$0xf]
        %v2010 = vld [vmem:[%s238 + $0x1328] sm:$0xf]
        %v2011 = vld [vmem:[%s238 + $0x132c] sm:$0xf]
        %v2012 = vld [vmem:[%s238 + $0x1330] sm:$0xf]
        %v2013 = vld [vmem:[%s238 + $0x1334] sm:$0xf]
        %v2014 = vld [vmem:[%s238 + $0x1338] sm:$0xf]
        %v2015 = vld [vmem:[%s238 + $0x133c] sm:$0xf]
        %v2016 = vld [vmem:[%s238 + $0x1340] sm:$0xf]
        %v2017 = vld [vmem:[%s238 + $0x1344] sm:$0xf]
        %v2018 = vld [vmem:[%s238 + $0x1348] sm:$0xf]
        %v2019 = vld [vmem:[%s238 + $0x134c] sm:$0xf]
        %v2020 = vld [vmem:[%s238 + $0x1350] sm:$0xf]
        %v2021 = vld [vmem:[%s238 + $0x1354] sm:$0xf]
        %v2022 = vld [vmem:[%s238 + $0x1358] sm:$0xf]
        %v2023 = vld [vmem:[%s238 + $0x135c] sm:$0xf]
        %v2024 = vld [vmem:[%s238 + $0x1360] sm:$0xf]
        %v2025 = vld [vmem:[%s238 + $0x1364] sm:$0xf]
        %v2026 = vld [vmem:[%s238 + $0x1368] sm:$0xf]
        %v2027 = vld [vmem:[%s238 + $0x136c] sm:$0xf]
        %v2028 = vld [vmem:[%s238 + $0x1370] sm:$0xf]
        %v2029 = vld [vmem:[%s238 + $0x1374] sm:$0xf]
        %v2030 = vld [vmem:[%s238 + $0x1378] sm:$0xf]
        %v2031 = vld [vmem:[%s238 + $0x137c] sm:$0xf]
        %v2032 = vld [vmem:[%s238 + $0x1380] sm:$0xf]
        %v2033 = vld [vmem:[%s238 + $0x1384] sm:$0xf]
        %v2034 = vld [vmem:[%s238 + $0x1388] sm:$0xf]
        %v2035 = vld [vmem:[%s238 + $0x138c] sm:$0xf]
        %v2036 = vld [vmem:[%s238 + $0x1390] sm:$0xf]
        %v2037 = vld [vmem:[%s238 + $0x1394] sm:$0xf]
        %v2038 = vld [vmem:[%s238 + $0x1398] sm:$0xf]
        %v2039 = vld [vmem:[%s238 + $0x139c] sm:$0xf]
        %v2040 = vld [vmem:[%s238 + $0x13a0] sm:$0xf]
        %v2041 = vld [vmem:[%s238 + $0x13a4] sm:$0xf]
        %v2042 = vld [vmem:[%s238 + $0x13a8] sm:$0xf]
        %v2043 = vld [vmem:[%s238 + $0x13ac] sm:$0xf]
        %v2044 = vld [vmem:[%s238 + $0x13b0] sm:$0xf]
        %v2045 = vld [vmem:[%s238 + $0x13b4] sm:$0xf]
        %v2046 = vld [vmem:[%s238 + $0x13b8] sm:$0xf]
        %v2047 = vld [vmem:[%s238 + $0x13bc] sm:$0xf]
        %v2048 = vld [vmem:[%s238 + $0x13c0] sm:$0xf]
        %v2049 = vld [vmem:[%s238 + $0x13c4] sm:$0xf]
        %v2050 = vld [vmem:[%s238 + $0x13c8] sm:$0xf]
        %v2051 = vld [vmem:[%s238 + $0x13cc] sm:$0xf]
        %v2052 = vld [vmem:[%s238 + $0x13d0] sm:$0xf]
        %v2053 = vld [vmem:[%s238 + $0x13d4] sm:$0xf]
        %v2054 = vld [vmem:[%s238 + $0x13d8] sm:$0xf]
        %v2055 = vld [vmem:[%s238 + $0x13dc] sm:$0xf]
        %v2056 = vld [vmem:[%s238 + $0x13e0] sm:$0xf]
        %v2057 = vld [vmem:[%s238 + $0x13e4] sm:$0xf]
        %v2058 = vld [vmem:[%s238 + $0x13e8] sm:$0xf]
        %v2059 = vld [vmem:[%s238 + $0x13ec] sm:$0xf]
        %v2060 = vld [vmem:[%s238 + $0x13f0] sm:$0xf]
        %v2061 = vld [vmem:[%s238 + $0x13f4] sm:$0xf]
        %v2062 = vld [vmem:[%s238 + $0x13f8] sm:$0xf]
        %v2063 = vld [vmem:[%s238 + $0x13fc] sm:$0xf]
        %v3344 = vunpack.c.l.b16 %v784
        %v3345 = vunpack.c.l.b16 %v785
        %v3346 = vunpack.c.l.b16 %v786
        %v3347 = vunpack.c.l.b16 %v787
        %v3348 = vunpack.c.l.b16 %v788
        %v3349 = vunpack.c.l.b16 %v789
        %v3350 = vunpack.c.l.b16 %v790
        %v3351 = vunpack.c.l.b16 %v791
        %v3352 = vunpack.c.l.b16 %v792
        %v3353 = vunpack.c.l.b16 %v793
        %v3354 = vunpack.c.l.b16 %v794
        %v3355 = vunpack.c.l.b16 %v795
        %v3356 = vunpack.c.l.b16 %v796
        %v3357 = vunpack.c.l.b16 %v797
        %v3358 = vunpack.c.l.b16 %v798
        %v3359 = vunpack.c.l.b16 %v799
        %v3360 = vunpack.c.l.b16 %v800
        %v3361 = vunpack.c.l.b16 %v801
        %v3362 = vunpack.c.l.b16 %v802
        %v3363 = vunpack.c.l.b16 %v803
        %v3364 = vunpack.c.l.b16 %v804
        %v3365 = vunpack.c.l.b16 %v805
        %v3366 = vunpack.c.l.b16 %v806
        %v3367 = vunpack.c.l.b16 %v807
        %v3368 = vunpack.c.l.b16 %v808
        %v3369 = vunpack.c.l.b16 %v809
        %v3370 = vunpack.c.l.b16 %v810
        %v3371 = vunpack.c.l.b16 %v811
        %v3372 = vunpack.c.l.b16 %v812
        %v3373 = vunpack.c.l.b16 %v813
        %v3374 = vunpack.c.l.b16 %v814
        %v3375 = vunpack.c.l.b16 %v815
        %v3376 = vunpack.c.l.b16 %v816
        %v3377 = vunpack.c.l.b16 %v817
        %v3378 = vunpack.c.l.b16 %v818
        %v3379 = vunpack.c.l.b16 %v819
        %v3380 = vunpack.c.l.b16 %v820
        %v3381 = vunpack.c.l.b16 %v821
        %v3382 = vunpack.c.l.b16 %v822
        %v3383 = vunpack.c.l.b16 %v823
        %v3384 = vunpack.c.l.b16 %v824
        %v3385 = vunpack.c.l.b16 %v825
        %v3386 = vunpack.c.l.b16 %v826
        %v3387 = vunpack.c.l.b16 %v827
        %v3388 = vunpack.c.l.b16 %v828
        %v3389 = vunpack.c.l.b16 %v829
        %v3390 = vunpack.c.l.b16 %v830
        %v3391 = vunpack.c.l.b16 %v831
        %v3392 = vunpack.c.l.b16 %v832
        %v3393 = vunpack.c.l.b16 %v833
        %v3394 = vunpack.c.l.b16 %v834
        %v3395 = vunpack.c.l.b16 %v835
        %v3396 = vunpack.c.l.b16 %v836
        %v3397 = vunpack.c.l.b16 %v837
        %v3398 = vunpack.c.l.b16 %v838
        %v3399 = vunpack.c.l.b16 %v839
        %v3400 = vunpack.c.l.b16 %v840
        %v3401 = vunpack.c.l.b16 %v841
        %v3402 = vunpack.c.l.b16 %v842
        %v3403 = vunpack.c.l.b16 %v843
        %v3404 = vunpack.c.l.b16 %v844
        %v3405 = vunpack.c.l.b16 %v845
        %v3406 = vunpack.c.l.b16 %v846
        %v3407 = vunpack.c.l.b16 %v847
        %v3408 = vunpack.c.l.b16 %v848
        %v3409 = vunpack.c.l.b16 %v849
        %v3410 = vunpack.c.l.b16 %v850
        %v3411 = vunpack.c.l.b16 %v851
        %v3412 = vunpack.c.l.b16 %v852
        %v3413 = vunpack.c.l.b16 %v853
        %v3414 = vunpack.c.l.b16 %v854
        %v3415 = vunpack.c.l.b16 %v855
        %v3416 = vunpack.c.l.b16 %v856
        %v3417 = vunpack.c.l.b16 %v857
        %v3418 = vunpack.c.l.b16 %v858
        %v3419 = vunpack.c.l.b16 %v859
        %v3420 = vunpack.c.l.b16 %v860
        %v3421 = vunpack.c.l.b16 %v861
        %v3422 = vunpack.c.l.b16 %v862
        %v3423 = vunpack.c.l.b16 %v863
        %v3424 = vunpack.c.l.b16 %v864
        %v3425 = vunpack.c.l.b16 %v865
        %v3426 = vunpack.c.l.b16 %v866
        %v3427 = vunpack.c.l.b16 %v867
        %v3428 = vunpack.c.l.b16 %v868
        %v3429 = vunpack.c.l.b16 %v869
        %v3430 = vunpack.c.l.b16 %v870
        %v3431 = vunpack.c.l.b16 %v871
        %v3432 = vunpack.c.l.b16 %v872
        %v3433 = vunpack.c.l.b16 %v873
        %v3434 = vunpack.c.l.b16 %v874
        %v3435 = vunpack.c.l.b16 %v875
        %v3436 = vunpack.c.l.b16 %v876
        %v3437 = vunpack.c.l.b16 %v877
        %v3438 = vunpack.c.l.b16 %v878
        %v3439 = vunpack.c.l.b16 %v879
        %v3440 = vunpack.c.l.b16 %v880
        %v3441 = vunpack.c.l.b16 %v881
        %v3442 = vunpack.c.l.b16 %v882
        %v3443 = vunpack.c.l.b16 %v883
        %v3444 = vunpack.c.l.b16 %v884
        %v3445 = vunpack.c.l.b16 %v885
        %v3446 = vunpack.c.l.b16 %v886
        %v3447 = vunpack.c.l.b16 %v887
        %v3448 = vunpack.c.l.b16 %v888
        %v3449 = vunpack.c.l.b16 %v889
        %v3450 = vunpack.c.l.b16 %v890
        %v3451 = vunpack.c.l.b16 %v891
        %v3452 = vunpack.c.l.b16 %v892
        %v3453 = vunpack.c.l.b16 %v893
        %v3454 = vunpack.c.l.b16 %v894
        %v3455 = vunpack.c.l.b16 %v895
        %v3456 = vunpack.c.l.b16 %v896
        %v3457 = vunpack.c.l.b16 %v897
        %v3458 = vunpack.c.l.b16 %v898
        %v3459 = vunpack.c.l.b16 %v899
        %v3460 = vunpack.c.l.b16 %v900
        %v3461 = vunpack.c.l.b16 %v901
        %v3462 = vunpack.c.l.b16 %v902
        %v3463 = vunpack.c.l.b16 %v903
        %v3464 = vunpack.c.l.b16 %v904
        %v3465 = vunpack.c.l.b16 %v905
        %v3466 = vunpack.c.l.b16 %v906
        %v3467 = vunpack.c.l.b16 %v907
        %v3468 = vunpack.c.l.b16 %v908
        %v3469 = vunpack.c.l.b16 %v909
        %v3470 = vunpack.c.l.b16 %v910
        %v3471 = vunpack.c.l.b16 %v911
        %v3472 = vunpack.c.l.b16 %v912
        %v3473 = vunpack.c.l.b16 %v913
        %v3474 = vunpack.c.l.b16 %v914
        %v3475 = vunpack.c.l.b16 %v915
        %v3476 = vunpack.c.l.b16 %v916
        %v3477 = vunpack.c.l.b16 %v917
        %v3478 = vunpack.c.l.b16 %v918
        %v3479 = vunpack.c.l.b16 %v919
        %v3480 = vunpack.c.l.b16 %v920
        %v3481 = vunpack.c.l.b16 %v921
        %v3482 = vunpack.c.l.b16 %v922
        %v3483 = vunpack.c.l.b16 %v923
        %v3484 = vunpack.c.l.b16 %v924
        %v3485 = vunpack.c.l.b16 %v925
        %v3486 = vunpack.c.l.b16 %v926
        %v3487 = vunpack.c.l.b16 %v927
        %v3488 = vunpack.c.l.b16 %v928
        %v3489 = vunpack.c.l.b16 %v929
        %v3490 = vunpack.c.l.b16 %v930
        %v3491 = vunpack.c.l.b16 %v931
        %v3492 = vunpack.c.l.b16 %v932
        %v3493 = vunpack.c.l.b16 %v933
        %v3494 = vunpack.c.l.b16 %v934
        %v3495 = vunpack.c.l.b16 %v935
        %v3496 = vunpack.c.l.b16 %v936
        %v3497 = vunpack.c.l.b16 %v937
        %v3498 = vunpack.c.l.b16 %v938
        %v3499 = vunpack.c.l.b16 %v939
        %v3500 = vunpack.c.l.b16 %v940
        %v3501 = vunpack.c.l.b16 %v941
        %v3502 = vunpack.c.l.b16 %v942
        %v3503 = vunpack.c.l.b16 %v943
        %v3504 = vunpack.c.l.b16 %v944
        %v3505 = vunpack.c.l.b16 %v945
        %v3506 = vunpack.c.l.b16 %v946
        %v3507 = vunpack.c.l.b16 %v947
        %v3508 = vunpack.c.l.b16 %v948
        %v3509 = vunpack.c.l.b16 %v949
        %v3510 = vunpack.c.l.b16 %v950
        %v3511 = vunpack.c.l.b16 %v951
        %v3512 = vunpack.c.l.b16 %v952
        %v3513 = vunpack.c.l.b16 %v953
        %v3514 = vunpack.c.l.b16 %v954
        %v3515 = vunpack.c.l.b16 %v955
        %v3516 = vunpack.c.l.b16 %v956
        %v3517 = vunpack.c.l.b16 %v957
        %v3518 = vunpack.c.l.b16 %v958
        %v3519 = vunpack.c.l.b16 %v959
        %v3520 = vunpack.c.l.b16 %v960
        %v3521 = vunpack.c.l.b16 %v961
        %v3522 = vunpack.c.l.b16 %v962
        %v3523 = vunpack.c.l.b16 %v963
        %v3524 = vunpack.c.l.b16 %v964
        %v3525 = vunpack.c.l.b16 %v965
        %v3526 = vunpack.c.l.b16 %v966
        %v3527 = vunpack.c.l.b16 %v967
        %v3528 = vunpack.c.l.b16 %v968
        %v3529 = vunpack.c.l.b16 %v969
        %v3530 = vunpack.c.l.b16 %v970
        %v3531 = vunpack.c.l.b16 %v971
        %v3532 = vunpack.c.l.b16 %v972
        %v3533 = vunpack.c.l.b16 %v973
        %v3534 = vunpack.c.l.b16 %v974
        %v3535 = vunpack.c.l.b16 %v975
        %v3536 = vunpack.c.l.b16 %v976
        %v3537 = vunpack.c.l.b16 %v977
        %v3538 = vunpack.c.l.b16 %v978
        %v3539 = vunpack.c.l.b16 %v979
        %v3540 = vunpack.c.l.b16 %v980
        %v3541 = vunpack.c.l.b16 %v981
        %v3542 = vunpack.c.l.b16 %v982
        %v3543 = vunpack.c.l.b16 %v983
        %v3544 = vunpack.c.l.b16 %v984
        %v3545 = vunpack.c.l.b16 %v985
        %v3546 = vunpack.c.l.b16 %v986
        %v3547 = vunpack.c.l.b16 %v987
        %v3548 = vunpack.c.l.b16 %v988
        %v3549 = vunpack.c.l.b16 %v989
        %v3550 = vunpack.c.l.b16 %v990
        %v3551 = vunpack.c.l.b16 %v991
        %v3552 = vunpack.c.l.b16 %v992
        %v3553 = vunpack.c.l.b16 %v993
        %v3554 = vunpack.c.l.b16 %v994
        %v3555 = vunpack.c.l.b16 %v995
        %v3556 = vunpack.c.l.b16 %v996
        %v3557 = vunpack.c.l.b16 %v997
        %v3558 = vunpack.c.l.b16 %v998
        %v3559 = vunpack.c.l.b16 %v999
        %v3560 = vunpack.c.l.b16 %v1000
        %v3561 = vunpack.c.l.b16 %v1001
        %v3562 = vunpack.c.l.b16 %v1002
        %v3563 = vunpack.c.l.b16 %v1003
        %v3564 = vunpack.c.l.b16 %v1004
        %v3565 = vunpack.c.l.b16 %v1005
        %v3566 = vunpack.c.l.b16 %v1006
        %v3567 = vunpack.c.l.b16 %v1007
        %v3568 = vunpack.c.l.b16 %v1008
        %v3569 = vunpack.c.l.b16 %v1009
        %v3570 = vunpack.c.l.b16 %v1010
        %v3571 = vunpack.c.l.b16 %v1011
        %v3572 = vunpack.c.l.b16 %v1012
        %v3573 = vunpack.c.l.b16 %v1013
        %v3574 = vunpack.c.l.b16 %v1014
        %v3575 = vunpack.c.l.b16 %v1015
        %v3576 = vunpack.c.l.b16 %v1016
        %v3577 = vunpack.c.l.b16 %v1017
        %v3578 = vunpack.c.l.b16 %v1018
        %v3579 = vunpack.c.l.b16 %v1019
        %v3580 = vunpack.c.l.b16 %v1020
        %v3581 = vunpack.c.l.b16 %v1021
        %v3582 = vunpack.c.l.b16 %v1022
        %v3583 = vunpack.c.l.b16 %v1023
        %v3584 = vunpack.c.l.b16 %v1024
        %v3585 = vunpack.c.l.b16 %v1025
        %v3586 = vunpack.c.l.b16 %v1026
        %v3587 = vunpack.c.l.b16 %v1027
        %v3588 = vunpack.c.l.b16 %v1028
        %v3589 = vunpack.c.l.b16 %v1029
        %v3590 = vunpack.c.l.b16 %v1030
        %v3591 = vunpack.c.l.b16 %v1031
        %v3592 = vunpack.c.l.b16 %v1032
        %v3593 = vunpack.c.l.b16 %v1033
        %v3594 = vunpack.c.l.b16 %v1034
        %v3595 = vunpack.c.l.b16 %v1035
        %v3596 = vunpack.c.l.b16 %v1036
        %v3597 = vunpack.c.l.b16 %v1037
        %v3598 = vunpack.c.l.b16 %v1038
        %v3599 = vunpack.c.l.b16 %v1039
        %v3600 = vunpack.c.l.b16 %v1040
        %v3601 = vunpack.c.l.b16 %v1041
        %v3602 = vunpack.c.l.b16 %v1042
        %v3603 = vunpack.c.l.b16 %v1043
        %v3604 = vunpack.c.l.b16 %v1044
        %v3605 = vunpack.c.l.b16 %v1045
        %v3606 = vunpack.c.l.b16 %v1046
        %v3607 = vunpack.c.l.b16 %v1047
        %v3608 = vunpack.c.l.b16 %v1048
        %v3609 = vunpack.c.l.b16 %v1049
        %v3610 = vunpack.c.l.b16 %v1050
        %v3611 = vunpack.c.l.b16 %v1051
        %v3612 = vunpack.c.l.b16 %v1052
        %v3613 = vunpack.c.l.b16 %v1053
        %v3614 = vunpack.c.l.b16 %v1054
        %v3615 = vunpack.c.l.b16 %v1055
        %v3616 = vunpack.c.l.b16 %v1056
        %v3617 = vunpack.c.l.b16 %v1057
        %v3618 = vunpack.c.l.b16 %v1058
        %v3619 = vunpack.c.l.b16 %v1059
        %v3620 = vunpack.c.l.b16 %v1060
        %v3621 = vunpack.c.l.b16 %v1061
        %v3622 = vunpack.c.l.b16 %v1062
        %v3623 = vunpack.c.l.b16 %v1063
        %v3624 = vunpack.c.l.b16 %v1064
        %v3625 = vunpack.c.l.b16 %v1065
        %v3626 = vunpack.c.l.b16 %v1066
        %v3627 = vunpack.c.l.b16 %v1067
        %v3628 = vunpack.c.l.b16 %v1068
        %v3629 = vunpack.c.l.b16 %v1069
        %v3630 = vunpack.c.l.b16 %v1070
        %v3631 = vunpack.c.l.b16 %v1071
        %v3632 = vunpack.c.l.b16 %v1072
        %v3633 = vunpack.c.l.b16 %v1073
        %v3634 = vunpack.c.l.b16 %v1074
        %v3635 = vunpack.c.l.b16 %v1075
        %v3636 = vunpack.c.l.b16 %v1076
        %v3637 = vunpack.c.l.b16 %v1077
        %v3638 = vunpack.c.l.b16 %v1078
        %v3639 = vunpack.c.l.b16 %v1079
        %v3640 = vunpack.c.l.b16 %v1080
        %v3641 = vunpack.c.l.b16 %v1081
        %v3642 = vunpack.c.l.b16 %v1082
        %v3643 = vunpack.c.l.b16 %v1083
        %v3644 = vunpack.c.l.b16 %v1084
        %v3645 = vunpack.c.l.b16 %v1085
        %v3646 = vunpack.c.l.b16 %v1086
        %v3647 = vunpack.c.l.b16 %v1087
        %v3648 = vunpack.c.l.b16 %v1088
        %v3649 = vunpack.c.l.b16 %v1089
        %v3650 = vunpack.c.l.b16 %v1090
        %v3651 = vunpack.c.l.b16 %v1091
        %v3652 = vunpack.c.l.b16 %v1092
        %v3653 = vunpack.c.l.b16 %v1093
        %v3654 = vunpack.c.l.b16 %v1094
        %v3655 = vunpack.c.l.b16 %v1095
        %v3656 = vunpack.c.l.b16 %v1096
        %v3657 = vunpack.c.l.b16 %v1097
        %v3658 = vunpack.c.l.b16 %v1098
        %v3659 = vunpack.c.l.b16 %v1099
        %v3660 = vunpack.c.l.b16 %v1100
        %v3661 = vunpack.c.l.b16 %v1101
        %v3662 = vunpack.c.l.b16 %v1102
        %v3663 = vunpack.c.l.b16 %v1103
        %v3664 = vunpack.c.l.b16 %v1104
        %v3665 = vunpack.c.l.b16 %v1105
        %v3666 = vunpack.c.l.b16 %v1106
        %v3667 = vunpack.c.l.b16 %v1107
        %v3668 = vunpack.c.l.b16 %v1108
        %v3669 = vunpack.c.l.b16 %v1109
        %v3670 = vunpack.c.l.b16 %v1110
        %v3671 = vunpack.c.l.b16 %v1111
        %v3672 = vunpack.c.l.b16 %v1112
        %v3673 = vunpack.c.l.b16 %v1113
        %v3674 = vunpack.c.l.b16 %v1114
        %v3675 = vunpack.c.l.b16 %v1115
        %v3676 = vunpack.c.l.b16 %v1116
        %v3677 = vunpack.c.l.b16 %v1117
        %v3678 = vunpack.c.l.b16 %v1118
        %v3679 = vunpack.c.l.b16 %v1119
        %v3680 = vunpack.c.l.b16 %v1120
        %v3681 = vunpack.c.l.b16 %v1121
        %v3682 = vunpack.c.l.b16 %v1122
        %v3683 = vunpack.c.l.b16 %v1123
        %v3684 = vunpack.c.l.b16 %v1124
        %v3685 = vunpack.c.l.b16 %v1125
        %v3686 = vunpack.c.l.b16 %v1126
        %v3687 = vunpack.c.l.b16 %v1127
        %v3688 = vunpack.c.l.b16 %v1128
        %v3689 = vunpack.c.l.b16 %v1129
        %v3690 = vunpack.c.l.b16 %v1130
        %v3691 = vunpack.c.l.b16 %v1131
        %v3692 = vunpack.c.l.b16 %v1132
        %v3693 = vunpack.c.l.b16 %v1133
        %v3694 = vunpack.c.l.b16 %v1134
        %v3695 = vunpack.c.l.b16 %v1135
        %v3696 = vunpack.c.l.b16 %v1136
        %v3697 = vunpack.c.l.b16 %v1137
        %v3698 = vunpack.c.l.b16 %v1138
        %v3699 = vunpack.c.l.b16 %v1139
        %v3700 = vunpack.c.l.b16 %v1140
        %v3701 = vunpack.c.l.b16 %v1141
        %v3702 = vunpack.c.l.b16 %v1142
        %v3703 = vunpack.c.l.b16 %v1143
        %v3704 = vunpack.c.l.b16 %v1144
        %v3705 = vunpack.c.l.b16 %v1145
        %v3706 = vunpack.c.l.b16 %v1146
        %v3707 = vunpack.c.l.b16 %v1147
        %v3708 = vunpack.c.l.b16 %v1148
        %v3709 = vunpack.c.l.b16 %v1149
        %v3710 = vunpack.c.l.b16 %v1150
        %v3711 = vunpack.c.l.b16 %v1151
        %v3712 = vunpack.c.l.b16 %v1152
        %v3713 = vunpack.c.l.b16 %v1153
        %v3714 = vunpack.c.l.b16 %v1154
        %v3715 = vunpack.c.l.b16 %v1155
        %v3716 = vunpack.c.l.b16 %v1156
        %v3717 = vunpack.c.l.b16 %v1157
        %v3718 = vunpack.c.l.b16 %v1158
        %v3719 = vunpack.c.l.b16 %v1159
        %v3720 = vunpack.c.l.b16 %v1160
        %v3721 = vunpack.c.l.b16 %v1161
        %v3722 = vunpack.c.l.b16 %v1162
        %v3723 = vunpack.c.l.b16 %v1163
        %v3724 = vunpack.c.l.b16 %v1164
        %v3725 = vunpack.c.l.b16 %v1165
        %v3726 = vunpack.c.l.b16 %v1166
        %v3727 = vunpack.c.l.b16 %v1167
        %v3728 = vunpack.c.l.b16 %v1168
        %v3729 = vunpack.c.l.b16 %v1169
        %v3730 = vunpack.c.l.b16 %v1170
        %v3731 = vunpack.c.l.b16 %v1171
        %v3732 = vunpack.c.l.b16 %v1172
        %v3733 = vunpack.c.l.b16 %v1173
        %v3734 = vunpack.c.l.b16 %v1174
        %v3735 = vunpack.c.l.b16 %v1175
        %v3736 = vunpack.c.l.b16 %v1176
        %v3737 = vunpack.c.l.b16 %v1177
        %v3738 = vunpack.c.l.b16 %v1178
        %v3739 = vunpack.c.l.b16 %v1179
        %v3740 = vunpack.c.l.b16 %v1180
        %v3741 = vunpack.c.l.b16 %v1181
        %v3742 = vunpack.c.l.b16 %v1182
        %v3743 = vunpack.c.l.b16 %v1183
        %v3744 = vunpack.c.l.b16 %v1184
        %v3745 = vunpack.c.l.b16 %v1185
        %v3746 = vunpack.c.l.b16 %v1186
        %v3747 = vunpack.c.l.b16 %v1187
        %v3748 = vunpack.c.l.b16 %v1188
        %v3749 = vunpack.c.l.b16 %v1189
        %v3750 = vunpack.c.l.b16 %v1190
        %v3751 = vunpack.c.l.b16 %v1191
        %v3752 = vunpack.c.l.b16 %v1192
        %v3753 = vunpack.c.l.b16 %v1193
        %v3754 = vunpack.c.l.b16 %v1194
        %v3755 = vunpack.c.l.b16 %v1195
        %v3756 = vunpack.c.l.b16 %v1196
        %v3757 = vunpack.c.l.b16 %v1197
        %v3758 = vunpack.c.l.b16 %v1198
        %v3759 = vunpack.c.l.b16 %v1199
        %v3760 = vunpack.c.l.b16 %v1200
        %v3761 = vunpack.c.l.b16 %v1201
        %v3762 = vunpack.c.l.b16 %v1202
        %v3763 = vunpack.c.l.b16 %v1203
        %v3764 = vunpack.c.l.b16 %v1204
        %v3765 = vunpack.c.l.b16 %v1205
        %v3766 = vunpack.c.l.b16 %v1206
        %v3767 = vunpack.c.l.b16 %v1207
        %v3768 = vunpack.c.l.b16 %v1208
        %v3769 = vunpack.c.l.b16 %v1209
        %v3770 = vunpack.c.l.b16 %v1210
        %v3771 = vunpack.c.l.b16 %v1211
        %v3772 = vunpack.c.l.b16 %v1212
        %v3773 = vunpack.c.l.b16 %v1213
        %v3774 = vunpack.c.l.b16 %v1214
        %v3775 = vunpack.c.l.b16 %v1215
        %v3776 = vunpack.c.l.b16 %v1216
        %v3777 = vunpack.c.l.b16 %v1217
        %v3778 = vunpack.c.l.b16 %v1218
        %v3779 = vunpack.c.l.b16 %v1219
        %v3780 = vunpack.c.l.b16 %v1220
        %v3781 = vunpack.c.l.b16 %v1221
        %v3782 = vunpack.c.l.b16 %v1222
        %v3783 = vunpack.c.l.b16 %v1223
        %v3784 = vunpack.c.l.b16 %v1224
        %v3785 = vunpack.c.l.b16 %v1225
        %v3786 = vunpack.c.l.b16 %v1226
        %v3787 = vunpack.c.l.b16 %v1227
        %v3788 = vunpack.c.l.b16 %v1228
        %v3789 = vunpack.c.l.b16 %v1229
        %v3790 = vunpack.c.l.b16 %v1230
        %v3791 = vunpack.c.l.b16 %v1231
        %v3792 = vunpack.c.l.b16 %v1232
        %v3793 = vunpack.c.l.b16 %v1233
        %v3794 = vunpack.c.l.b16 %v1234
        %v3795 = vunpack.c.l.b16 %v1235
        %v3796 = vunpack.c.l.b16 %v1236
        %v3797 = vunpack.c.l.b16 %v1237
        %v3798 = vunpack.c.l.b16 %v1238
        %v3799 = vunpack.c.l.b16 %v1239
        %v3800 = vunpack.c.l.b16 %v1240
        %v3801 = vunpack.c.l.b16 %v1241
        %v3802 = vunpack.c.l.b16 %v1242
        %v3803 = vunpack.c.l.b16 %v1243
        %v3804 = vunpack.c.l.b16 %v1244
        %v3805 = vunpack.c.l.b16 %v1245
        %v3806 = vunpack.c.l.b16 %v1246
        %v3807 = vunpack.c.l.b16 %v1247
        %v3808 = vunpack.c.l.b16 %v1248
        %v3809 = vunpack.c.l.b16 %v1249
        %v3810 = vunpack.c.l.b16 %v1250
        %v3811 = vunpack.c.l.b16 %v1251
        %v3812 = vunpack.c.l.b16 %v1252
        %v3813 = vunpack.c.l.b16 %v1253
        %v3814 = vunpack.c.l.b16 %v1254
        %v3815 = vunpack.c.l.b16 %v1255
        %v3816 = vunpack.c.l.b16 %v1256
        %v3817 = vunpack.c.l.b16 %v1257
        %v3818 = vunpack.c.l.b16 %v1258
        %v3819 = vunpack.c.l.b16 %v1259
        %v3820 = vunpack.c.l.b16 %v1260
        %v3821 = vunpack.c.l.b16 %v1261
        %v3822 = vunpack.c.l.b16 %v1262
        %v3823 = vunpack.c.l.b16 %v1263
        %v3824 = vunpack.c.l.b16 %v1264
        %v3825 = vunpack.c.l.b16 %v1265
        %v3826 = vunpack.c.l.b16 %v1266
        %v3827 = vunpack.c.l.b16 %v1267
        %v3828 = vunpack.c.l.b16 %v1268
        %v3829 = vunpack.c.l.b16 %v1269
        %v3830 = vunpack.c.l.b16 %v1270
        %v3831 = vunpack.c.l.b16 %v1271
        %v3832 = vunpack.c.l.b16 %v1272
        %v3833 = vunpack.c.l.b16 %v1273
        %v3834 = vunpack.c.l.b16 %v1274
        %v3835 = vunpack.c.l.b16 %v1275
        %v3836 = vunpack.c.l.b16 %v1276
        %v3837 = vunpack.c.l.b16 %v1277
        %v3838 = vunpack.c.l.b16 %v1278
        %v3839 = vunpack.c.l.b16 %v1279
        %v3840 = vunpack.c.l.b16 %v1280
        %v3841 = vunpack.c.l.b16 %v1281
        %v3842 = vunpack.c.l.b16 %v1282
        %v3843 = vunpack.c.l.b16 %v1283
        %v3844 = vunpack.c.l.b16 %v1284
        %v3845 = vunpack.c.l.b16 %v1285
        %v3846 = vunpack.c.l.b16 %v1286
        %v3847 = vunpack.c.l.b16 %v1287
        %v3848 = vunpack.c.l.b16 %v1288
        %v3849 = vunpack.c.l.b16 %v1289
        %v3850 = vunpack.c.l.b16 %v1290
        %v3851 = vunpack.c.l.b16 %v1291
        %v3852 = vunpack.c.l.b16 %v1292
        %v3853 = vunpack.c.l.b16 %v1293
        %v3854 = vunpack.c.l.b16 %v1294
        %v3855 = vunpack.c.l.b16 %v1295
        %v3856 = vunpack.c.l.b16 %v1296
        %v3857 = vunpack.c.l.b16 %v1297
        %v3858 = vunpack.c.l.b16 %v1298
        %v3859 = vunpack.c.l.b16 %v1299
        %v3860 = vunpack.c.l.b16 %v1300
        %v3861 = vunpack.c.l.b16 %v1301
        %v3862 = vunpack.c.l.b16 %v1302
        %v3863 = vunpack.c.l.b16 %v1303
        %v3864 = vunpack.c.l.b16 %v1304
        %v3865 = vunpack.c.l.b16 %v1305
        %v3866 = vunpack.c.l.b16 %v1306
        %v3867 = vunpack.c.l.b16 %v1307
        %v3868 = vunpack.c.l.b16 %v1308
        %v3869 = vunpack.c.l.b16 %v1309
        %v3870 = vunpack.c.l.b16 %v1310
        %v3871 = vunpack.c.l.b16 %v1311
        %v3872 = vunpack.c.l.b16 %v1312
        %v3873 = vunpack.c.l.b16 %v1313
        %v3874 = vunpack.c.l.b16 %v1314
        %v3875 = vunpack.c.l.b16 %v1315
        %v3876 = vunpack.c.l.b16 %v1316
        %v3877 = vunpack.c.l.b16 %v1317
        %v3878 = vunpack.c.l.b16 %v1318
        %v3879 = vunpack.c.l.b16 %v1319
        %v3880 = vunpack.c.l.b16 %v1320
        %v3881 = vunpack.c.l.b16 %v1321
        %v3882 = vunpack.c.l.b16 %v1322
        %v3883 = vunpack.c.l.b16 %v1323
        %v3884 = vunpack.c.l.b16 %v1324
        %v3885 = vunpack.c.l.b16 %v1325
        %v3886 = vunpack.c.l.b16 %v1326
        %v3887 = vunpack.c.l.b16 %v1327
        %v3888 = vunpack.c.l.b16 %v1328
        %v3889 = vunpack.c.l.b16 %v1329
        %v3890 = vunpack.c.l.b16 %v1330
        %v3891 = vunpack.c.l.b16 %v1331
        %v3892 = vunpack.c.l.b16 %v1332
        %v3893 = vunpack.c.l.b16 %v1333
        %v3894 = vunpack.c.l.b16 %v1334
        %v3895 = vunpack.c.l.b16 %v1335
        %v3896 = vunpack.c.l.b16 %v1336
        %v3897 = vunpack.c.l.b16 %v1337
        %v3898 = vunpack.c.l.b16 %v1338
        %v3899 = vunpack.c.l.b16 %v1339
        %v3900 = vunpack.c.l.b16 %v1340
        %v3901 = vunpack.c.l.b16 %v1341
        %v3902 = vunpack.c.l.b16 %v1342
        %v3903 = vunpack.c.l.b16 %v1343
        %v3904 = vunpack.c.l.b16 %v1344
        %v3905 = vunpack.c.l.b16 %v1345
        %v3906 = vunpack.c.l.b16 %v1346
        %v3907 = vunpack.c.l.b16 %v1347
        %v3908 = vunpack.c.l.b16 %v1348
        %v3909 = vunpack.c.l.b16 %v1349
        %v3910 = vunpack.c.l.b16 %v1350
        %v3911 = vunpack.c.l.b16 %v1351
        %v3912 = vunpack.c.l.b16 %v1352
        %v3913 = vunpack.c.l.b16 %v1353
        %v3914 = vunpack.c.l.b16 %v1354
        %v3915 = vunpack.c.l.b16 %v1355
        %v3916 = vunpack.c.l.b16 %v1356
        %v3917 = vunpack.c.l.b16 %v1357
        %v3918 = vunpack.c.l.b16 %v1358
        %v3919 = vunpack.c.l.b16 %v1359
        %v3920 = vunpack.c.l.b16 %v1360
        %v3921 = vunpack.c.l.b16 %v1361
        %v3922 = vunpack.c.l.b16 %v1362
        %v3923 = vunpack.c.l.b16 %v1363
        %v3924 = vunpack.c.l.b16 %v1364
        %v3925 = vunpack.c.l.b16 %v1365
        %v3926 = vunpack.c.l.b16 %v1366
        %v3927 = vunpack.c.l.b16 %v1367
        %v3928 = vunpack.c.l.b16 %v1368
        %v3929 = vunpack.c.l.b16 %v1369
        %v3930 = vunpack.c.l.b16 %v1370
        %v3931 = vunpack.c.l.b16 %v1371
        %v3932 = vunpack.c.l.b16 %v1372
        %v3933 = vunpack.c.l.b16 %v1373
        %v3934 = vunpack.c.l.b16 %v1374
        %v3935 = vunpack.c.l.b16 %v1375
        %v3936 = vunpack.c.l.b16 %v1376
        %v3937 = vunpack.c.l.b16 %v1377
        %v3938 = vunpack.c.l.b16 %v1378
        %v3939 = vunpack.c.l.b16 %v1379
        %v3940 = vunpack.c.l.b16 %v1380
        %v3941 = vunpack.c.l.b16 %v1381
        %v3942 = vunpack.c.l.b16 %v1382
        %v3943 = vunpack.c.l.b16 %v1383
        %v3944 = vunpack.c.l.b16 %v1384
        %v3945 = vunpack.c.l.b16 %v1385
        %v3946 = vunpack.c.l.b16 %v1386
        %v3947 = vunpack.c.l.b16 %v1387
        %v3948 = vunpack.c.l.b16 %v1388
        %v3949 = vunpack.c.l.b16 %v1389
        %v3950 = vunpack.c.l.b16 %v1390
        %v3951 = vunpack.c.l.b16 %v1391
        %v3952 = vunpack.c.l.b16 %v1392
        %v3953 = vunpack.c.l.b16 %v1393
        %v3954 = vunpack.c.l.b16 %v1394
        %v3955 = vunpack.c.l.b16 %v1395
        %v3956 = vunpack.c.l.b16 %v1396
        %v3957 = vunpack.c.l.b16 %v1397
        %v3958 = vunpack.c.l.b16 %v1398
        %v3959 = vunpack.c.l.b16 %v1399
        %v3960 = vunpack.c.l.b16 %v1400
        %v3961 = vunpack.c.l.b16 %v1401
        %v3962 = vunpack.c.l.b16 %v1402
        %v3963 = vunpack.c.l.b16 %v1403
        %v3964 = vunpack.c.l.b16 %v1404
        %v3965 = vunpack.c.l.b16 %v1405
        %v3966 = vunpack.c.l.b16 %v1406
        %v3967 = vunpack.c.l.b16 %v1407
        %v3968 = vunpack.c.l.b16 %v1408
        %v3969 = vunpack.c.l.b16 %v1409
        %v3970 = vunpack.c.l.b16 %v1410
        %v3971 = vunpack.c.l.b16 %v1411
        %v3972 = vunpack.c.l.b16 %v1412
        %v3973 = vunpack.c.l.b16 %v1413
        %v3974 = vunpack.c.l.b16 %v1414
        %v3975 = vunpack.c.l.b16 %v1415
        %v3976 = vunpack.c.l.b16 %v1416
        %v3977 = vunpack.c.l.b16 %v1417
        %v3978 = vunpack.c.l.b16 %v1418
        %v3979 = vunpack.c.l.b16 %v1419
        %v3980 = vunpack.c.l.b16 %v1420
        %v3981 = vunpack.c.l.b16 %v1421
        %v3982 = vunpack.c.l.b16 %v1422
        %v3983 = vunpack.c.l.b16 %v1423
        %v3984 = vunpack.c.l.b16 %v1424
        %v3985 = vunpack.c.l.b16 %v1425
        %v3986 = vunpack.c.l.b16 %v1426
        %v3987 = vunpack.c.l.b16 %v1427
        %v3988 = vunpack.c.l.b16 %v1428
        %v3989 = vunpack.c.l.b16 %v1429
        %v3990 = vunpack.c.l.b16 %v1430
        %v3991 = vunpack.c.l.b16 %v1431
        %v3992 = vunpack.c.l.b16 %v1432
        %v3993 = vunpack.c.l.b16 %v1433
        %v3994 = vunpack.c.l.b16 %v1434
        %v3995 = vunpack.c.l.b16 %v1435
        %v3996 = vunpack.c.l.b16 %v1436
        %v3997 = vunpack.c.l.b16 %v1437
        %v3998 = vunpack.c.l.b16 %v1438
        %v3999 = vunpack.c.l.b16 %v1439
        %v4000 = vunpack.c.l.b16 %v1440
        %v4001 = vunpack.c.l.b16 %v1441
        %v4002 = vunpack.c.l.b16 %v1442
        %v4003 = vunpack.c.l.b16 %v1443
        %v4004 = vunpack.c.l.b16 %v1444
        %v4005 = vunpack.c.l.b16 %v1445
        %v4006 = vunpack.c.l.b16 %v1446
        %v4007 = vunpack.c.l.b16 %v1447
        %v4008 = vunpack.c.l.b16 %v1448
        %v4009 = vunpack.c.l.b16 %v1449
        %v4010 = vunpack.c.l.b16 %v1450
        %v4011 = vunpack.c.l.b16 %v1451
        %v4012 = vunpack.c.l.b16 %v1452
        %v4013 = vunpack.c.l.b16 %v1453
        %v4014 = vunpack.c.l.b16 %v1454
        %v4015 = vunpack.c.l.b16 %v1455
        %v4016 = vunpack.c.l.b16 %v1456
        %v4017 = vunpack.c.l.b16 %v1457
        %v4018 = vunpack.c.l.b16 %v1458
        %v4019 = vunpack.c.l.b16 %v1459
        %v4020 = vunpack.c.l.b16 %v1460
        %v4021 = vunpack.c.l.b16 %v1461
        %v4022 = vunpack.c.l.b16 %v1462
        %v4023 = vunpack.c.l.b16 %v1463
        %v4024 = vunpack.c.l.b16 %v1464
        %v4025 = vunpack.c.l.b16 %v1465
        %v4026 = vunpack.c.l.b16 %v1466
        %v4027 = vunpack.c.l.b16 %v1467
        %v4028 = vunpack.c.l.b16 %v1468
        %v4029 = vunpack.c.l.b16 %v1469
        %v4030 = vunpack.c.l.b16 %v1470
        %v4031 = vunpack.c.l.b16 %v1471
        %v4032 = vunpack.c.l.b16 %v1472
        %v4033 = vunpack.c.l.b16 %v1473
        %v4034 = vunpack.c.l.b16 %v1474
        %v4035 = vunpack.c.l.b16 %v1475
        %v4036 = vunpack.c.l.b16 %v1476
        %v4037 = vunpack.c.l.b16 %v1477
        %v4038 = vunpack.c.l.b16 %v1478
        %v4039 = vunpack.c.l.b16 %v1479
        %v4040 = vunpack.c.l.b16 %v1480
        %v4041 = vunpack.c.l.b16 %v1481
        %v4042 = vunpack.c.l.b16 %v1482
        %v4043 = vunpack.c.l.b16 %v1483
        %v4044 = vunpack.c.l.b16 %v1484
        %v4045 = vunpack.c.l.b16 %v1485
        %v4046 = vunpack.c.l.b16 %v1486
        %v4047 = vunpack.c.l.b16 %v1487
        %v4048 = vunpack.c.l.b16 %v1488
        %v4049 = vunpack.c.l.b16 %v1489
        %v4050 = vunpack.c.l.b16 %v1490
        %v4051 = vunpack.c.l.b16 %v1491
        %v4052 = vunpack.c.l.b16 %v1492
        %v4053 = vunpack.c.l.b16 %v1493
        %v4054 = vunpack.c.l.b16 %v1494
        %v4055 = vunpack.c.l.b16 %v1495
        %v4056 = vunpack.c.l.b16 %v1496
        %v4057 = vunpack.c.l.b16 %v1497
        %v4058 = vunpack.c.l.b16 %v1498
        %v4059 = vunpack.c.l.b16 %v1499
        %v4060 = vunpack.c.l.b16 %v1500
        %v4061 = vunpack.c.l.b16 %v1501
        %v4062 = vunpack.c.l.b16 %v1502
        %v4063 = vunpack.c.l.b16 %v1503
        %v4064 = vunpack.c.l.b16 %v1504
        %v4065 = vunpack.c.l.b16 %v1505
        %v4066 = vunpack.c.l.b16 %v1506
        %v4067 = vunpack.c.l.b16 %v1507
        %v4068 = vunpack.c.l.b16 %v1508
        %v4069 = vunpack.c.l.b16 %v1509
        %v4070 = vunpack.c.l.b16 %v1510
        %v4071 = vunpack.c.l.b16 %v1511
        %v4072 = vunpack.c.l.b16 %v1512
        %v4073 = vunpack.c.l.b16 %v1513
        %v4074 = vunpack.c.l.b16 %v1514
        %v4075 = vunpack.c.l.b16 %v1515
        %v4076 = vunpack.c.l.b16 %v1516
        %v4077 = vunpack.c.l.b16 %v1517
        %v4078 = vunpack.c.l.b16 %v1518
        %v4079 = vunpack.c.l.b16 %v1519
        %v4080 = vunpack.c.l.b16 %v1520
        %v4081 = vunpack.c.l.b16 %v1521
        %v4082 = vunpack.c.l.b16 %v1522
        %v4083 = vunpack.c.l.b16 %v1523
        %v4084 = vunpack.c.l.b16 %v1524
        %v4085 = vunpack.c.l.b16 %v1525
        %v4086 = vunpack.c.l.b16 %v1526
        %v4087 = vunpack.c.l.b16 %v1527
        %v4088 = vunpack.c.l.b16 %v1528
        %v4089 = vunpack.c.l.b16 %v1529
        %v4090 = vunpack.c.l.b16 %v1530
        %v4091 = vunpack.c.l.b16 %v1531
        %v4092 = vunpack.c.l.b16 %v1532
        %v4093 = vunpack.c.l.b16 %v1533
        %v4094 = vunpack.c.l.b16 %v1534
        %v4095 = vunpack.c.l.b16 %v1535
        %v4096 = vunpack.c.l.b16 %v1536
        %v4097 = vunpack.c.l.b16 %v1537
        %v4098 = vunpack.c.l.b16 %v1538
        %v4099 = vunpack.c.l.b16 %v1539
        %v4100 = vunpack.c.l.b16 %v1540
        %v4101 = vunpack.c.l.b16 %v1541
        %v4102 = vunpack.c.l.b16 %v1542
        %v4103 = vunpack.c.l.b16 %v1543
        %v4104 = vunpack.c.l.b16 %v1544
        %v4105 = vunpack.c.l.b16 %v1545
        %v4106 = vunpack.c.l.b16 %v1546
        %v4107 = vunpack.c.l.b16 %v1547
        %v4108 = vunpack.c.l.b16 %v1548
        %v4109 = vunpack.c.l.b16 %v1549
        %v4110 = vunpack.c.l.b16 %v1550
        %v4111 = vunpack.c.l.b16 %v1551
        %v4112 = vunpack.c.l.b16 %v1552
        %v4113 = vunpack.c.l.b16 %v1553
        %v4114 = vunpack.c.l.b16 %v1554
        %v4115 = vunpack.c.l.b16 %v1555
        %v4116 = vunpack.c.l.b16 %v1556
        %v4117 = vunpack.c.l.b16 %v1557
        %v4118 = vunpack.c.l.b16 %v1558
        %v4119 = vunpack.c.l.b16 %v1559
        %v4120 = vunpack.c.l.b16 %v1560
        %v4121 = vunpack.c.l.b16 %v1561
        %v4122 = vunpack.c.l.b16 %v1562
        %v4123 = vunpack.c.l.b16 %v1563
        %v4124 = vunpack.c.l.b16 %v1564
        %v4125 = vunpack.c.l.b16 %v1565
        %v4126 = vunpack.c.l.b16 %v1566
        %v4127 = vunpack.c.l.b16 %v1567
        %v4128 = vunpack.c.l.b16 %v1568
        %v4129 = vunpack.c.l.b16 %v1569
        %v4130 = vunpack.c.l.b16 %v1570
        %v4131 = vunpack.c.l.b16 %v1571
        %v4132 = vunpack.c.l.b16 %v1572
        %v4133 = vunpack.c.l.b16 %v1573
        %v4134 = vunpack.c.l.b16 %v1574
        %v4135 = vunpack.c.l.b16 %v1575
        %v4136 = vunpack.c.l.b16 %v1576
        %v4137 = vunpack.c.l.b16 %v1577
        %v4138 = vunpack.c.l.b16 %v1578
        %v4139 = vunpack.c.l.b16 %v1579
        %v4140 = vunpack.c.l.b16 %v1580
        %v4141 = vunpack.c.l.b16 %v1581
        %v4142 = vunpack.c.l.b16 %v1582
        %v4143 = vunpack.c.l.b16 %v1583
        %v4144 = vunpack.c.l.b16 %v1584
        %v4145 = vunpack.c.l.b16 %v1585
        %v4146 = vunpack.c.l.b16 %v1586
        %v4147 = vunpack.c.l.b16 %v1587
        %v4148 = vunpack.c.l.b16 %v1588
        %v4149 = vunpack.c.l.b16 %v1589
        %v4150 = vunpack.c.l.b16 %v1590
        %v4151 = vunpack.c.l.b16 %v1591
        %v4152 = vunpack.c.l.b16 %v1592
        %v4153 = vunpack.c.l.b16 %v1593
        %v4154 = vunpack.c.l.b16 %v1594
        %v4155 = vunpack.c.l.b16 %v1595
        %v4156 = vunpack.c.l.b16 %v1596
        %v4157 = vunpack.c.l.b16 %v1597
        %v4158 = vunpack.c.l.b16 %v1598
        %v4159 = vunpack.c.l.b16 %v1599
        %v4160 = vunpack.c.l.b16 %v1600
        %v4161 = vunpack.c.l.b16 %v1601
        %v4162 = vunpack.c.l.b16 %v1602
        %v4163 = vunpack.c.l.b16 %v1603
        %v4164 = vunpack.c.l.b16 %v1604
        %v4165 = vunpack.c.l.b16 %v1605
        %v4166 = vunpack.c.l.b16 %v1606
        %v4167 = vunpack.c.l.b16 %v1607
        %v4168 = vunpack.c.l.b16 %v1608
        %v4169 = vunpack.c.l.b16 %v1609
        %v4170 = vunpack.c.l.b16 %v1610
        %v4171 = vunpack.c.l.b16 %v1611
        %v4172 = vunpack.c.l.b16 %v1612
        %v4173 = vunpack.c.l.b16 %v1613
        %v4174 = vunpack.c.l.b16 %v1614
        %v4175 = vunpack.c.l.b16 %v1615
        %v4176 = vunpack.c.l.b16 %v1616
        %v4177 = vunpack.c.l.b16 %v1617
        %v4178 = vunpack.c.l.b16 %v1618
        %v4179 = vunpack.c.l.b16 %v1619
        %v4180 = vunpack.c.l.b16 %v1620
        %v4181 = vunpack.c.l.b16 %v1621
        %v4182 = vunpack.c.l.b16 %v1622
        %v4183 = vunpack.c.l.b16 %v1623
        %v4184 = vunpack.c.l.b16 %v1624
        %v4185 = vunpack.c.l.b16 %v1625
        %v4186 = vunpack.c.l.b16 %v1626
        %v4187 = vunpack.c.l.b16 %v1627
        %v4188 = vunpack.c.l.b16 %v1628
        %v4189 = vunpack.c.l.b16 %v1629
        %v4190 = vunpack.c.l.b16 %v1630
        %v4191 = vunpack.c.l.b16 %v1631
        %v4192 = vunpack.c.l.b16 %v1632
        %v4193 = vunpack.c.l.b16 %v1633
        %v4194 = vunpack.c.l.b16 %v1634
        %v4195 = vunpack.c.l.b16 %v1635
        %v4196 = vunpack.c.l.b16 %v1636
        %v4197 = vunpack.c.l.b16 %v1637
        %v4198 = vunpack.c.l.b16 %v1638
        %v4199 = vunpack.c.l.b16 %v1639
        %v4200 = vunpack.c.l.b16 %v1640
        %v4201 = vunpack.c.l.b16 %v1641
        %v4202 = vunpack.c.l.b16 %v1642
        %v4203 = vunpack.c.l.b16 %v1643
        %v4204 = vunpack.c.l.b16 %v1644
        %v4205 = vunpack.c.l.b16 %v1645
        %v4206 = vunpack.c.l.b16 %v1646
        %v4207 = vunpack.c.l.b16 %v1647
        %v4208 = vunpack.c.l.b16 %v1648
        %v4209 = vunpack.c.l.b16 %v1649
        %v4210 = vunpack.c.l.b16 %v1650
        %v4211 = vunpack.c.l.b16 %v1651
        %v4212 = vunpack.c.l.b16 %v1652
        %v4213 = vunpack.c.l.b16 %v1653
        %v4214 = vunpack.c.l.b16 %v1654
        %v4215 = vunpack.c.l.b16 %v1655
        %v4216 = vunpack.c.l.b16 %v1656
        %v4217 = vunpack.c.l.b16 %v1657
        %v4218 = vunpack.c.l.b16 %v1658
        %v4219 = vunpack.c.l.b16 %v1659
        %v4220 = vunpack.c.l.b16 %v1660
        %v4221 = vunpack.c.l.b16 %v1661
        %v4222 = vunpack.c.l.b16 %v1662
        %v4223 = vunpack.c.l.b16 %v1663
        %v4224 = vunpack.c.l.b16 %v1664
        %v4225 = vunpack.c.l.b16 %v1665
        %v4226 = vunpack.c.l.b16 %v1666
        %v4227 = vunpack.c.l.b16 %v1667
        %v4228 = vunpack.c.l.b16 %v1668
        %v4229 = vunpack.c.l.b16 %v1669
        %v4230 = vunpack.c.l.b16 %v1670
        %v4231 = vunpack.c.l.b16 %v1671
        %v4232 = vunpack.c.l.b16 %v1672
        %v4233 = vunpack.c.l.b16 %v1673
        %v4234 = vunpack.c.l.b16 %v1674
        %v4235 = vunpack.c.l.b16 %v1675
        %v4236 = vunpack.c.l.b16 %v1676
        %v4237 = vunpack.c.l.b16 %v1677
        %v4238 = vunpack.c.l.b16 %v1678
        %v4239 = vunpack.c.l.b16 %v1679
        %v4240 = vunpack.c.l.b16 %v1680
        %v4241 = vunpack.c.l.b16 %v1681
        %v4242 = vunpack.c.l.b16 %v1682
        %v4243 = vunpack.c.l.b16 %v1683
        %v4244 = vunpack.c.l.b16 %v1684
        %v4245 = vunpack.c.l.b16 %v1685
        %v4246 = vunpack.c.l.b16 %v1686
        %v4247 = vunpack.c.l.b16 %v1687
        %v4248 = vunpack.c.l.b16 %v1688
        %v4249 = vunpack.c.l.b16 %v1689
        %v4250 = vunpack.c.l.b16 %v1690
        %v4251 = vunpack.c.l.b16 %v1691
        %v4252 = vunpack.c.l.b16 %v1692
        %v4253 = vunpack.c.l.b16 %v1693
        %v4254 = vunpack.c.l.b16 %v1694
        %v4255 = vunpack.c.l.b16 %v1695
        %v4256 = vunpack.c.l.b16 %v1696
        %v4257 = vunpack.c.l.b16 %v1697
        %v4258 = vunpack.c.l.b16 %v1698
        %v4259 = vunpack.c.l.b16 %v1699
        %v4260 = vunpack.c.l.b16 %v1700
        %v4261 = vunpack.c.l.b16 %v1701
        %v4262 = vunpack.c.l.b16 %v1702
        %v4263 = vunpack.c.l.b16 %v1703
        %v4264 = vunpack.c.l.b16 %v1704
        %v4265 = vunpack.c.l.b16 %v1705
        %v4266 = vunpack.c.l.b16 %v1706
        %v4267 = vunpack.c.l.b16 %v1707
        %v4268 = vunpack.c.l.b16 %v1708
        %v4269 = vunpack.c.l.b16 %v1709
        %v4270 = vunpack.c.l.b16 %v1710
        %v4271 = vunpack.c.l.b16 %v1711
        %v4272 = vunpack.c.l.b16 %v1712
        %v4273 = vunpack.c.l.b16 %v1713
        %v4274 = vunpack.c.l.b16 %v1714
        %v4275 = vunpack.c.l.b16 %v1715
        %v4276 = vunpack.c.l.b16 %v1716
        %v4277 = vunpack.c.l.b16 %v1717
        %v4278 = vunpack.c.l.b16 %v1718
        %v4279 = vunpack.c.l.b16 %v1719
        %v4280 = vunpack.c.l.b16 %v1720
        %v4281 = vunpack.c.l.b16 %v1721
        %v4282 = vunpack.c.l.b16 %v1722
        %v4283 = vunpack.c.l.b16 %v1723
        %v4284 = vunpack.c.l.b16 %v1724
        %v4285 = vunpack.c.l.b16 %v1725
        %v4286 = vunpack.c.l.b16 %v1726
        %v4287 = vunpack.c.l.b16 %v1727
        %v4288 = vunpack.c.l.b16 %v1728
        %v4289 = vunpack.c.l.b16 %v1729
        %v4290 = vunpack.c.l.b16 %v1730
        %v4291 = vunpack.c.l.b16 %v1731
        %v4292 = vunpack.c.l.b16 %v1732
        %v4293 = vunpack.c.l.b16 %v1733
        %v4294 = vunpack.c.l.b16 %v1734
        %v4295 = vunpack.c.l.b16 %v1735
        %v4296 = vunpack.c.l.b16 %v1736
        %v4297 = vunpack.c.l.b16 %v1737
        %v4298 = vunpack.c.l.b16 %v1738
        %v4299 = vunpack.c.l.b16 %v1739
        %v4300 = vunpack.c.l.b16 %v1740
        %v4301 = vunpack.c.l.b16 %v1741
        %v4302 = vunpack.c.l.b16 %v1742
        %v4303 = vunpack.c.l.b16 %v1743
        %v4304 = vunpack.c.l.b16 %v1744
        %v4305 = vunpack.c.l.b16 %v1745
        %v4306 = vunpack.c.l.b16 %v1746
        %v4307 = vunpack.c.l.b16 %v1747
        %v4308 = vunpack.c.l.b16 %v1748
        %v4309 = vunpack.c.l.b16 %v1749
        %v4310 = vunpack.c.l.b16 %v1750
        %v4311 = vunpack.c.l.b16 %v1751
        %v4312 = vunpack.c.l.b16 %v1752
        %v4313 = vunpack.c.l.b16 %v1753
        %v4314 = vunpack.c.l.b16 %v1754
        %v4315 = vunpack.c.l.b16 %v1755
        %v4316 = vunpack.c.l.b16 %v1756
        %v4317 = vunpack.c.l.b16 %v1757
        %v4318 = vunpack.c.l.b16 %v1758
        %v4319 = vunpack.c.l.b16 %v1759
        %v4320 = vunpack.c.l.b16 %v1760
        %v4321 = vunpack.c.l.b16 %v1761
        %v4322 = vunpack.c.l.b16 %v1762
        %v4323 = vunpack.c.l.b16 %v1763
        %v4324 = vunpack.c.l.b16 %v1764
        %v4325 = vunpack.c.l.b16 %v1765
        %v4326 = vunpack.c.l.b16 %v1766
        %v4327 = vunpack.c.l.b16 %v1767
        %v4328 = vunpack.c.l.b16 %v1768
        %v4329 = vunpack.c.l.b16 %v1769
        %v4330 = vunpack.c.l.b16 %v1770
        %v4331 = vunpack.c.l.b16 %v1771
        %v4332 = vunpack.c.l.b16 %v1772
        %v4333 = vunpack.c.l.b16 %v1773
        %v4334 = vunpack.c.l.b16 %v1774
        %v4335 = vunpack.c.l.b16 %v1775
        %v4336 = vunpack.c.l.b16 %v1776
        %v4337 = vunpack.c.l.b16 %v1777
        %v4338 = vunpack.c.l.b16 %v1778
        %v4339 = vunpack.c.l.b16 %v1779
        %v4340 = vunpack.c.l.b16 %v1780
        %v4341 = vunpack.c.l.b16 %v1781
        %v4342 = vunpack.c.l.b16 %v1782
        %v4343 = vunpack.c.l.b16 %v1783
        %v4344 = vunpack.c.l.b16 %v1784
        %v4345 = vunpack.c.l.b16 %v1785
        %v4346 = vunpack.c.l.b16 %v1786
        %v4347 = vunpack.c.l.b16 %v1787
        %v4348 = vunpack.c.l.b16 %v1788
        %v4349 = vunpack.c.l.b16 %v1789
        %v4350 = vunpack.c.l.b16 %v1790
        %v4351 = vunpack.c.l.b16 %v1791
        %v4352 = vunpack.c.l.b16 %v1792
        %v4353 = vunpack.c.l.b16 %v1793
        %v4354 = vunpack.c.l.b16 %v1794
        %v4355 = vunpack.c.l.b16 %v1795
        %v4356 = vunpack.c.l.b16 %v1796
        %v4357 = vunpack.c.l.b16 %v1797
        %v4358 = vunpack.c.l.b16 %v1798
        %v4359 = vunpack.c.l.b16 %v1799
        %v4360 = vunpack.c.l.b16 %v1800
        %v4361 = vunpack.c.l.b16 %v1801
        %v4362 = vunpack.c.l.b16 %v1802
        %v4363 = vunpack.c.l.b16 %v1803
        %v4364 = vunpack.c.l.b16 %v1804
        %v4365 = vunpack.c.l.b16 %v1805
        %v4366 = vunpack.c.l.b16 %v1806
        %v4367 = vunpack.c.l.b16 %v1807
        %v4368 = vunpack.c.l.b16 %v1808
        %v4369 = vunpack.c.l.b16 %v1809
        %v4370 = vunpack.c.l.b16 %v1810
        %v4371 = vunpack.c.l.b16 %v1811
        %v4372 = vunpack.c.l.b16 %v1812
        %v4373 = vunpack.c.l.b16 %v1813
        %v4374 = vunpack.c.l.b16 %v1814
        %v4375 = vunpack.c.l.b16 %v1815
        %v4376 = vunpack.c.l.b16 %v1816
        %v4377 = vunpack.c.l.b16 %v1817
        %v4378 = vunpack.c.l.b16 %v1818
        %v4379 = vunpack.c.l.b16 %v1819
        %v4380 = vunpack.c.l.b16 %v1820
        %v4381 = vunpack.c.l.b16 %v1821
        %v4382 = vunpack.c.l.b16 %v1822
        %v4383 = vunpack.c.l.b16 %v1823
        %v4384 = vunpack.c.l.b16 %v1824
        %v4385 = vunpack.c.l.b16 %v1825
        %v4386 = vunpack.c.l.b16 %v1826
        %v4387 = vunpack.c.l.b16 %v1827
        %v4388 = vunpack.c.l.b16 %v1828
        %v4389 = vunpack.c.l.b16 %v1829
        %v4390 = vunpack.c.l.b16 %v1830
        %v4391 = vunpack.c.l.b16 %v1831
        %v4392 = vunpack.c.l.b16 %v1832
        %v4393 = vunpack.c.l.b16 %v1833
        %v4394 = vunpack.c.l.b16 %v1834
        %v4395 = vunpack.c.l.b16 %v1835
        %v4396 = vunpack.c.l.b16 %v1836
        %v4397 = vunpack.c.l.b16 %v1837
        %v4398 = vunpack.c.l.b16 %v1838
        %v4399 = vunpack.c.l.b16 %v1839
        %v4400 = vunpack.c.l.b16 %v1840
        %v4401 = vunpack.c.l.b16 %v1841
        %v4402 = vunpack.c.l.b16 %v1842
        %v4403 = vunpack.c.l.b16 %v1843
        %v4404 = vunpack.c.l.b16 %v1844
        %v4405 = vunpack.c.l.b16 %v1845
        %v4406 = vunpack.c.l.b16 %v1846
        %v4407 = vunpack.c.l.b16 %v1847
        %v4408 = vunpack.c.l.b16 %v1848
        %v4409 = vunpack.c.l.b16 %v1849
        %v4410 = vunpack.c.l.b16 %v1850
        %v4411 = vunpack.c.l.b16 %v1851
        %v4412 = vunpack.c.l.b16 %v1852
        %v4413 = vunpack.c.l.b16 %v1853
        %v4414 = vunpack.c.l.b16 %v1854
        %v4415 = vunpack.c.l.b16 %v1855
        %v4416 = vunpack.c.l.b16 %v1856
        %v4417 = vunpack.c.l.b16 %v1857
        %v4418 = vunpack.c.l.b16 %v1858
        %v4419 = vunpack.c.l.b16 %v1859
        %v4420 = vunpack.c.l.b16 %v1860
        %v4421 = vunpack.c.l.b16 %v1861
        %v4422 = vunpack.c.l.b16 %v1862
        %v4423 = vunpack.c.l.b16 %v1863
        %v4424 = vunpack.c.l.b16 %v1864
        %v4425 = vunpack.c.l.b16 %v1865
        %v4426 = vunpack.c.l.b16 %v1866
        %v4427 = vunpack.c.l.b16 %v1867
        %v4428 = vunpack.c.l.b16 %v1868
        %v4429 = vunpack.c.l.b16 %v1869
        %v4430 = vunpack.c.l.b16 %v1870
        %v4431 = vunpack.c.l.b16 %v1871
        %v4432 = vunpack.c.l.b16 %v1872
        %v4433 = vunpack.c.l.b16 %v1873
        %v4434 = vunpack.c.l.b16 %v1874
        %v4435 = vunpack.c.l.b16 %v1875
        %v4436 = vunpack.c.l.b16 %v1876
        %v4437 = vunpack.c.l.b16 %v1877
        %v4438 = vunpack.c.l.b16 %v1878
        %v4439 = vunpack.c.l.b16 %v1879
        %v4440 = vunpack.c.l.b16 %v1880
        %v4441 = vunpack.c.l.b16 %v1881
        %v4442 = vunpack.c.l.b16 %v1882
        %v4443 = vunpack.c.l.b16 %v1883
        %v4444 = vunpack.c.l.b16 %v1884
        %v4445 = vunpack.c.l.b16 %v1885
        %v4446 = vunpack.c.l.b16 %v1886
        %v4447 = vunpack.c.l.b16 %v1887
        %v4448 = vunpack.c.l.b16 %v1888
        %v4449 = vunpack.c.l.b16 %v1889
        %v4450 = vunpack.c.l.b16 %v1890
        %v4451 = vunpack.c.l.b16 %v1891
        %v4452 = vunpack.c.l.b16 %v1892
        %v4453 = vunpack.c.l.b16 %v1893
        %v4454 = vunpack.c.l.b16 %v1894
        %v4455 = vunpack.c.l.b16 %v1895
        %v4456 = vunpack.c.l.b16 %v1896
        %v4457 = vunpack.c.l.b16 %v1897
        %v4458 = vunpack.c.l.b16 %v1898
        %v4459 = vunpack.c.l.b16 %v1899
        %v4460 = vunpack.c.l.b16 %v1900
        %v4461 = vunpack.c.l.b16 %v1901
        %v4462 = vunpack.c.l.b16 %v1902
        %v4463 = vunpack.c.l.b16 %v1903
        %v4464 = vunpack.c.l.b16 %v1904
        %v4465 = vunpack.c.l.b16 %v1905
        %v4466 = vunpack.c.l.b16 %v1906
        %v4467 = vunpack.c.l.b16 %v1907
        %v4468 = vunpack.c.l.b16 %v1908
        %v4469 = vunpack.c.l.b16 %v1909
        %v4470 = vunpack.c.l.b16 %v1910
        %v4471 = vunpack.c.l.b16 %v1911
        %v4472 = vunpack.c.l.b16 %v1912
        %v4473 = vunpack.c.l.b16 %v1913
        %v4474 = vunpack.c.l.b16 %v1914
        %v4475 = vunpack.c.l.b16 %v1915
        %v4476 = vunpack.c.l.b16 %v1916
        %v4477 = vunpack.c.l.b16 %v1917
        %v4478 = vunpack.c.l.b16 %v1918
        %v4479 = vunpack.c.l.b16 %v1919
        %v4480 = vunpack.c.l.b16 %v1920
        %v4481 = vunpack.c.l.b16 %v1921
        %v4482 = vunpack.c.l.b16 %v1922
        %v4483 = vunpack.c.l.b16 %v1923
        %v4484 = vunpack.c.l.b16 %v1924
        %v4485 = vunpack.c.l.b16 %v1925
        %v4486 = vunpack.c.l.b16 %v1926
        %v4487 = vunpack.c.l.b16 %v1927
        %v4488 = vunpack.c.l.b16 %v1928
        %v4489 = vunpack.c.l.b16 %v1929
        %v4490 = vunpack.c.l.b16 %v1930
        %v4491 = vunpack.c.l.b16 %v1931
        %v4492 = vunpack.c.l.b16 %v1932
        %v4493 = vunpack.c.l.b16 %v1933
        %v4494 = vunpack.c.l.b16 %v1934
        %v4495 = vunpack.c.l.b16 %v1935
        %v4496 = vunpack.c.l.b16 %v1936
        %v4497 = vunpack.c.l.b16 %v1937
        %v4498 = vunpack.c.l.b16 %v1938
        %v4499 = vunpack.c.l.b16 %v1939
        %v4500 = vunpack.c.l.b16 %v1940
        %v4501 = vunpack.c.l.b16 %v1941
        %v4502 = vunpack.c.l.b16 %v1942
        %v4503 = vunpack.c.l.b16 %v1943
        %v4504 = vunpack.c.l.b16 %v1944
        %v4505 = vunpack.c.l.b16 %v1945
        %v4506 = vunpack.c.l.b16 %v1946
        %v4507 = vunpack.c.l.b16 %v1947
        %v4508 = vunpack.c.l.b16 %v1948
        %v4509 = vunpack.c.l.b16 %v1949
        %v4510 = vunpack.c.l.b16 %v1950
        %v4511 = vunpack.c.l.b16 %v1951
        %v4512 = vunpack.c.l.b16 %v1952
        %v4513 = vunpack.c.l.b16 %v1953
        %v4514 = vunpack.c.l.b16 %v1954
        %v4515 = vunpack.c.l.b16 %v1955
        %v4516 = vunpack.c.l.b16 %v1956
        %v4517 = vunpack.c.l.b16 %v1957
        %v4518 = vunpack.c.l.b16 %v1958
        %v4519 = vunpack.c.l.b16 %v1959
        %v4520 = vunpack.c.l.b16 %v1960
        %v4521 = vunpack.c.l.b16 %v1961
        %v4522 = vunpack.c.l.b16 %v1962
        %v4523 = vunpack.c.l.b16 %v1963
        %v4524 = vunpack.c.l.b16 %v1964
        %v4525 = vunpack.c.l.b16 %v1965
        %v4526 = vunpack.c.l.b16 %v1966
        %v4527 = vunpack.c.l.b16 %v1967
        %v4528 = vunpack.c.l.b16 %v1968
        %v4529 = vunpack.c.l.b16 %v1969
        %v4530 = vunpack.c.l.b16 %v1970
        %v4531 = vunpack.c.l.b16 %v1971
        %v4532 = vunpack.c.l.b16 %v1972
        %v4533 = vunpack.c.l.b16 %v1973
        %v4534 = vunpack.c.l.b16 %v1974
        %v4535 = vunpack.c.l.b16 %v1975
        %v4536 = vunpack.c.l.b16 %v1976
        %v4537 = vunpack.c.l.b16 %v1977
        %v4538 = vunpack.c.l.b16 %v1978
        %v4539 = vunpack.c.l.b16 %v1979
        %v4540 = vunpack.c.l.b16 %v1980
        %v4541 = vunpack.c.l.b16 %v1981
        %v4542 = vunpack.c.l.b16 %v1982
        %v4543 = vunpack.c.l.b16 %v1983
        %v4544 = vunpack.c.l.b16 %v1984
        %v4545 = vunpack.c.l.b16 %v1985
        %v4546 = vunpack.c.l.b16 %v1986
        %v4547 = vunpack.c.l.b16 %v1987
        %v4548 = vunpack.c.l.b16 %v1988
        %v4549 = vunpack.c.l.b16 %v1989
        %v4550 = vunpack.c.l.b16 %v1990
        %v4551 = vunpack.c.l.b16 %v1991
        %v4552 = vunpack.c.l.b16 %v1992
        %v4553 = vunpack.c.l.b16 %v1993
        %v4554 = vunpack.c.l.b16 %v1994
        %v4555 = vunpack.c.l.b16 %v1995
        %v4556 = vunpack.c.l.b16 %v1996
        %v4557 = vunpack.c.l.b16 %v1997
        %v4558 = vunpack.c.l.b16 %v1998
        %v4559 = vunpack.c.l.b16 %v1999
        %v4560 = vunpack.c.l.b16 %v2000
        %v4561 = vunpack.c.l.b16 %v2001
        %v4562 = vunpack.c.l.b16 %v2002
        %v4563 = vunpack.c.l.b16 %v2003
        %v4564 = vunpack.c.l.b16 %v2004
        %v4565 = vunpack.c.l.b16 %v2005
        %v4566 = vunpack.c.l.b16 %v2006
        %v4567 = vunpack.c.l.b16 %v2007
        %v4568 = vunpack.c.l.b16 %v2008
        %v4569 = vunpack.c.l.b16 %v2009
        %v4570 = vunpack.c.l.b16 %v2010
        %v4571 = vunpack.c.l.b16 %v2011
        %v4572 = vunpack.c.l.b16 %v2012
        %v4573 = vunpack.c.l.b16 %v2013
        %v4574 = vunpack.c.l.b16 %v2014
        %v4575 = vunpack.c.l.b16 %v2015
        %v4576 = vunpack.c.l.b16 %v2016
        %v4577 = vunpack.c.l.b16 %v2017
        %v4578 = vunpack.c.l.b16 %v2018
        %v4579 = vunpack.c.l.b16 %v2019
        %v4580 = vunpack.c.l.b16 %v2020
        %v4581 = vunpack.c.l.b16 %v2021
        %v4582 = vunpack.c.l.b16 %v2022
        %v4583 = vunpack.c.l.b16 %v2023
        %v4584 = vunpack.c.l.b16 %v2024
        %v4585 = vunpack.c.l.b16 %v2025
        %v4586 = vunpack.c.l.b16 %v2026
        %v4587 = vunpack.c.l.b16 %v2027
        %v4588 = vunpack.c.l.b16 %v2028
        %v4589 = vunpack.c.l.b16 %v2029
        %v4590 = vunpack.c.l.b16 %v2030
        %v4591 = vunpack.c.l.b16 %v2031
        %v4592 = vunpack.c.l.b16 %v2032
        %v4593 = vunpack.c.l.b16 %v2033
        %v4594 = vunpack.c.l.b16 %v2034
        %v4595 = vunpack.c.l.b16 %v2035
        %v4596 = vunpack.c.l.b16 %v2036
        %v4597 = vunpack.c.l.b16 %v2037
        %v4598 = vunpack.c.l.b16 %v2038
        %v4599 = vunpack.c.l.b16 %v2039
        %v4600 = vunpack.c.l.b16 %v2040
        %v4601 = vunpack.c.l.b16 %v2041
        %v4602 = vunpack.c.l.b16 %v2042
        %v4603 = vunpack.c.l.b16 %v2043
        %v4604 = vunpack.c.l.b16 %v2044
        %v4605 = vunpack.c.l.b16 %v2045
        %v4606 = vunpack.c.l.b16 %v2046
        %v4607 = vunpack.c.l.b16 %v2047
        %v4608 = vunpack.c.l.b16 %v2048
        %v4609 = vunpack.c.l.b16 %v2049
        %v4610 = vunpack.c.l.b16 %v2050
        %v4611 = vunpack.c.l.b16 %v2051
        %v4612 = vunpack.c.l.b16 %v2052
        %v4613 = vunpack.c.l.b16 %v2053
        %v4614 = vunpack.c.l.b16 %v2054
        %v4615 = vunpack.c.l.b16 %v2055
        %v4616 = vunpack.c.l.b16 %v2056
        %v4617 = vunpack.c.l.b16 %v2057
        %v4618 = vunpack.c.l.b16 %v2058
        %v4619 = vunpack.c.l.b16 %v2059
        %v4620 = vunpack.c.l.b16 %v2060
        %v4621 = vunpack.c.l.b16 %v2061
        %v4622 = vunpack.c.l.b16 %v2062
        %v4623 = vunpack.c.l.b16 %v2063
        %v4624 = vpack.c.b16 %v3345, %v3344
        %v4625 = vpack.c.b16 %v3347, %v3346
        %v4626 = vpack.c.b16 %v3349, %v3348
        %v4627 = vpack.c.b16 %v3351, %v3350
        %v4628 = vpack.c.b16 %v3353, %v3352
        %v4629 = vpack.c.b16 %v3355, %v3354
        %v4630 = vpack.c.b16 %v3357, %v3356
        %v4631 = vpack.c.b16 %v3359, %v3358
        %v4632 = vpack.c.b16 %v3361, %v3360
        %v4633 = vpack.c.b16 %v3363, %v3362
        %v4634 = vpack.c.b16 %v3365, %v3364
        %v4635 = vpack.c.b16 %v3367, %v3366
        %v4636 = vpack.c.b16 %v3369, %v3368
        %v4637 = vpack.c.b16 %v3371, %v3370
        %v4638 = vpack.c.b16 %v3373, %v3372
        %v4639 = vpack.c.b16 %v3375, %v3374
        %v4640 = vpack.c.b16 %v3377, %v3376
        %v4641 = vpack.c.b16 %v3379, %v3378
        %v4642 = vpack.c.b16 %v3381, %v3380
        %v4643 = vpack.c.b16 %v3383, %v3382
        %v4644 = vpack.c.b16 %v3385, %v3384
        %v4645 = vpack.c.b16 %v3387, %v3386
        %v4646 = vpack.c.b16 %v3389, %v3388
        %v4647 = vpack.c.b16 %v3391, %v3390
        %v4648 = vpack.c.b16 %v3393, %v3392
        %v4649 = vpack.c.b16 %v3395, %v3394
        %v4650 = vpack.c.b16 %v3397, %v3396
        %v4651 = vpack.c.b16 %v3399, %v3398
        %v4652 = vpack.c.b16 %v3401, %v3400
        %v4653 = vpack.c.b16 %v3403, %v3402
        %v4654 = vpack.c.b16 %v3405, %v3404
        %v4655 = vpack.c.b16 %v3407, %v3406
        %v4656 = vpack.c.b16 %v3409, %v3408
        %v4657 = vpack.c.b16 %v3411, %v3410
        %v4658 = vpack.c.b16 %v3413, %v3412
        %v4659 = vpack.c.b16 %v3415, %v3414
        %v4660 = vpack.c.b16 %v3417, %v3416
        %v4661 = vpack.c.b16 %v3419, %v3418
        %v4662 = vpack.c.b16 %v3421, %v3420
        %v4663 = vpack.c.b16 %v3423, %v3422
        %v4664 = vpack.c.b16 %v3425, %v3424
        %v4665 = vpack.c.b16 %v3427, %v3426
        %v4666 = vpack.c.b16 %v3429, %v3428
        %v4667 = vpack.c.b16 %v3431, %v3430
        %v4668 = vpack.c.b16 %v3433, %v3432
        %v4669 = vpack.c.b16 %v3435, %v3434
        %v4670 = vpack.c.b16 %v3437, %v3436
        %v4671 = vpack.c.b16 %v3439, %v3438
        %v4672 = vpack.c.b16 %v3441, %v3440
        %v4673 = vpack.c.b16 %v3443, %v3442
        %v4674 = vpack.c.b16 %v3445, %v3444
        %v4675 = vpack.c.b16 %v3447, %v3446
        %v4676 = vpack.c.b16 %v3449, %v3448
        %v4677 = vpack.c.b16 %v3451, %v3450
        %v4678 = vpack.c.b16 %v3453, %v3452
        %v4679 = vpack.c.b16 %v3455, %v3454
        %v4680 = vpack.c.b16 %v3457, %v3456
        %v4681 = vpack.c.b16 %v3459, %v3458
        %v4682 = vpack.c.b16 %v3461, %v3460
        %v4683 = vpack.c.b16 %v3463, %v3462
        %v4684 = vpack.c.b16 %v3465, %v3464
        %v4685 = vpack.c.b16 %v3467, %v3466
        %v4686 = vpack.c.b16 %v3469, %v3468
        %v4687 = vpack.c.b16 %v3471, %v3470
        %v4688 = vpack.c.b16 %v3473, %v3472
        %v4689 = vpack.c.b16 %v3475, %v3474
        %v4690 = vpack.c.b16 %v3477, %v3476
        %v4691 = vpack.c.b16 %v3479, %v3478
        %v4692 = vpack.c.b16 %v3481, %v3480
        %v4693 = vpack.c.b16 %v3483, %v3482
        %v4694 = vpack.c.b16 %v3485, %v3484
        %v4695 = vpack.c.b16 %v3487, %v3486
        %v4696 = vpack.c.b16 %v3489, %v3488
        %v4697 = vpack.c.b16 %v3491, %v3490
        %v4698 = vpack.c.b16 %v3493, %v3492
        %v4699 = vpack.c.b16 %v3495, %v3494
        %v4700 = vpack.c.b16 %v3497, %v3496
        %v4701 = vpack.c.b16 %v3499, %v3498
        %v4702 = vpack.c.b16 %v3501, %v3500
        %v4703 = vpack.c.b16 %v3503, %v3502
        %v4704 = vpack.c.b16 %v3505, %v3504
        %v4705 = vpack.c.b16 %v3507, %v3506
        %v4706 = vpack.c.b16 %v3509, %v3508
        %v4707 = vpack.c.b16 %v3511, %v3510
        %v4708 = vpack.c.b16 %v3513, %v3512
        %v4709 = vpack.c.b16 %v3515, %v3514
        %v4710 = vpack.c.b16 %v3517, %v3516
        %v4711 = vpack.c.b16 %v3519, %v3518
        %v4712 = vpack.c.b16 %v3521, %v3520
        %v4713 = vpack.c.b16 %v3523, %v3522
        %v4714 = vpack.c.b16 %v3525, %v3524
        %v4715 = vpack.c.b16 %v3527, %v3526
        %v4716 = vpack.c.b16 %v3529, %v3528
        %v4717 = vpack.c.b16 %v3531, %v3530
        %v4718 = vpack.c.b16 %v3533, %v3532
        %v4719 = vpack.c.b16 %v3535, %v3534
        %v4720 = vpack.c.b16 %v3537, %v3536
        %v4721 = vpack.c.b16 %v3539, %v3538
        %v4722 = vpack.c.b16 %v3541, %v3540
        %v4723 = vpack.c.b16 %v3543, %v3542
        %v4724 = vpack.c.b16 %v3545, %v3544
        %v4725 = vpack.c.b16 %v3547, %v3546
        %v4726 = vpack.c.b16 %v3549, %v3548
        %v4727 = vpack.c.b16 %v3551, %v3550
        %v4728 = vpack.c.b16 %v3553, %v3552
        %v4729 = vpack.c.b16 %v3555, %v3554
        %v4730 = vpack.c.b16 %v3557, %v3556
        %v4731 = vpack.c.b16 %v3559, %v3558
        %v4732 = vpack.c.b16 %v3561, %v3560
        %v4733 = vpack.c.b16 %v3563, %v3562
        %v4734 = vpack.c.b16 %v3565, %v3564
        %v4735 = vpack.c.b16 %v3567, %v3566
        %v4736 = vpack.c.b16 %v3569, %v3568
        %v4737 = vpack.c.b16 %v3571, %v3570
        %v4738 = vpack.c.b16 %v3573, %v3572
        %v4739 = vpack.c.b16 %v3575, %v3574
        %v4740 = vpack.c.b16 %v3577, %v3576
        %v4741 = vpack.c.b16 %v3579, %v3578
        %v4742 = vpack.c.b16 %v3581, %v3580
        %v4743 = vpack.c.b16 %v3583, %v3582
        %v4744 = vpack.c.b16 %v3585, %v3584
        %v4745 = vpack.c.b16 %v3587, %v3586
        %v4746 = vpack.c.b16 %v3589, %v3588
        %v4747 = vpack.c.b16 %v3591, %v3590
        %v4748 = vpack.c.b16 %v3593, %v3592
        %v4749 = vpack.c.b16 %v3595, %v3594
        %v4750 = vpack.c.b16 %v3597, %v3596
        %v4751 = vpack.c.b16 %v3599, %v3598
        %v4752 = vpack.c.b16 %v3601, %v3600
        %v4753 = vpack.c.b16 %v3603, %v3602
        %v4754 = vpack.c.b16 %v3605, %v3604
        %v4755 = vpack.c.b16 %v3607, %v3606
        %v4756 = vpack.c.b16 %v3609, %v3608
        %v4757 = vpack.c.b16 %v3611, %v3610
        %v4758 = vpack.c.b16 %v3613, %v3612
        %v4759 = vpack.c.b16 %v3615, %v3614
        %v4760 = vpack.c.b16 %v3617, %v3616
        %v4761 = vpack.c.b16 %v3619, %v3618
        %v4762 = vpack.c.b16 %v3621, %v3620
        %v4763 = vpack.c.b16 %v3623, %v3622
        %v4764 = vpack.c.b16 %v3625, %v3624
        %v4765 = vpack.c.b16 %v3627, %v3626
        %v4766 = vpack.c.b16 %v3629, %v3628
        %v4767 = vpack.c.b16 %v3631, %v3630
        %v4768 = vpack.c.b16 %v3633, %v3632
        %v4769 = vpack.c.b16 %v3635, %v3634
        %v4770 = vpack.c.b16 %v3637, %v3636
        %v4771 = vpack.c.b16 %v3639, %v3638
        %v4772 = vpack.c.b16 %v3641, %v3640
        %v4773 = vpack.c.b16 %v3643, %v3642
        %v4774 = vpack.c.b16 %v3645, %v3644
        %v4775 = vpack.c.b16 %v3647, %v3646
        %v4776 = vpack.c.b16 %v3649, %v3648
        %v4777 = vpack.c.b16 %v3651, %v3650
        %v4778 = vpack.c.b16 %v3653, %v3652
        %v4779 = vpack.c.b16 %v3655, %v3654
        %v4780 = vpack.c.b16 %v3657, %v3656
        %v4781 = vpack.c.b16 %v3659, %v3658
        %v4782 = vpack.c.b16 %v3661, %v3660
        %v4783 = vpack.c.b16 %v3663, %v3662
        %v4784 = vpack.c.b16 %v3665, %v3664
        %v4785 = vpack.c.b16 %v3667, %v3666
        %v4786 = vpack.c.b16 %v3669, %v3668
        %v4787 = vpack.c.b16 %v3671, %v3670
        %v4788 = vpack.c.b16 %v3673, %v3672
        %v4789 = vpack.c.b16 %v3675, %v3674
        %v4790 = vpack.c.b16 %v3677, %v3676
        %v4791 = vpack.c.b16 %v3679, %v3678
        %v4792 = vpack.c.b16 %v3681, %v3680
        %v4793 = vpack.c.b16 %v3683, %v3682
        %v4794 = vpack.c.b16 %v3685, %v3684
        %v4795 = vpack.c.b16 %v3687, %v3686
        %v4796 = vpack.c.b16 %v3689, %v3688
        %v4797 = vpack.c.b16 %v3691, %v3690
        %v4798 = vpack.c.b16 %v3693, %v3692
        %v4799 = vpack.c.b16 %v3695, %v3694
        %v4800 = vpack.c.b16 %v3697, %v3696
        %v4801 = vpack.c.b16 %v3699, %v3698
        %v4802 = vpack.c.b16 %v3701, %v3700
        %v4803 = vpack.c.b16 %v3703, %v3702
        %v4804 = vpack.c.b16 %v3705, %v3704
        %v4805 = vpack.c.b16 %v3707, %v3706
        %v4806 = vpack.c.b16 %v3709, %v3708
        %v4807 = vpack.c.b16 %v3711, %v3710
        %v4808 = vpack.c.b16 %v3713, %v3712
        %v4809 = vpack.c.b16 %v3715, %v3714
        %v4810 = vpack.c.b16 %v3717, %v3716
        %v4811 = vpack.c.b16 %v3719, %v3718
        %v4812 = vpack.c.b16 %v3721, %v3720
        %v4813 = vpack.c.b16 %v3723, %v3722
        %v4814 = vpack.c.b16 %v3725, %v3724
        %v4815 = vpack.c.b16 %v3727, %v3726
        %v4816 = vpack.c.b16 %v3729, %v3728
        %v4817 = vpack.c.b16 %v3731, %v3730
        %v4818 = vpack.c.b16 %v3733, %v3732
        %v4819 = vpack.c.b16 %v3735, %v3734
        %v4820 = vpack.c.b16 %v3737, %v3736
        %v4821 = vpack.c.b16 %v3739, %v3738
        %v4822 = vpack.c.b16 %v3741, %v3740
        %v4823 = vpack.c.b16 %v3743, %v3742
        %v4824 = vpack.c.b16 %v3745, %v3744
        %v4825 = vpack.c.b16 %v3747, %v3746
        %v4826 = vpack.c.b16 %v3749, %v3748
        %v4827 = vpack.c.b16 %v3751, %v3750
        %v4828 = vpack.c.b16 %v3753, %v3752
        %v4829 = vpack.c.b16 %v3755, %v3754
        %v4830 = vpack.c.b16 %v3757, %v3756
        %v4831 = vpack.c.b16 %v3759, %v3758
        %v4832 = vpack.c.b16 %v3761, %v3760
        %v4833 = vpack.c.b16 %v3763, %v3762
        %v4834 = vpack.c.b16 %v3765, %v3764
        %v4835 = vpack.c.b16 %v3767, %v3766
        %v4836 = vpack.c.b16 %v3769, %v3768
        %v4837 = vpack.c.b16 %v3771, %v3770
        %v4838 = vpack.c.b16 %v3773, %v3772
        %v4839 = vpack.c.b16 %v3775, %v3774
        %v4840 = vpack.c.b16 %v3777, %v3776
        %v4841 = vpack.c.b16 %v3779, %v3778
        %v4842 = vpack.c.b16 %v3781, %v3780
        %v4843 = vpack.c.b16 %v3783, %v3782
        %v4844 = vpack.c.b16 %v3785, %v3784
        %v4845 = vpack.c.b16 %v3787, %v3786
        %v4846 = vpack.c.b16 %v3789, %v3788
        %v4847 = vpack.c.b16 %v3791, %v3790
        %v4848 = vpack.c.b16 %v3793, %v3792
        %v4849 = vpack.c.b16 %v3795, %v3794
        %v4850 = vpack.c.b16 %v3797, %v3796
        %v4851 = vpack.c.b16 %v3799, %v3798
        %v4852 = vpack.c.b16 %v3801, %v3800
        %v4853 = vpack.c.b16 %v3803, %v3802
        %v4854 = vpack.c.b16 %v3805, %v3804
        %v4855 = vpack.c.b16 %v3807, %v3806
        %v4856 = vpack.c.b16 %v3809, %v3808
        %v4857 = vpack.c.b16 %v3811, %v3810
        %v4858 = vpack.c.b16 %v3813, %v3812
        %v4859 = vpack.c.b16 %v3815, %v3814
        %v4860 = vpack.c.b16 %v3817, %v3816
        %v4861 = vpack.c.b16 %v3819, %v3818
        %v4862 = vpack.c.b16 %v3821, %v3820
        %v4863 = vpack.c.b16 %v3823, %v3822
        %v4864 = vpack.c.b16 %v3825, %v3824
        %v4865 = vpack.c.b16 %v3827, %v3826
        %v4866 = vpack.c.b16 %v3829, %v3828
        %v4867 = vpack.c.b16 %v3831, %v3830
        %v4868 = vpack.c.b16 %v3833, %v3832
        %v4869 = vpack.c.b16 %v3835, %v3834
        %v4870 = vpack.c.b16 %v3837, %v3836
        %v4871 = vpack.c.b16 %v3839, %v3838
        %v4872 = vpack.c.b16 %v3841, %v3840
        %v4873 = vpack.c.b16 %v3843, %v3842
        %v4874 = vpack.c.b16 %v3845, %v3844
        %v4875 = vpack.c.b16 %v3847, %v3846
        %v4876 = vpack.c.b16 %v3849, %v3848
        %v4877 = vpack.c.b16 %v3851, %v3850
        %v4878 = vpack.c.b16 %v3853, %v3852
        %v4879 = vpack.c.b16 %v3855, %v3854
        %v4880 = vpack.c.b16 %v3857, %v3856
        %v4881 = vpack.c.b16 %v3859, %v3858
        %v4882 = vpack.c.b16 %v3861, %v3860
        %v4883 = vpack.c.b16 %v3863, %v3862
        %v4884 = vpack.c.b16 %v3865, %v3864
        %v4885 = vpack.c.b16 %v3867, %v3866
        %v4886 = vpack.c.b16 %v3869, %v3868
        %v4887 = vpack.c.b16 %v3871, %v3870
        %v4888 = vpack.c.b16 %v3873, %v3872
        %v4889 = vpack.c.b16 %v3875, %v3874
        %v4890 = vpack.c.b16 %v3877, %v3876
        %v4891 = vpack.c.b16 %v3879, %v3878
        %v4892 = vpack.c.b16 %v3881, %v3880
        %v4893 = vpack.c.b16 %v3883, %v3882
        %v4894 = vpack.c.b16 %v3885, %v3884
        %v4895 = vpack.c.b16 %v3887, %v3886
        %v4896 = vpack.c.b16 %v3889, %v3888
        %v4897 = vpack.c.b16 %v3891, %v3890
        %v4898 = vpack.c.b16 %v3893, %v3892
        %v4899 = vpack.c.b16 %v3895, %v3894
        %v4900 = vpack.c.b16 %v3897, %v3896
        %v4901 = vpack.c.b16 %v3899, %v3898
        %v4902 = vpack.c.b16 %v3901, %v3900
        %v4903 = vpack.c.b16 %v3903, %v3902
        %v4904 = vpack.c.b16 %v3905, %v3904
        %v4905 = vpack.c.b16 %v3907, %v3906
        %v4906 = vpack.c.b16 %v3909, %v3908
        %v4907 = vpack.c.b16 %v3911, %v3910
        %v4908 = vpack.c.b16 %v3913, %v3912
        %v4909 = vpack.c.b16 %v3915, %v3914
        %v4910 = vpack.c.b16 %v3917, %v3916
        %v4911 = vpack.c.b16 %v3919, %v3918
        %v4912 = vpack.c.b16 %v3921, %v3920
        %v4913 = vpack.c.b16 %v3923, %v3922
        %v4914 = vpack.c.b16 %v3925, %v3924
        %v4915 = vpack.c.b16 %v3927, %v3926
        %v4916 = vpack.c.b16 %v3929, %v3928
        %v4917 = vpack.c.b16 %v3931, %v3930
        %v4918 = vpack.c.b16 %v3933, %v3932
        %v4919 = vpack.c.b16 %v3935, %v3934
        %v4920 = vpack.c.b16 %v3937, %v3936
        %v4921 = vpack.c.b16 %v3939, %v3938
        %v4922 = vpack.c.b16 %v3941, %v3940
        %v4923 = vpack.c.b16 %v3943, %v3942
        %v4924 = vpack.c.b16 %v3945, %v3944
        %v4925 = vpack.c.b16 %v3947, %v3946
        %v4926 = vpack.c.b16 %v3949, %v3948
        %v4927 = vpack.c.b16 %v3951, %v3950
        %v4928 = vpack.c.b16 %v3953, %v3952
        %v4929 = vpack.c.b16 %v3955, %v3954
        %v4930 = vpack.c.b16 %v3957, %v3956
        %v4931 = vpack.c.b16 %v3959, %v3958
        %v4932 = vpack.c.b16 %v3961, %v3960
        %v4933 = vpack.c.b16 %v3963, %v3962
        %v4934 = vpack.c.b16 %v3965, %v3964
        %v4935 = vpack.c.b16 %v3967, %v3966
        %v4936 = vpack.c.b16 %v3969, %v3968
        %v4937 = vpack.c.b16 %v3971, %v3970
        %v4938 = vpack.c.b16 %v3973, %v3972
        %v4939 = vpack.c.b16 %v3975, %v3974
        %v4940 = vpack.c.b16 %v3977, %v3976
        %v4941 = vpack.c.b16 %v3979, %v3978
        %v4942 = vpack.c.b16 %v3981, %v3980
        %v4943 = vpack.c.b16 %v3983, %v3982
        %v4944 = vpack.c.b16 %v3985, %v3984
        %v4945 = vpack.c.b16 %v3987, %v3986
        %v4946 = vpack.c.b16 %v3989, %v3988
        %v4947 = vpack.c.b16 %v3991, %v3990
        %v4948 = vpack.c.b16 %v3993, %v3992
        %v4949 = vpack.c.b16 %v3995, %v3994
        %v4950 = vpack.c.b16 %v3997, %v3996
        %v4951 = vpack.c.b16 %v3999, %v3998
        %v4952 = vpack.c.b16 %v4001, %v4000
        %v4953 = vpack.c.b16 %v4003, %v4002
        %v4954 = vpack.c.b16 %v4005, %v4004
        %v4955 = vpack.c.b16 %v4007, %v4006
        %v4956 = vpack.c.b16 %v4009, %v4008
        %v4957 = vpack.c.b16 %v4011, %v4010
        %v4958 = vpack.c.b16 %v4013, %v4012
        %v4959 = vpack.c.b16 %v4015, %v4014
        %v4960 = vpack.c.b16 %v4017, %v4016
        %v4961 = vpack.c.b16 %v4019, %v4018
        %v4962 = vpack.c.b16 %v4021, %v4020
        %v4963 = vpack.c.b16 %v4023, %v4022
        %v4964 = vpack.c.b16 %v4025, %v4024
        %v4965 = vpack.c.b16 %v4027, %v4026
        %v4966 = vpack.c.b16 %v4029, %v4028
        %v4967 = vpack.c.b16 %v4031, %v4030
        %v4968 = vpack.c.b16 %v4033, %v4032
        %v4969 = vpack.c.b16 %v4035, %v4034
        %v4970 = vpack.c.b16 %v4037, %v4036
        %v4971 = vpack.c.b16 %v4039, %v4038
        %v4972 = vpack.c.b16 %v4041, %v4040
        %v4973 = vpack.c.b16 %v4043, %v4042
        %v4974 = vpack.c.b16 %v4045, %v4044
        %v4975 = vpack.c.b16 %v4047, %v4046
        %v4976 = vpack.c.b16 %v4049, %v4048
        %v4977 = vpack.c.b16 %v4051, %v4050
        %v4978 = vpack.c.b16 %v4053, %v4052
        %v4979 = vpack.c.b16 %v4055, %v4054
        %v4980 = vpack.c.b16 %v4057, %v4056
        %v4981 = vpack.c.b16 %v4059, %v4058
        %v4982 = vpack.c.b16 %v4061, %v4060
        %v4983 = vpack.c.b16 %v4063, %v4062
        %v4984 = vpack.c.b16 %v4065, %v4064
        %v4985 = vpack.c.b16 %v4067, %v4066
        %v4986 = vpack.c.b16 %v4069, %v4068
        %v4987 = vpack.c.b16 %v4071, %v4070
        %v4988 = vpack.c.b16 %v4073, %v4072
        %v4989 = vpack.c.b16 %v4075, %v4074
        %v4990 = vpack.c.b16 %v4077, %v4076
        %v4991 = vpack.c.b16 %v4079, %v4078
        %v4992 = vpack.c.b16 %v4081, %v4080
        %v4993 = vpack.c.b16 %v4083, %v4082
        %v4994 = vpack.c.b16 %v4085, %v4084
        %v4995 = vpack.c.b16 %v4087, %v4086
        %v4996 = vpack.c.b16 %v4089, %v4088
        %v4997 = vpack.c.b16 %v4091, %v4090
        %v4998 = vpack.c.b16 %v4093, %v4092
        %v4999 = vpack.c.b16 %v4095, %v4094
        %v5000 = vpack.c.b16 %v4097, %v4096
        %v5001 = vpack.c.b16 %v4099, %v4098
        %v5002 = vpack.c.b16 %v4101, %v4100
        %v5003 = vpack.c.b16 %v4103, %v4102
        %v5004 = vpack.c.b16 %v4105, %v4104
        %v5005 = vpack.c.b16 %v4107, %v4106
        %v5006 = vpack.c.b16 %v4109, %v4108
        %v5007 = vpack.c.b16 %v4111, %v4110
        %v5008 = vpack.c.b16 %v4113, %v4112
        %v5009 = vpack.c.b16 %v4115, %v4114
        %v5010 = vpack.c.b16 %v4117, %v4116
        %v5011 = vpack.c.b16 %v4119, %v4118
        %v5012 = vpack.c.b16 %v4121, %v4120
        %v5013 = vpack.c.b16 %v4123, %v4122
        %v5014 = vpack.c.b16 %v4125, %v4124
        %v5015 = vpack.c.b16 %v4127, %v4126
        %v5016 = vpack.c.b16 %v4129, %v4128
        %v5017 = vpack.c.b16 %v4131, %v4130
        %v5018 = vpack.c.b16 %v4133, %v4132
        %v5019 = vpack.c.b16 %v4135, %v4134
        %v5020 = vpack.c.b16 %v4137, %v4136
        %v5021 = vpack.c.b16 %v4139, %v4138
        %v5022 = vpack.c.b16 %v4141, %v4140
        %v5023 = vpack.c.b16 %v4143, %v4142
        %v5024 = vpack.c.b16 %v4145, %v4144
        %v5025 = vpack.c.b16 %v4147, %v4146
        %v5026 = vpack.c.b16 %v4149, %v4148
        %v5027 = vpack.c.b16 %v4151, %v4150
        %v5028 = vpack.c.b16 %v4153, %v4152
        %v5029 = vpack.c.b16 %v4155, %v4154
        %v5030 = vpack.c.b16 %v4157, %v4156
        %v5031 = vpack.c.b16 %v4159, %v4158
        %v5032 = vpack.c.b16 %v4161, %v4160
        %v5033 = vpack.c.b16 %v4163, %v4162
        %v5034 = vpack.c.b16 %v4165, %v4164
        %v5035 = vpack.c.b16 %v4167, %v4166
        %v5036 = vpack.c.b16 %v4169, %v4168
        %v5037 = vpack.c.b16 %v4171, %v4170
        %v5038 = vpack.c.b16 %v4173, %v4172
        %v5039 = vpack.c.b16 %v4175, %v4174
        %v5040 = vpack.c.b16 %v4177, %v4176
        %v5041 = vpack.c.b16 %v4179, %v4178
        %v5042 = vpack.c.b16 %v4181, %v4180
        %v5043 = vpack.c.b16 %v4183, %v4182
        %v5044 = vpack.c.b16 %v4185, %v4184
        %v5045 = vpack.c.b16 %v4187, %v4186
        %v5046 = vpack.c.b16 %v4189, %v4188
        %v5047 = vpack.c.b16 %v4191, %v4190
        %v5048 = vpack.c.b16 %v4193, %v4192
        %v5049 = vpack.c.b16 %v4195, %v4194
        %v5050 = vpack.c.b16 %v4197, %v4196
        %v5051 = vpack.c.b16 %v4199, %v4198
        %v5052 = vpack.c.b16 %v4201, %v4200
        %v5053 = vpack.c.b16 %v4203, %v4202
        %v5054 = vpack.c.b16 %v4205, %v4204
        %v5055 = vpack.c.b16 %v4207, %v4206
        %v5056 = vpack.c.b16 %v4209, %v4208
        %v5057 = vpack.c.b16 %v4211, %v4210
        %v5058 = vpack.c.b16 %v4213, %v4212
        %v5059 = vpack.c.b16 %v4215, %v4214
        %v5060 = vpack.c.b16 %v4217, %v4216
        %v5061 = vpack.c.b16 %v4219, %v4218
        %v5062 = vpack.c.b16 %v4221, %v4220
        %v5063 = vpack.c.b16 %v4223, %v4222
        %v5064 = vpack.c.b16 %v4225, %v4224
        %v5065 = vpack.c.b16 %v4227, %v4226
        %v5066 = vpack.c.b16 %v4229, %v4228
        %v5067 = vpack.c.b16 %v4231, %v4230
        %v5068 = vpack.c.b16 %v4233, %v4232
        %v5069 = vpack.c.b16 %v4235, %v4234
        %v5070 = vpack.c.b16 %v4237, %v4236
        %v5071 = vpack.c.b16 %v4239, %v4238
        %v5072 = vpack.c.b16 %v4241, %v4240
        %v5073 = vpack.c.b16 %v4243, %v4242
        %v5074 = vpack.c.b16 %v4245, %v4244
        %v5075 = vpack.c.b16 %v4247, %v4246
        %v5076 = vpack.c.b16 %v4249, %v4248
        %v5077 = vpack.c.b16 %v4251, %v4250
        %v5078 = vpack.c.b16 %v4253, %v4252
        %v5079 = vpack.c.b16 %v4255, %v4254
        %v5080 = vpack.c.b16 %v4257, %v4256
        %v5081 = vpack.c.b16 %v4259, %v4258
        %v5082 = vpack.c.b16 %v4261, %v4260
        %v5083 = vpack.c.b16 %v4263, %v4262
        %v5084 = vpack.c.b16 %v4265, %v4264
        %v5085 = vpack.c.b16 %v4267, %v4266
        %v5086 = vpack.c.b16 %v4269, %v4268
        %v5087 = vpack.c.b16 %v4271, %v4270
        %v5088 = vpack.c.b16 %v4273, %v4272
        %v5089 = vpack.c.b16 %v4275, %v4274
        %v5090 = vpack.c.b16 %v4277, %v4276
        %v5091 = vpack.c.b16 %v4279, %v4278
        %v5092 = vpack.c.b16 %v4281, %v4280
        %v5093 = vpack.c.b16 %v4283, %v4282
        %v5094 = vpack.c.b16 %v4285, %v4284
        %v5095 = vpack.c.b16 %v4287, %v4286
        %v5096 = vpack.c.b16 %v4289, %v4288
        %v5097 = vpack.c.b16 %v4291, %v4290
        %v5098 = vpack.c.b16 %v4293, %v4292
        %v5099 = vpack.c.b16 %v4295, %v4294
        %v5100 = vpack.c.b16 %v4297, %v4296
        %v5101 = vpack.c.b16 %v4299, %v4298
        %v5102 = vpack.c.b16 %v4301, %v4300
        %v5103 = vpack.c.b16 %v4303, %v4302
        %v5104 = vpack.c.b16 %v4305, %v4304
        %v5105 = vpack.c.b16 %v4307, %v4306
        %v5106 = vpack.c.b16 %v4309, %v4308
        %v5107 = vpack.c.b16 %v4311, %v4310
        %v5108 = vpack.c.b16 %v4313, %v4312
        %v5109 = vpack.c.b16 %v4315, %v4314
        %v5110 = vpack.c.b16 %v4317, %v4316
        %v5111 = vpack.c.b16 %v4319, %v4318
        %v5112 = vpack.c.b16 %v4321, %v4320
        %v5113 = vpack.c.b16 %v4323, %v4322
        %v5114 = vpack.c.b16 %v4325, %v4324
        %v5115 = vpack.c.b16 %v4327, %v4326
        %v5116 = vpack.c.b16 %v4329, %v4328
        %v5117 = vpack.c.b16 %v4331, %v4330
        %v5118 = vpack.c.b16 %v4333, %v4332
        %v5119 = vpack.c.b16 %v4335, %v4334
        %v5120 = vpack.c.b16 %v4337, %v4336
        %v5121 = vpack.c.b16 %v4339, %v4338
        %v5122 = vpack.c.b16 %v4341, %v4340
        %v5123 = vpack.c.b16 %v4343, %v4342
        %v5124 = vpack.c.b16 %v4345, %v4344
        %v5125 = vpack.c.b16 %v4347, %v4346
        %v5126 = vpack.c.b16 %v4349, %v4348
        %v5127 = vpack.c.b16 %v4351, %v4350
        %v5128 = vpack.c.b16 %v4353, %v4352
        %v5129 = vpack.c.b16 %v4355, %v4354
        %v5130 = vpack.c.b16 %v4357, %v4356
        %v5131 = vpack.c.b16 %v4359, %v4358
        %v5132 = vpack.c.b16 %v4361, %v4360
        %v5133 = vpack.c.b16 %v4363, %v4362
        %v5134 = vpack.c.b16 %v4365, %v4364
        %v5135 = vpack.c.b16 %v4367, %v4366
        %v5136 = vpack.c.b16 %v4369, %v4368
        %v5137 = vpack.c.b16 %v4371, %v4370
        %v5138 = vpack.c.b16 %v4373, %v4372
        %v5139 = vpack.c.b16 %v4375, %v4374
        %v5140 = vpack.c.b16 %v4377, %v4376
        %v5141 = vpack.c.b16 %v4379, %v4378
        %v5142 = vpack.c.b16 %v4381, %v4380
        %v5143 = vpack.c.b16 %v4383, %v4382
        %v5144 = vpack.c.b16 %v4385, %v4384
        %v5145 = vpack.c.b16 %v4387, %v4386
        %v5146 = vpack.c.b16 %v4389, %v4388
        %v5147 = vpack.c.b16 %v4391, %v4390
        %v5148 = vpack.c.b16 %v4393, %v4392
        %v5149 = vpack.c.b16 %v4395, %v4394
        %v5150 = vpack.c.b16 %v4397, %v4396
        %v5151 = vpack.c.b16 %v4399, %v4398
        %v5152 = vpack.c.b16 %v4401, %v4400
        %v5153 = vpack.c.b16 %v4403, %v4402
        %v5154 = vpack.c.b16 %v4405, %v4404
        %v5155 = vpack.c.b16 %v4407, %v4406
        %v5156 = vpack.c.b16 %v4409, %v4408
        %v5157 = vpack.c.b16 %v4411, %v4410
        %v5158 = vpack.c.b16 %v4413, %v4412
        %v5159 = vpack.c.b16 %v4415, %v4414
        %v5160 = vpack.c.b16 %v4417, %v4416
        %v5161 = vpack.c.b16 %v4419, %v4418
        %v5162 = vpack.c.b16 %v4421, %v4420
        %v5163 = vpack.c.b16 %v4423, %v4422
        %v5164 = vpack.c.b16 %v4425, %v4424
        %v5165 = vpack.c.b16 %v4427, %v4426
        %v5166 = vpack.c.b16 %v4429, %v4428
        %v5167 = vpack.c.b16 %v4431, %v4430
        %v5168 = vpack.c.b16 %v4433, %v4432
        %v5169 = vpack.c.b16 %v4435, %v4434
        %v5170 = vpack.c.b16 %v4437, %v4436
        %v5171 = vpack.c.b16 %v4439, %v4438
        %v5172 = vpack.c.b16 %v4441, %v4440
        %v5173 = vpack.c.b16 %v4443, %v4442
        %v5174 = vpack.c.b16 %v4445, %v4444
        %v5175 = vpack.c.b16 %v4447, %v4446
        %v5176 = vpack.c.b16 %v4449, %v4448
        %v5177 = vpack.c.b16 %v4451, %v4450
        %v5178 = vpack.c.b16 %v4453, %v4452
        %v5179 = vpack.c.b16 %v4455, %v4454
        %v5180 = vpack.c.b16 %v4457, %v4456
        %v5181 = vpack.c.b16 %v4459, %v4458
        %v5182 = vpack.c.b16 %v4461, %v4460
        %v5183 = vpack.c.b16 %v4463, %v4462
        %v5184 = vpack.c.b16 %v4465, %v4464
        %v5185 = vpack.c.b16 %v4467, %v4466
        %v5186 = vpack.c.b16 %v4469, %v4468
        %v5187 = vpack.c.b16 %v4471, %v4470
        %v5188 = vpack.c.b16 %v4473, %v4472
        %v5189 = vpack.c.b16 %v4475, %v4474
        %v5190 = vpack.c.b16 %v4477, %v4476
        %v5191 = vpack.c.b16 %v4479, %v4478
        %v5192 = vpack.c.b16 %v4481, %v4480
        %v5193 = vpack.c.b16 %v4483, %v4482
        %v5194 = vpack.c.b16 %v4485, %v4484
        %v5195 = vpack.c.b16 %v4487, %v4486
        %v5196 = vpack.c.b16 %v4489, %v4488
        %v5197 = vpack.c.b16 %v4491, %v4490
        %v5198 = vpack.c.b16 %v4493, %v4492
        %v5199 = vpack.c.b16 %v4495, %v4494
        %v5200 = vpack.c.b16 %v4497, %v4496
        %v5201 = vpack.c.b16 %v4499, %v4498
        %v5202 = vpack.c.b16 %v4501, %v4500
        %v5203 = vpack.c.b16 %v4503, %v4502
        %v5204 = vpack.c.b16 %v4505, %v4504
        %v5205 = vpack.c.b16 %v4507, %v4506
        %v5206 = vpack.c.b16 %v4509, %v4508
        %v5207 = vpack.c.b16 %v4511, %v4510
        %v5208 = vpack.c.b16 %v4513, %v4512
        %v5209 = vpack.c.b16 %v4515, %v4514
        %v5210 = vpack.c.b16 %v4517, %v4516
        %v5211 = vpack.c.b16 %v4519, %v4518
        %v5212 = vpack.c.b16 %v4521, %v4520
        %v5213 = vpack.c.b16 %v4523, %v4522
        %v5214 = vpack.c.b16 %v4525, %v4524
        %v5215 = vpack.c.b16 %v4527, %v4526
        %v5216 = vpack.c.b16 %v4529, %v4528
        %v5217 = vpack.c.b16 %v4531, %v4530
        %v5218 = vpack.c.b16 %v4533, %v4532
        %v5219 = vpack.c.b16 %v4535, %v4534
        %v5220 = vpack.c.b16 %v4537, %v4536
        %v5221 = vpack.c.b16 %v4539, %v4538
        %v5222 = vpack.c.b16 %v4541, %v4540
        %v5223 = vpack.c.b16 %v4543, %v4542
        %v5224 = vpack.c.b16 %v4545, %v4544
        %v5225 = vpack.c.b16 %v4547, %v4546
        %v5226 = vpack.c.b16 %v4549, %v4548
        %v5227 = vpack.c.b16 %v4551, %v4550
        %v5228 = vpack.c.b16 %v4553, %v4552
        %v5229 = vpack.c.b16 %v4555, %v4554
        %v5230 = vpack.c.b16 %v4557, %v4556
        %v5231 = vpack.c.b16 %v4559, %v4558
        %v5232 = vpack.c.b16 %v4561, %v4560
        %v5233 = vpack.c.b16 %v4563, %v4562
        %v5234 = vpack.c.b16 %v4565, %v4564
        %v5235 = vpack.c.b16 %v4567, %v4566
        %v5236 = vpack.c.b16 %v4569, %v4568
        %v5237 = vpack.c.b16 %v4571, %v4570
        %v5238 = vpack.c.b16 %v4573, %v4572
        %v5239 = vpack.c.b16 %v4575, %v4574
        %v5240 = vpack.c.b16 %v4577, %v4576
        %v5241 = vpack.c.b16 %v4579, %v4578
        %v5242 = vpack.c.b16 %v4581, %v4580
        %v5243 = vpack.c.b16 %v4583, %v4582
        %v5244 = vpack.c.b16 %v4585, %v4584
        %v5245 = vpack.c.b16 %v4587, %v4586
        %v5246 = vpack.c.b16 %v4589, %v4588
        %v5247 = vpack.c.b16 %v4591, %v4590
        %v5248 = vpack.c.b16 %v4593, %v4592
        %v5249 = vpack.c.b16 %v4595, %v4594
        %v5250 = vpack.c.b16 %v4597, %v4596
        %v5251 = vpack.c.b16 %v4599, %v4598
        %v5252 = vpack.c.b16 %v4601, %v4600
        %v5253 = vpack.c.b16 %v4603, %v4602
        %v5254 = vpack.c.b16 %v4605, %v4604
        %v5255 = vpack.c.b16 %v4607, %v4606
        %v5256 = vpack.c.b16 %v4609, %v4608
        %v5257 = vpack.c.b16 %v4611, %v4610
        %v5258 = vpack.c.b16 %v4613, %v4612
        %v5259 = vpack.c.b16 %v4615, %v4614
        %v5260 = vpack.c.b16 %v4617, %v4616
        %v5261 = vpack.c.b16 %v4619, %v4618
        %v5262 = vpack.c.b16 %v4621, %v4620
        %v5263 = vpack.c.b16 %v4623, %v4622
        %5904 = vmatprep.subr.bf16.mxu0 0
        %5905 = vmatpush1.bf16.msra.mxu0 %v4624
        %5906 = vmatprep.subr.bf16.mxu0 0
        %5907 = vmatpush1.bf16.msra.mxu0 %v4625
        %5908 = vmatprep.subr.bf16.mxu0 0
        %5909 = vmatpush1.bf16.msra.mxu0 %v4626
        %5910 = vmatprep.subr.bf16.mxu0 0
        %5911 = vmatpush1.bf16.msra.mxu0 %v4627
        %5912 = vmatprep.subr.bf16.mxu0 0
        %5913 = vmatpush1.bf16.msra.mxu0 %v4628
        %5914 = vmatprep.subr.bf16.mxu0 0
        %5915 = vmatpush1.bf16.msra.mxu0 %v4629
        %5916 = vmatprep.subr.bf16.mxu0 0
        %5917 = vmatpush1.bf16.msra.mxu0 %v4630
        %5918 = vmatprep.subr.bf16.mxu0 0
        %5919 = vmatpush1.bf16.msra.mxu0 %v4631
        %5920 = vmatprep.subr.bf16.mxu0 0
        %5921 = vmatpush1.bf16.msra.mxu0 %v4632
        %5922 = vmatprep.subr.bf16.mxu0 0
        %5923 = vmatpush1.bf16.msra.mxu0 %v4633
        %5924 = vmatprep.subr.bf16.mxu0 0
        %5925 = vmatpush1.bf16.msra.mxu0 %v4634
        %5926 = vmatprep.subr.bf16.mxu0 0
        %5927 = vmatpush1.bf16.msra.mxu0 %v4635
        %5928 = vmatprep.subr.bf16.mxu0 0
        %5929 = vmatpush1.bf16.msra.mxu0 %v4636
        %5930 = vmatprep.subr.bf16.mxu0 0
        %5931 = vmatpush1.bf16.msra.mxu0 %v4637
        %5932 = vmatprep.subr.bf16.mxu0 0
        %5933 = vmatpush1.bf16.msra.mxu0 %v4638
        %5934 = vmatprep.subr.bf16.mxu0 0
        %5935 = vmatpush1.bf16.msra.mxu0 %v4639
        %5936 = vmatprep.mubr.bf16.mxu0 %v704
        %5937 = vmatmul.mubr.bf16.gmra.mrb[0].mxu0 %v703
        %v5938 = vpop.f32.mrb[0].mxu0
        %v5939 = vadd.f32 0.0, %v5938
        %v5940 = vpop.f32.mrb[0].mxu0
        %v5941 = vpop.f32.mrb[0].mxu0
        %v5942 = vpop.f32.mrb[0].mxu0
        %5943 = vdwg.mxu0
        %5944 = vmatprep.subr.bf16.mxu0 0
        %5945 = vmatpush1.bf16.msra.mxu0 %v4640
        %5946 = vmatprep.subr.bf16.mxu0 0
        %5947 = vmatpush1.bf16.msra.mxu0 %v4641
        %5948 = vmatprep.subr.bf16.mxu0 0
        %5949 = vmatpush1.bf16.msra.mxu0 %v4642
        %5950 = vmatprep.subr.bf16.mxu0 0
        %5951 = vmatpush1.bf16.msra.mxu0 %v4643
        %5952 = vmatprep.subr.bf16.mxu0 0
        %5953 = vmatpush1.bf16.msra.mxu0 %v4644
        %5954 = vmatprep.subr.bf16.mxu0 0
        %5955 = vmatpush1.bf16.msra.mxu0 %v4645
        %5956 = vmatprep.subr.bf16.mxu0 0
        %5957 = vmatpush1.bf16.msra.mxu0 %v4646
        %5958 = vmatprep.subr.bf16.mxu0 0
        %5959 = vmatpush1.bf16.msra.mxu0 %v4647
        %5960 = vmatprep.subr.bf16.mxu0 0
        %5961 = vmatpush1.bf16.msra.mxu0 %v4648
        %5962 = vmatprep.subr.bf16.mxu0 0
        %5963 = vmatpush1.bf16.msra.mxu0 %v4649
        %5964 = vmatprep.subr.bf16.mxu0 0
        %5965 = vmatpush1.bf16.msra.mxu0 %v4650
        %5966 = vmatprep.subr.bf16.mxu0 0
        %5967 = vmatpush1.bf16.msra.mxu0 %v4651
        %5968 = vmatprep.subr.bf16.mxu0 0
        %5969 = vmatpush1.bf16.msra.mxu0 %v4652
        %5970 = vmatprep.subr.bf16.mxu0 0
        %5971 = vmatpush1.bf16.msra.mxu0 %v4653
        %5972 = vmatprep.subr.bf16.mxu0 0
        %5973 = vmatpush1.bf16.msra.mxu0 %v4654
        %5974 = vmatprep.subr.bf16.mxu0 0
        %5975 = vmatpush1.bf16.msra.mxu0 %v4655
        %5976 = vmatprep.mubr.bf16.mxu0 %v706
        %5977 = vmatmul.mubr.bf16.gmra.mrb[0].mxu0 %v705
        %v5978 = vpop.f32.mrb[0].mxu0
        %v5979 = vadd.f32 %v5939, %v5978
        %v5980 = vpop.f32.mrb[0].mxu0
        %v5981 = vpop.f32.mrb[0].mxu0
        %v5982 = vpop.f32.mrb[0].mxu0
        %5983 = vdwg.mxu0
        %5984 = vmatprep.subr.bf16.mxu0 0
        %5985 = vmatpush1.bf16.msra.mxu0 %v4656
        %5986 = vmatprep.subr.bf16.mxu0 0
        %5987 = vmatpush1.bf16.msra.mxu0 %v4657
        %5988 = vmatprep.subr.bf16.mxu0 0
        %5989 = vmatpush1.bf16.msra.mxu0 %v4658
        %5990 = vmatprep.subr.bf16.mxu0 0
        %5991 = vmatpush1.bf16.msra.mxu0 %v4659
        %5992 = vmatprep.subr.bf16.mxu0 0
        %5993 = vmatpush1.bf16.msra.mxu0 %v4660
        %5994 = vmatprep.subr.bf16.mxu0 0
        %5995 = vmatpush1.bf16.msra.mxu0 %v4661
        %5996 = vmatprep.subr.bf16.mxu0 0
        %5997 = vmatpush1.bf16.msra.mxu0 %v4662
        %5998 = vmatprep.subr.bf16.mxu0 0
        %5999 = vmatpush1.bf16.msra.mxu0 %v4663
        %6000 = vmatprep.subr.bf16.mxu0 0
        %6001 = vmatpush1.bf16.msra.mxu0 %v4664
        %6002 = vmatprep.subr.bf16.mxu0 0
        %6003 = vmatpush1.bf16.msra.mxu0 %v4665
        %6004 = vmatprep.subr.bf16.mxu0 0
        %6005 = vmatpush1.bf16.msra.mxu0 %v4666
        %6006 = vmatprep.subr.bf16.mxu0 0
        %6007 = vmatpush1.bf16.msra.mxu0 %v4667
        %6008 = vmatprep.subr.bf16.mxu0 0
        %6009 = vmatpush1.bf16.msra.mxu0 %v4668
        %6010 = vmatprep.subr.bf16.mxu0 0
        %6011 = vmatpush1.bf16.msra.mxu0 %v4669
        %6012 = vmatprep.subr.bf16.mxu0 0
        %6013 = vmatpush1.bf16.msra.mxu0 %v4670
        %6014 = vmatprep.subr.bf16.mxu0 0
        %6015 = vmatpush1.bf16.msra.mxu0 %v4671
        %6016 = vmatprep.mubr.bf16.mxu0 %v708
        %6017 = vmatmul.mubr.bf16.gmra.mrb[0].mxu0 %v707
        %v6018 = vpop.f32.mrb[0].mxu0
        %v6019 = vadd.f32 %v5979, %v6018
        %v6020 = vpop.f32.mrb[0].mxu0
        %v6021 = vpop.f32.mrb[0].mxu0
        %v6022 = vpop.f32.mrb[0].mxu0
        %6023 = vdwg.mxu0
        %6024 = vmatprep.subr.bf16.mxu0 0
        %6025 = vmatpush1.bf16.msra.mxu0 %v4672
        %6026 = vmatprep.subr.bf16.mxu0 0
        %6027 = vmatpush1.bf16.msra.mxu0 %v4673
        %6028 = vmatprep.subr.bf16.mxu0 0
        %6029 = vmatpush1.bf16.msra.mxu0 %v4674
        %6030 = vmatprep.subr.bf16.mxu0 0
        %6031 = vmatpush1.bf16.msra.mxu0 %v4675
        %6032 = vmatprep.subr.bf16.mxu0 0
        %6033 = vmatpush1.bf16.msra.mxu0 %v4676
        %6034 = vmatprep.subr.bf16.mxu0 0
        %6035 = vmatpush1.bf16.msra.mxu0 %v4677
        %6036 = vmatprep.subr.bf16.mxu0 0
        %6037 = vmatpush1.bf16.msra.mxu0 %v4678
        %6038 = vmatprep.subr.bf16.mxu0 0
        %6039 = vmatpush1.bf16.msra.mxu0 %v4679
        %6040 = vmatprep.subr.bf16.mxu0 0
        %6041 = vmatpush1.bf16.msra.mxu0 %v4680
        %6042 = vmatprep.subr.bf16.mxu0 0
        %6043 = vmatpush1.bf16.msra.mxu0 %v4681
        %6044 = vmatprep.subr.bf16.mxu0 0
        %6045 = vmatpush1.bf16.msra.mxu0 %v4682
        %6046 = vmatprep.subr.bf16.mxu0 0
        %6047 = vmatpush1.bf16.msra.mxu0 %v4683
        %6048 = vmatprep.subr.bf16.mxu0 0
        %6049 = vmatpush1.bf16.msra.mxu0 %v4684
        %6050 = vmatprep.subr.bf16.mxu0 0
        %6051 = vmatpush1.bf16.msra.mxu0 %v4685
        %6052 = vmatprep.subr.bf16.mxu0 0
        %6053 = vmatpush1.bf16.msra.mxu0 %v4686
        %6054 = vmatprep.subr.bf16.mxu0 0
        %6055 = vmatpush1.bf16.msra.mxu0 %v4687
        %6056 = vmatprep.mubr.bf16.mxu0 %v710
        %6057 = vmatmul.mubr.bf16.gmra.mrb[0].mxu0 %v709
        %v6058 = vpop.f32.mrb[0].mxu0
        %v6059 = vadd.f32 %v6019, %v6058
        %v6060 = vpop.f32.mrb[0].mxu0
        %v6061 = vpop.f32.mrb[0].mxu0
        %v6062 = vpop.f32.mrb[0].mxu0
        %6063 = vdwg.mxu0
        %6064 = vmatprep.subr.bf16.mxu0 0
        %6065 = vmatpush1.bf16.msra.mxu0 %v4688
        %6066 = vmatprep.subr.bf16.mxu0 0
        %6067 = vmatpush1.bf16.msra.mxu0 %v4689
        %6068 = vmatprep.subr.bf16.mxu0 0
        %6069 = vmatpush1.bf16.msra.mxu0 %v4690
        %6070 = vmatprep.subr.bf16.mxu0 0
        %6071 = vmatpush1.bf16.msra.mxu0 %v4691
        %6072 = vmatprep.subr.bf16.mxu0 0
        %6073 = vmatpush1.bf16.msra.mxu0 %v4692
        %6074 = vmatprep.subr.bf16.mxu0 0
        %6075 = vmatpush1.bf16.msra.mxu0 %v4693
        %6076 = vmatprep.subr.bf16.mxu0 0
        %6077 = vmatpush1.bf16.msra.mxu0 %v4694
        %6078 = vmatprep.subr.bf16.mxu0 0
        %6079 = vmatpush1.bf16.msra.mxu0 %v4695
        %6080 = vmatprep.subr.bf16.mxu0 0
        %6081 = vmatpush1.bf16.msra.mxu0 %v4696
        %6082 = vmatprep.subr.bf16.mxu0 0
        %6083 = vmatpush1.bf16.msra.mxu0 %v4697
        %6084 = vmatprep.subr.bf16.mxu0 0
        %6085 = vmatpush1.bf16.msra.mxu0 %v4698
        %6086 = vmatprep.subr.bf16.mxu0 0
        %6087 = vmatpush1.bf16.msra.mxu0 %v4699
        %6088 = vmatprep.subr.bf16.mxu0 0
        %6089 = vmatpush1.bf16.msra.mxu0 %v4700
        %6090 = vmatprep.subr.bf16.mxu0 0
        %6091 = vmatpush1.bf16.msra.mxu0 %v4701
        %6092 = vmatprep.subr.bf16.mxu0 0
        %6093 = vmatpush1.bf16.msra.mxu0 %v4702
        %6094 = vmatprep.subr.bf16.mxu0 0
        %6095 = vmatpush1.bf16.msra.mxu0 %v4703
        %6096 = vmatprep.mubr.bf16.mxu0 %v712
        %6097 = vmatmul.mubr.bf16.gmra.mrb[0].mxu0 %v711
        %v6098 = vpop.f32.mrb[0].mxu0
        %v6099 = vadd.f32 %v6059, %v6098
        %v6100 = vpop.f32.mrb[0].mxu0
        %v6101 = vpop.f32.mrb[0].mxu0
        %v6102 = vpop.f32.mrb[0].mxu0
        %6103 = vdwg.mxu0
        %6104 = vmatprep.subr.bf16.mxu0 0
        %6105 = vmatpush1.bf16.msra.mxu0 %v4704
        %6106 = vmatprep.subr.bf16.mxu0 0
        %6107 = vmatpush1.bf16.msra.mxu0 %v4705
        %6108 = vmatprep.subr.bf16.mxu0 0
        %6109 = vmatpush1.bf16.msra.mxu0 %v4706
        %6110 = vmatprep.subr.bf16.mxu0 0
        %6111 = vmatpush1.bf16.msra.mxu0 %v4707
        %6112 = vmatprep.subr.bf16.mxu0 0
        %6113 = vmatpush1.bf16.msra.mxu0 %v4708
        %6114 = vmatprep.subr.bf16.mxu0 0
        %6115 = vmatpush1.bf16.msra.mxu0 %v4709
        %6116 = vmatprep.subr.bf16.mxu0 0
        %6117 = vmatpush1.bf16.msra.mxu0 %v4710
        %6118 = vmatprep.subr.bf16.mxu0 0
        %6119 = vmatpush1.bf16.msra.mxu0 %v4711
        %6120 = vmatprep.subr.bf16.mxu0 0
        %6121 = vmatpush1.bf16.msra.mxu0 %v4712
        %6122 = vmatprep.subr.bf16.mxu0 0
        %6123 = vmatpush1.bf16.msra.mxu0 %v4713
        %6124 = vmatprep.subr.bf16.mxu0 0
        %6125 = vmatpush1.bf16.msra.mxu0 %v4714
        %6126 = vmatprep.subr.bf16.mxu0 0
        %6127 = vmatpush1.bf16.msra.mxu0 %v4715
        %6128 = vmatprep.subr.bf16.mxu0 0
        %6129 = vmatpush1.bf16.msra.mxu0 %v4716
        %6130 = vmatprep.subr.bf16.mxu0 0
        %6131 = vmatpush1.bf16.msra.mxu0 %v4717
        %6132 = vmatprep.subr.bf16.mxu0 0
        %6133 = vmatpush1.bf16.msra.mxu0 %v4718
        %6134 = vmatprep.subr.bf16.mxu0 0
        %6135 = vmatpush1.bf16.msra.mxu0 %v4719
        %6136 = vmatprep.mubr.bf16.mxu0 %v714
        %6137 = vmatmul.mubr.bf16.gmra.mrb[0].mxu0 %v713
        %v6138 = vpop.f32.mrb[0].mxu0
        %v6139 = vadd.f32 %v6099, %v6138
        %v6140 = vpop.f32.mrb[0].mxu0
        %v6141 = vpop.f32.mrb[0].mxu0
        %v6142 = vpop.f32.mrb[0].mxu0
        %6143 = vdwg.mxu0
        %6144 = vmatprep.subr.bf16.mxu0 0
        %6145 = vmatpush1.bf16.msra.mxu0 %v4720
        %6146 = vmatprep.subr.bf16.mxu0 0
        %6147 = vmatpush1.bf16.msra.mxu0 %v4721
        %6148 = vmatprep.subr.bf16.mxu0 0
        %6149 = vmatpush1.bf16.msra.mxu0 %v4722
        %6150 = vmatprep.subr.bf16.mxu0 0
        %6151 = vmatpush1.bf16.msra.mxu0 %v4723
        %6152 = vmatprep.subr.bf16.mxu0 0
        %6153 = vmatpush1.bf16.msra.mxu0 %v4724
        %6154 = vmatprep.subr.bf16.mxu0 0
        %6155 = vmatpush1.bf16.msra.mxu0 %v4725
        %6156 = vmatprep.subr.bf16.mxu0 0
        %6157 = vmatpush1.bf16.msra.mxu0 %v4726
        %6158 = vmatprep.subr.bf16.mxu0 0
        %6159 = vmatpush1.bf16.msra.mxu0 %v4727
        %6160 = vmatprep.subr.bf16.mxu0 0
        %6161 = vmatpush1.bf16.msra.mxu0 %v4728
        %6162 = vmatprep.subr.bf16.mxu0 0
        %6163 = vmatpush1.bf16.msra.mxu0 %v4729
        %6164 = vmatprep.subr.bf16.mxu0 0
        %6165 = vmatpush1.bf16.msra.mxu0 %v4730
        %6166 = vmatprep.subr.bf16.mxu0 0
        %6167 = vmatpush1.bf16.msra.mxu0 %v4731
        %6168 = vmatprep.subr.bf16.mxu0 0
        %6169 = vmatpush1.bf16.msra.mxu0 %v4732
        %6170 = vmatprep.subr.bf16.mxu0 0
        %6171 = vmatpush1.bf16.msra.mxu0 %v4733
        %6172 = vmatprep.subr.bf16.mxu0 0
        %6173 = vmatpush1.bf16.msra.mxu0 %v4734
        %6174 = vmatprep.subr.bf16.mxu0 0
        %6175 = vmatpush1.bf16.msra.mxu0 %v4735
        %6176 = vmatprep.mubr.bf16.mxu0 %v716
        %6177 = vmatmul.mubr.bf16.gmra.mrb[0].mxu0 %v715
        %v6178 = vpop.f32.mrb[0].mxu0
        %v6179 = vadd.f32 %v6139, %v6178
        %v6180 = vpop.f32.mrb[0].mxu0
        %v6181 = vpop.f32.mrb[0].mxu0
        %v6182 = vpop.f32.mrb[0].mxu0
        %6183 = vdwg.mxu0
        %6184 = vmatprep.subr.bf16.mxu0 0
        %6185 = vmatpush1.bf16.msra.mxu0 %v4736
        %6186 = vmatprep.subr.bf16.mxu0 0
        %6187 = vmatpush1.bf16.msra.mxu0 %v4737
        %6188 = vmatprep.subr.bf16.mxu0 0
        %6189 = vmatpush1.bf16.msra.mxu0 %v4738
        %6190 = vmatprep.subr.bf16.mxu0 0
        %6191 = vmatpush1.bf16.msra.mxu0 %v4739
        %6192 = vmatprep.subr.bf16.mxu0 0
        %6193 = vmatpush1.bf16.msra.mxu0 %v4740
        %6194 = vmatprep.subr.bf16.mxu0 0
        %6195 = vmatpush1.bf16.msra.mxu0 %v4741
        %6196 = vmatprep.subr.bf16.mxu0 0
        %6197 = vmatpush1.bf16.msra.mxu0 %v4742
        %6198 = vmatprep.subr.bf16.mxu0 0
        %6199 = vmatpush1.bf16.msra.mxu0 %v4743
        %6200 = vmatprep.subr.bf16.mxu0 0
        %6201 = vmatpush1.bf16.msra.mxu0 %v4744
        %6202 = vmatprep.subr.bf16.mxu0 0
        %6203 = vmatpush1.bf16.msra.mxu0 %v4745
        %6204 = vmatprep.subr.bf16.mxu0 0
        %6205 = vmatpush1.bf16.msra.mxu0 %v4746
        %6206 = vmatprep.subr.bf16.mxu0 0
        %6207 = vmatpush1.bf16.msra.mxu0 %v4747
        %6208 = vmatprep.subr.bf16.mxu0 0
        %6209 = vmatpush1.bf16.msra.mxu0 %v4748
        %6210 = vmatprep.subr.bf16.mxu0 0
        %6211 = vmatpush1.bf16.msra.mxu0 %v4749
        %6212 = vmatprep.subr.bf16.mxu0 0
        %6213 = vmatpush1.bf16.msra.mxu0 %v4750
        %6214 = vmatprep.subr.bf16.mxu0 0
        %6215 = vmatpush1.bf16.msra.mxu0 %v4751
        %6216 = vmatprep.mubr.bf16.mxu0 %v718
        %6217 = vmatmul.mubr.bf16.gmra.mrb[0].mxu0 %v717
        %v6218 = vpop.f32.mrb[0].mxu0
        %v6219 = vadd.f32 %v6179, %v6218
        %v6220 = vpop.f32.mrb[0].mxu0
        %v6221 = vpop.f32.mrb[0].mxu0
        %v6222 = vpop.f32.mrb[0].mxu0
        %6223 = vdwg.mxu0
        %6224 = vmatprep.subr.bf16.mxu0 0
        %6225 = vmatpush1.bf16.msra.mxu0 %v4752
        %6226 = vmatprep.subr.bf16.mxu0 0
        %6227 = vmatpush1.bf16.msra.mxu0 %v4753
        %6228 = vmatprep.subr.bf16.mxu0 0
        %6229 = vmatpush1.bf16.msra.mxu0 %v4754
        %6230 = vmatprep.subr.bf16.mxu0 0
        %6231 = vmatpush1.bf16.msra.mxu0 %v4755
        %6232 = vmatprep.subr.bf16.mxu0 0
        %6233 = vmatpush1.bf16.msra.mxu0 %v4756
        %6234 = vmatprep.subr.bf16.mxu0 0
        %6235 = vmatpush1.bf16.msra.mxu0 %v4757
        %6236 = vmatprep.subr.bf16.mxu0 0
        %6237 = vmatpush1.bf16.msra.mxu0 %v4758
        %6238 = vmatprep.subr.bf16.mxu0 0
        %6239 = vmatpush1.bf16.msra.mxu0 %v4759
        %6240 = vmatprep.subr.bf16.mxu0 0
        %6241 = vmatpush1.bf16.msra.mxu0 %v4760
        %6242 = vmatprep.subr.bf16.mxu0 0
        %6243 = vmatpush1.bf16.msra.mxu0 %v4761
        %6244 = vmatprep.subr.bf16.mxu0 0
        %6245 = vmatpush1.bf16.msra.mxu0 %v4762
        %6246 = vmatprep.subr.bf16.mxu0 0
        %6247 = vmatpush1.bf16.msra.mxu0 %v4763
        %6248 = vmatprep.subr.bf16.mxu0 0
        %6249 = vmatpush1.bf16.msra.mxu0 %v4764
        %6250 = vmatprep.subr.bf16.mxu0 0
        %6251 = vmatpush1.bf16.msra.mxu0 %v4765
        %6252 = vmatprep.subr.bf16.mxu0 0
        %6253 = vmatpush1.bf16.msra.mxu0 %v4766
        %6254 = vmatprep.subr.bf16.mxu0 0
        %6255 = vmatpush1.bf16.msra.mxu0 %v4767
        %6256 = vmatprep.mubr.bf16.mxu0 %v720
        %6257 = vmatmul.mubr.bf16.gmra.mrb[0].mxu0 %v719
        %v6258 = vpop.f32.mrb[0].mxu0
        %v6259 = vadd.f32 %v6219, %v6258
        %v6260 = vpop.f32.mrb[0].mxu0
        %v6261 = vpop.f32.mrb[0].mxu0
        %v6262 = vpop.f32.mrb[0].mxu0
        %6263 = vdwg.mxu0
        %6264 = vmatprep.subr.bf16.mxu0 0
        %6265 = vmatpush1.bf16.msra.mxu0 %v4768
        %6266 = vmatprep.subr.bf16.mxu0 0
        %6267 = vmatpush1.bf16.msra.mxu0 %v4769
        %6268 = vmatprep.subr.bf16.mxu0 0
        %6269 = vmatpush1.bf16.msra.mxu0 %v4770
        %6270 = vmatprep.subr.bf16.mxu0 0
        %6271 = vmatpush1.bf16.msra.mxu0 %v4771
        %6272 = vmatprep.subr.bf16.mxu0 0
        %6273 = vmatpush1.bf16.msra.mxu0 %v4772
        %6274 = vmatprep.subr.bf16.mxu0 0
        %6275 = vmatpush1.bf16.msra.mxu0 %v4773
        %6276 = vmatprep.subr.bf16.mxu0 0
        %6277 = vmatpush1.bf16.msra.mxu0 %v4774
        %6278 = vmatprep.subr.bf16.mxu0 0
        %6279 = vmatpush1.bf16.msra.mxu0 %v4775
        %6280 = vmatprep.subr.bf16.mxu0 0
        %6281 = vmatpush1.bf16.msra.mxu0 %v4776
        %6282 = vmatprep.subr.bf16.mxu0 0
        %6283 = vmatpush1.bf16.msra.mxu0 %v4777
        %6284 = vmatprep.subr.bf16.mxu0 0
        %6285 = vmatpush1.bf16.msra.mxu0 %v4778
        %6286 = vmatprep.subr.bf16.mxu0 0
        %6287 = vmatpush1.bf16.msra.mxu0 %v4779
        %6288 = vmatprep.subr.bf16.mxu0 0
        %6289 = vmatpush1.bf16.msra.mxu0 %v4780
        %6290 = vmatprep.subr.bf16.mxu0 0
        %6291 = vmatpush1.bf16.msra.mxu0 %v4781
        %6292 = vmatprep.subr.bf16.mxu0 0
        %6293 = vmatpush1.bf16.msra.mxu0 %v4782
        %6294 = vmatprep.subr.bf16.mxu0 0
        %6295 = vmatpush1.bf16.msra.mxu0 %v4783
        %6296 = vmatprep.mubr.bf16.mxu0 %v722
        %6297 = vmatmul.mubr.bf16.gmra.mrb[0].mxu0 %v721
        %v6298 = vpop.f32.mrb[0].mxu0
        %v6299 = vadd.f32 %v6259, %v6298
        %v6300 = vpop.f32.mrb[0].mxu0
        %v6301 = vpop.f32.mrb[0].mxu0
        %v6302 = vpop.f32.mrb[0].mxu0
        %6303 = vdwg.mxu0
        %6304 = vmatprep.subr.bf16.mxu0 0
        %6305 = vmatpush1.bf16.msra.mxu0 %v4784
        %6306 = vmatprep.subr.bf16.mxu0 0
        %6307 = vmatpush1.bf16.msra.mxu0 %v4785
        %6308 = vmatprep.subr.bf16.mxu0 0
        %6309 = vmatpush1.bf16.msra.mxu0 %v4786
        %6310 = vmatprep.subr.bf16.mxu0 0
        %6311 = vmatpush1.bf16.msra.mxu0 %v4787
        %6312 = vmatprep.subr.bf16.mxu0 0
        %6313 = vmatpush1.bf16.msra.mxu0 %v4788
        %6314 = vmatprep.subr.bf16.mxu0 0
        %6315 = vmatpush1.bf16.msra.mxu0 %v4789
        %6316 = vmatprep.subr.bf16.mxu0 0
        %6317 = vmatpush1.bf16.msra.mxu0 %v4790
        %6318 = vmatprep.subr.bf16.mxu0 0
        %6319 = vmatpush1.bf16.msra.mxu0 %v4791
        %6320 = vmatprep.subr.bf16.mxu0 0
        %6321 = vmatpush1.bf16.msra.mxu0 %v4792
        %6322 = vmatprep.subr.bf16.mxu0 0
        %6323 = vmatpush1.bf16.msra.mxu0 %v4793
        %6324 = vmatprep.subr.bf16.mxu0 0
        %6325 = vmatpush1.bf16.msra.mxu0 %v4794
        %6326 = vmatprep.subr.bf16.mxu0 0
        %6327 = vmatpush1.bf16.msra.mxu0 %v4795
        %6328 = vmatprep.subr.bf16.mxu0 0
        %6329 = vmatpush1.bf16.msra.mxu0 %v4796
        %6330 = vmatprep.subr.bf16.mxu0 0
        %6331 = vmatpush1.bf16.msra.mxu0 %v4797
        %6332 = vmatprep.subr.bf16.mxu0 0
        %6333 = vmatpush1.bf16.msra.mxu0 %v4798
        %6334 = vmatprep.subr.bf16.mxu0 0
        %6335 = vmatpush1.bf16.msra.mxu0 %v4799
        %6336 = vmatprep.mubr.bf16.mxu0 %v724
        %6337 = vmatmul.mubr.bf16.gmra.mrb[0].mxu0 %v723
        %v6338 = vpop.f32.mrb[0].mxu0
        %v6339 = vadd.f32 %v6299, %v6338
        %v6340 = vpop.f32.mrb[0].mxu0
        %v6341 = vpop.f32.mrb[0].mxu0
        %v6342 = vpop.f32.mrb[0].mxu0
        %6343 = vdwg.mxu0
        %6344 = vmatprep.subr.bf16.mxu0 0
        %6345 = vmatpush1.bf16.msra.mxu0 %v4800
        %6346 = vmatprep.subr.bf16.mxu0 0
        %6347 = vmatpush1.bf16.msra.mxu0 %v4801
        %6348 = vmatprep.subr.bf16.mxu0 0
        %6349 = vmatpush1.bf16.msra.mxu0 %v4802
        %6350 = vmatprep.subr.bf16.mxu0 0
        %6351 = vmatpush1.bf16.msra.mxu0 %v4803
        %6352 = vmatprep.subr.bf16.mxu0 0
        %6353 = vmatpush1.bf16.msra.mxu0 %v4804
        %6354 = vmatprep.subr.bf16.mxu0 0
        %6355 = vmatpush1.bf16.msra.mxu0 %v4805
        %6356 = vmatprep.subr.bf16.mxu0 0
        %6357 = vmatpush1.bf16.msra.mxu0 %v4806
        %6358 = vmatprep.subr.bf16.mxu0 0
        %6359 = vmatpush1.bf16.msra.mxu0 %v4807
        %6360 = vmatprep.subr.bf16.mxu0 0
        %6361 = vmatpush1.bf16.msra.mxu0 %v4808
        %6362 = vmatprep.subr.bf16.mxu0 0
        %6363 = vmatpush1.bf16.msra.mxu0 %v4809
        %6364 = vmatprep.subr.bf16.mxu0 0
        %6365 = vmatpush1.bf16.msra.mxu0 %v4810
        %6366 = vmatprep.subr.bf16.mxu0 0
        %6367 = vmatpush1.bf16.msra.mxu0 %v4811
        %6368 = vmatprep.subr.bf16.mxu0 0
        %6369 = vmatpush1.bf16.msra.mxu0 %v4812
        %6370 = vmatprep.subr.bf16.mxu0 0
        %6371 = vmatpush1.bf16.msra.mxu0 %v4813
        %6372 = vmatprep.subr.bf16.mxu0 0
        %6373 = vmatpush1.bf16.msra.mxu0 %v4814
        %6374 = vmatprep.subr.bf16.mxu0 0
        %6375 = vmatpush1.bf16.msra.mxu0 %v4815
        %6376 = vmatprep.mubr.bf16.mxu0 %v726
        %6377 = vmatmul.mubr.bf16.gmra.mrb[0].mxu0 %v725
        %v6378 = vpop.f32.mrb[0].mxu0
        %v6379 = vadd.f32 %v6339, %v6378
        %v6380 = vpop.f32.mrb[0].mxu0
        %v6381 = vpop.f32.mrb[0].mxu0
        %v6382 = vpop.f32.mrb[0].mxu0
        %6383 = vdwg.mxu0
        %6384 = vmatprep.subr.bf16.mxu0 0
        %6385 = vmatpush1.bf16.msra.mxu0 %v4816
        %6386 = vmatprep.subr.bf16.mxu0 0
        %6387 = vmatpush1.bf16.msra.mxu0 %v4817
        %6388 = vmatprep.subr.bf16.mxu0 0
        %6389 = vmatpush1.bf16.msra.mxu0 %v4818
        %6390 = vmatprep.subr.bf16.mxu0 0
        %6391 = vmatpush1.bf16.msra.mxu0 %v4819
        %6392 = vmatprep.subr.bf16.mxu0 0
        %6393 = vmatpush1.bf16.msra.mxu0 %v4820
        %6394 = vmatprep.subr.bf16.mxu0 0
        %6395 = vmatpush1.bf16.msra.mxu0 %v4821
        %6396 = vmatprep.subr.bf16.mxu0 0
        %6397 = vmatpush1.bf16.msra.mxu0 %v4822
        %6398 = vmatprep.subr.bf16.mxu0 0
        %6399 = vmatpush1.bf16.msra.mxu0 %v4823
        %6400 = vmatprep.subr.bf16.mxu0 0
        %6401 = vmatpush1.bf16.msra.mxu0 %v4824
        %6402 = vmatprep.subr.bf16.mxu0 0
        %6403 = vmatpush1.bf16.msra.mxu0 %v4825
        %6404 = vmatprep.subr.bf16.mxu0 0
        %6405 = vmatpush1.bf16.msra.mxu0 %v4826
        %6406 = vmatprep.subr.bf16.mxu0 0
        %6407 = vmatpush1.bf16.msra.mxu0 %v4827
        %6408 = vmatprep.subr.bf16.mxu0 0
        %6409 = vmatpush1.bf16.msra.mxu0 %v4828
        %6410 = vmatprep.subr.bf16.mxu0 0
        %6411 = vmatpush1.bf16.msra.mxu0 %v4829
        %6412 = vmatprep.subr.bf16.mxu0 0
        %6413 = vmatpush1.bf16.msra.mxu0 %v4830
        %6414 = vmatprep.subr.bf16.mxu0 0
        %6415 = vmatpush1.bf16.msra.mxu0 %v4831
        %6416 = vmatprep.mubr.bf16.mxu0 %v728
        %6417 = vmatmul.mubr.bf16.gmra.mrb[0].mxu0 %v727
        %v6418 = vpop.f32.mrb[0].mxu0
        %v6419 = vadd.f32 %v6379, %v6418
        %v6420 = vpop.f32.mrb[0].mxu0
        %v6421 = vpop.f32.mrb[0].mxu0
        %v6422 = vpop.f32.mrb[0].mxu0
        %6423 = vdwg.mxu0
        %6424 = vmatprep.subr.bf16.mxu0 0
        %6425 = vmatpush1.bf16.msra.mxu0 %v4832
        %6426 = vmatprep.subr.bf16.mxu0 0
        %6427 = vmatpush1.bf16.msra.mxu0 %v4833
        %6428 = vmatprep.subr.bf16.mxu0 0
        %6429 = vmatpush1.bf16.msra.mxu0 %v4834
        %6430 = vmatprep.subr.bf16.mxu0 0
        %6431 = vmatpush1.bf16.msra.mxu0 %v4835
        %6432 = vmatprep.subr.bf16.mxu0 0
        %6433 = vmatpush1.bf16.msra.mxu0 %v4836
        %6434 = vmatprep.subr.bf16.mxu0 0
        %6435 = vmatpush1.bf16.msra.mxu0 %v4837
        %6436 = vmatprep.subr.bf16.mxu0 0
        %6437 = vmatpush1.bf16.msra.mxu0 %v4838
        %6438 = vmatprep.subr.bf16.mxu0 0
        %6439 = vmatpush1.bf16.msra.mxu0 %v4839
        %6440 = vmatprep.subr.bf16.mxu0 0
        %6441 = vmatpush1.bf16.msra.mxu0 %v4840
        %6442 = vmatprep.subr.bf16.mxu0 0
        %6443 = vmatpush1.bf16.msra.mxu0 %v4841
        %6444 = vmatprep.subr.bf16.mxu0 0
        %6445 = vmatpush1.bf16.msra.mxu0 %v4842
        %6446 = vmatprep.subr.bf16.mxu0 0
        %6447 = vmatpush1.bf16.msra.mxu0 %v4843
        %6448 = vmatprep.subr.bf16.mxu0 0
        %6449 = vmatpush1.bf16.msra.mxu0 %v4844
        %6450 = vmatprep.subr.bf16.mxu0 0
        %6451 = vmatpush1.bf16.msra.mxu0 %v4845
        %6452 = vmatprep.subr.bf16.mxu0 0
        %6453 = vmatpush1.bf16.msra.mxu0 %v4846
        %6454 = vmatprep.subr.bf16.mxu0 0
        %6455 = vmatpush1.bf16.msra.mxu0 %v4847
        %6456 = vmatprep.mubr.bf16.mxu0 %v730
        %6457 = vmatmul.mubr.bf16.gmra.mrb[0].mxu0 %v729
        %v6458 = vpop.f32.mrb[0].mxu0
        %v6459 = vadd.f32 %v6419, %v6458
        %v6460 = vpop.f32.mrb[0].mxu0
        %v6461 = vpop.f32.mrb[0].mxu0
        %v6462 = vpop.f32.mrb[0].mxu0
        %6463 = vdwg.mxu0
        %6464 = vmatprep.subr.bf16.mxu0 0
        %6465 = vmatpush1.bf16.msra.mxu0 %v4848
        %6466 = vmatprep.subr.bf16.mxu0 0
        %6467 = vmatpush1.bf16.msra.mxu0 %v4849
        %6468 = vmatprep.subr.bf16.mxu0 0
        %6469 = vmatpush1.bf16.msra.mxu0 %v4850
        %6470 = vmatprep.subr.bf16.mxu0 0
        %6471 = vmatpush1.bf16.msra.mxu0 %v4851
        %6472 = vmatprep.subr.bf16.mxu0 0
        %6473 = vmatpush1.bf16.msra.mxu0 %v4852
        %6474 = vmatprep.subr.bf16.mxu0 0
        %6475 = vmatpush1.bf16.msra.mxu0 %v4853
        %6476 = vmatprep.subr.bf16.mxu0 0
        %6477 = vmatpush1.bf16.msra.mxu0 %v4854
        %6478 = vmatprep.subr.bf16.mxu0 0
        %6479 = vmatpush1.bf16.msra.mxu0 %v4855
        %6480 = vmatprep.subr.bf16.mxu0 0
        %6481 = vmatpush1.bf16.msra.mxu0 %v4856
        %6482 = vmatprep.subr.bf16.mxu0 0
        %6483 = vmatpush1.bf16.msra.mxu0 %v4857
        %6484 = vmatprep.subr.bf16.mxu0 0
        %6485 = vmatpush1.bf16.msra.mxu0 %v4858
        %6486 = vmatprep.subr.bf16.mxu0 0
        %6487 = vmatpush1.bf16.msra.mxu0 %v4859
        %6488 = vmatprep.subr.bf16.mxu0 0
        %6489 = vmatpush1.bf16.msra.mxu0 %v4860
        %6490 = vmatprep.subr.bf16.mxu0 0
        %6491 = vmatpush1.bf16.msra.mxu0 %v4861
        %6492 = vmatprep.subr.bf16.mxu0 0
        %6493 = vmatpush1.bf16.msra.mxu0 %v4862
        %6494 = vmatprep.subr.bf16.mxu0 0
        %6495 = vmatpush1.bf16.msra.mxu0 %v4863
        %6496 = vmatprep.mubr.bf16.mxu0 %v732
        %6497 = vmatmul.mubr.bf16.gmra.mrb[0].mxu0 %v731
        %v6498 = vpop.f32.mrb[0].mxu0
        %v6499 = vadd.f32 %v6459, %v6498
        %v6500 = vpop.f32.mrb[0].mxu0
        %v6501 = vpop.f32.mrb[0].mxu0
        %v6502 = vpop.f32.mrb[0].mxu0
        %6503 = vdwg.mxu0
        %6504 = vmatprep.subr.bf16.mxu0 0
        %6505 = vmatpush1.bf16.msra.mxu0 %v4864
        %6506 = vmatprep.subr.bf16.mxu0 0
        %6507 = vmatpush1.bf16.msra.mxu0 %v4865
        %6508 = vmatprep.subr.bf16.mxu0 0
        %6509 = vmatpush1.bf16.msra.mxu0 %v4866
        %6510 = vmatprep.subr.bf16.mxu0 0
        %6511 = vmatpush1.bf16.msra.mxu0 %v4867
        %6512 = vmatprep.subr.bf16.mxu0 0
        %6513 = vmatpush1.bf16.msra.mxu0 %v4868
        %6514 = vmatprep.subr.bf16.mxu0 0
        %6515 = vmatpush1.bf16.msra.mxu0 %v4869
        %6516 = vmatprep.subr.bf16.mxu0 0
        %6517 = vmatpush1.bf16.msra.mxu0 %v4870
        %6518 = vmatprep.subr.bf16.mxu0 0
        %6519 = vmatpush1.bf16.msra.mxu0 %v4871
        %6520 = vmatprep.subr.bf16.mxu0 0
        %6521 = vmatpush1.bf16.msra.mxu0 %v4872
        %6522 = vmatprep.subr.bf16.mxu0 0
        %6523 = vmatpush1.bf16.msra.mxu0 %v4873
        %6524 = vmatprep.subr.bf16.mxu0 0
        %6525 = vmatpush1.bf16.msra.mxu0 %v4874
        %6526 = vmatprep.subr.bf16.mxu0 0
        %6527 = vmatpush1.bf16.msra.mxu0 %v4875
        %6528 = vmatprep.subr.bf16.mxu0 0
        %6529 = vmatpush1.bf16.msra.mxu0 %v4876
        %6530 = vmatprep.subr.bf16.mxu0 0
        %6531 = vmatpush1.bf16.msra.mxu0 %v4877
        %6532 = vmatprep.subr.bf16.mxu0 0
        %6533 = vmatpush1.bf16.msra.mxu0 %v4878
        %6534 = vmatprep.subr.bf16.mxu0 0
        %6535 = vmatpush1.bf16.msra.mxu0 %v4879
        %6536 = vmatprep.mubr.bf16.mxu0 %v734
        %6537 = vmatmul.mubr.bf16.gmra.mrb[0].mxu0 %v733
        %v6538 = vpop.f32.mrb[0].mxu0
        %v6539 = vadd.f32 %v6499, %v6538
        %v6540 = vpop.f32.mrb[0].mxu0
        %v6541 = vpop.f32.mrb[0].mxu0
        %v6542 = vpop.f32.mrb[0].mxu0
        %6543 = vdwg.mxu0
        %6544 = vmatprep.subr.bf16.mxu0 0
        %6545 = vmatpush1.bf16.msra.mxu0 %v4880
        %6546 = vmatprep.subr.bf16.mxu0 0
        %6547 = vmatpush1.bf16.msra.mxu0 %v4881
        %6548 = vmatprep.subr.bf16.mxu0 0
        %6549 = vmatpush1.bf16.msra.mxu0 %v4882
        %6550 = vmatprep.subr.bf16.mxu0 0
        %6551 = vmatpush1.bf16.msra.mxu0 %v4883
        %6552 = vmatprep.subr.bf16.mxu0 0
        %6553 = vmatpush1.bf16.msra.mxu0 %v4884
        %6554 = vmatprep.subr.bf16.mxu0 0
        %6555 = vmatpush1.bf16.msra.mxu0 %v4885
        %6556 = vmatprep.subr.bf16.mxu0 0
        %6557 = vmatpush1.bf16.msra.mxu0 %v4886
        %6558 = vmatprep.subr.bf16.mxu0 0
        %6559 = vmatpush1.bf16.msra.mxu0 %v4887
        %6560 = vmatprep.subr.bf16.mxu0 0
        %6561 = vmatpush1.bf16.msra.mxu0 %v4888
        %6562 = vmatprep.subr.bf16.mxu0 0
        %6563 = vmatpush1.bf16.msra.mxu0 %v4889
        %6564 = vmatprep.subr.bf16.mxu0 0
        %6565 = vmatpush1.bf16.msra.mxu0 %v4890
        %6566 = vmatprep.subr.bf16.mxu0 0
        %6567 = vmatpush1.bf16.msra.mxu0 %v4891
        %6568 = vmatprep.subr.bf16.mxu0 0
        %6569 = vmatpush1.bf16.msra.mxu0 %v4892
        %6570 = vmatprep.subr.bf16.mxu0 0
        %6571 = vmatpush1.bf16.msra.mxu0 %v4893
        %6572 = vmatprep.subr.bf16.mxu0 0
        %6573 = vmatpush1.bf16.msra.mxu0 %v4894
        %6574 = vmatprep.subr.bf16.mxu0 0
        %6575 = vmatpush1.bf16.msra.mxu0 %v4895
        %6576 = vmatprep.mubr.bf16.mxu0 %v736
        %6577 = vmatmul.mubr.bf16.gmra.mrb[0].mxu0 %v735
        %v6578 = vpop.f32.mrb[0].mxu0
        %v6579 = vadd.f32 %v6539, %v6578
        %v6580 = vpop.f32.mrb[0].mxu0
        %v6581 = vpop.f32.mrb[0].mxu0
        %v6582 = vpop.f32.mrb[0].mxu0
        %6583 = vdwg.mxu0
        %6584 = vmatprep.subr.bf16.mxu0 0
        %6585 = vmatpush1.bf16.msra.mxu0 %v4896
        %6586 = vmatprep.subr.bf16.mxu0 0
        %6587 = vmatpush1.bf16.msra.mxu0 %v4897
        %6588 = vmatprep.subr.bf16.mxu0 0
        %6589 = vmatpush1.bf16.msra.mxu0 %v4898
        %6590 = vmatprep.subr.bf16.mxu0 0
        %6591 = vmatpush1.bf16.msra.mxu0 %v4899
        %6592 = vmatprep.subr.bf16.mxu0 0
        %6593 = vmatpush1.bf16.msra.mxu0 %v4900
        %6594 = vmatprep.subr.bf16.mxu0 0
        %6595 = vmatpush1.bf16.msra.mxu0 %v4901
        %6596 = vmatprep.subr.bf16.mxu0 0
        %6597 = vmatpush1.bf16.msra.mxu0 %v4902
        %6598 = vmatprep.subr.bf16.mxu0 0
        %6599 = vmatpush1.bf16.msra.mxu0 %v4903
        %6600 = vmatprep.subr.bf16.mxu0 0
        %6601 = vmatpush1.bf16.msra.mxu0 %v4904
        %6602 = vmatprep.subr.bf16.mxu0 0
        %6603 = vmatpush1.bf16.msra.mxu0 %v4905
        %6604 = vmatprep.subr.bf16.mxu0 0
        %6605 = vmatpush1.bf16.msra.mxu0 %v4906
        %6606 = vmatprep.subr.bf16.mxu0 0
        %6607 = vmatpush1.bf16.msra.mxu0 %v4907
        %6608 = vmatprep.subr.bf16.mxu0 0
        %6609 = vmatpush1.bf16.msra.mxu0 %v4908
        %6610 = vmatprep.subr.bf16.mxu0 0
        %6611 = vmatpush1.bf16.msra.mxu0 %v4909
        %6612 = vmatprep.subr.bf16.mxu0 0
        %6613 = vmatpush1.bf16.msra.mxu0 %v4910
        %6614 = vmatprep.subr.bf16.mxu0 0
        %6615 = vmatpush1.bf16.msra.mxu0 %v4911
        %6616 = vmatprep.mubr.bf16.mxu0 %v738
        %6617 = vmatmul.mubr.bf16.gmra.mrb[0].mxu0 %v737
        %v6618 = vpop.f32.mrb[0].mxu0
        %v6619 = vadd.f32 %v6579, %v6618
        %v6620 = vpop.f32.mrb[0].mxu0
        %v6621 = vpop.f32.mrb[0].mxu0
        %v6622 = vpop.f32.mrb[0].mxu0
        %6623 = vdwg.mxu0
        %6624 = vmatprep.subr.bf16.mxu0 0
        %6625 = vmatpush1.bf16.msra.mxu0 %v4912
        %6626 = vmatprep.subr.bf16.mxu0 0
        %6627 = vmatpush1.bf16.msra.mxu0 %v4913
        %6628 = vmatprep.subr.bf16.mxu0 0
        %6629 = vmatpush1.bf16.msra.mxu0 %v4914
        %6630 = vmatprep.subr.bf16.mxu0 0
        %6631 = vmatpush1.bf16.msra.mxu0 %v4915
        %6632 = vmatprep.subr.bf16.mxu0 0
        %6633 = vmatpush1.bf16.msra.mxu0 %v4916
        %6634 = vmatprep.subr.bf16.mxu0 0
        %6635 = vmatpush1.bf16.msra.mxu0 %v4917
        %6636 = vmatprep.subr.bf16.mxu0 0
        %6637 = vmatpush1.bf16.msra.mxu0 %v4918
        %6638 = vmatprep.subr.bf16.mxu0 0
        %6639 = vmatpush1.bf16.msra.mxu0 %v4919
        %6640 = vmatprep.subr.bf16.mxu0 0
        %6641 = vmatpush1.bf16.msra.mxu0 %v4920
        %6642 = vmatprep.subr.bf16.mxu0 0
        %6643 = vmatpush1.bf16.msra.mxu0 %v4921
        %6644 = vmatprep.subr.bf16.mxu0 0
        %6645 = vmatpush1.bf16.msra.mxu0 %v4922
        %6646 = vmatprep.subr.bf16.mxu0 0
        %6647 = vmatpush1.bf16.msra.mxu0 %v4923
        %6648 = vmatprep.subr.bf16.mxu0 0
        %6649 = vmatpush1.bf16.msra.mxu0 %v4924
        %6650 = vmatprep.subr.bf16.mxu0 0
        %6651 = vmatpush1.bf16.msra.mxu0 %v4925
        %6652 = vmatprep.subr.bf16.mxu0 0
        %6653 = vmatpush1.bf16.msra.mxu0 %v4926
        %6654 = vmatprep.subr.bf16.mxu0 0
        %6655 = vmatpush1.bf16.msra.mxu0 %v4927
        %6656 = vmatprep.mubr.bf16.mxu0 %v740
        %6657 = vmatmul.mubr.bf16.gmra.mrb[0].mxu0 %v739
        %v6658 = vpop.f32.mrb[0].mxu0
        %v6659 = vadd.f32 %v6619, %v6658
        %v6660 = vpop.f32.mrb[0].mxu0
        %v6661 = vpop.f32.mrb[0].mxu0
        %v6662 = vpop.f32.mrb[0].mxu0
        %6663 = vdwg.mxu0
        %6664 = vmatprep.subr.bf16.mxu0 0
        %6665 = vmatpush1.bf16.msra.mxu0 %v4928
        %6666 = vmatprep.subr.bf16.mxu0 0
        %6667 = vmatpush1.bf16.msra.mxu0 %v4929
        %6668 = vmatprep.subr.bf16.mxu0 0
        %6669 = vmatpush1.bf16.msra.mxu0 %v4930
        %6670 = vmatprep.subr.bf16.mxu0 0
        %6671 = vmatpush1.bf16.msra.mxu0 %v4931
        %6672 = vmatprep.subr.bf16.mxu0 0
        %6673 = vmatpush1.bf16.msra.mxu0 %v4932
        %6674 = vmatprep.subr.bf16.mxu0 0
        %6675 = vmatpush1.bf16.msra.mxu0 %v4933
        %6676 = vmatprep.subr.bf16.mxu0 0
        %6677 = vmatpush1.bf16.msra.mxu0 %v4934
        %6678 = vmatprep.subr.bf16.mxu0 0
        %6679 = vmatpush1.bf16.msra.mxu0 %v4935
        %6680 = vmatprep.subr.bf16.mxu0 0
        %6681 = vmatpush1.bf16.msra.mxu0 %v4936
        %6682 = vmatprep.subr.bf16.mxu0 0
        %6683 = vmatpush1.bf16.msra.mxu0 %v4937
        %6684 = vmatprep.subr.bf16.mxu0 0
        %6685 = vmatpush1.bf16.msra.mxu0 %v4938
        %6686 = vmatprep.subr.bf16.mxu0 0
        %6687 = vmatpush1.bf16.msra.mxu0 %v4939
        %6688 = vmatprep.subr.bf16.mxu0 0
        %6689 = vmatpush1.bf16.msra.mxu0 %v4940
        %6690 = vmatprep.subr.bf16.mxu0 0
        %6691 = vmatpush1.bf16.msra.mxu0 %v4941
        %6692 = vmatprep.subr.bf16.mxu0 0
        %6693 = vmatpush1.bf16.msra.mxu0 %v4942
        %6694 = vmatprep.subr.bf16.mxu0 0
        %6695 = vmatpush1.bf16.msra.mxu0 %v4943
        %6696 = vmatprep.mubr.bf16.mxu0 %v742
        %6697 = vmatmul.mubr.bf16.gmra.mrb[0].mxu0 %v741
        %v6698 = vpop.f32.mrb[0].mxu0
        %v6699 = vadd.f32 %v6659, %v6698
        %v6700 = vpop.f32.mrb[0].mxu0
        %v6701 = vpop.f32.mrb[0].mxu0
        %v6702 = vpop.f32.mrb[0].mxu0
        %6703 = vdwg.mxu0
        %6704 = vmatprep.subr.bf16.mxu0 0
        %6705 = vmatpush1.bf16.msra.mxu0 %v4944
        %6706 = vmatprep.subr.bf16.mxu0 0
        %6707 = vmatpush1.bf16.msra.mxu0 %v4945
        %6708 = vmatprep.subr.bf16.mxu0 0
        %6709 = vmatpush1.bf16.msra.mxu0 %v4946
        %6710 = vmatprep.subr.bf16.mxu0 0
        %6711 = vmatpush1.bf16.msra.mxu0 %v4947
        %6712 = vmatprep.subr.bf16.mxu0 0
        %6713 = vmatpush1.bf16.msra.mxu0 %v4948
        %6714 = vmatprep.subr.bf16.mxu0 0
        %6715 = vmatpush1.bf16.msra.mxu0 %v4949
        %6716 = vmatprep.subr.bf16.mxu0 0
        %6717 = vmatpush1.bf16.msra.mxu0 %v4950
        %6718 = vmatprep.subr.bf16.mxu0 0
        %6719 = vmatpush1.bf16.msra.mxu0 %v4951
        %6720 = vmatprep.subr.bf16.mxu0 0
        %6721 = vmatpush1.bf16.msra.mxu0 %v4952
        %6722 = vmatprep.subr.bf16.mxu0 0
        %6723 = vmatpush1.bf16.msra.mxu0 %v4953
        %6724 = vmatprep.subr.bf16.mxu0 0
        %6725 = vmatpush1.bf16.msra.mxu0 %v4954
        %6726 = vmatprep.subr.bf16.mxu0 0
        %6727 = vmatpush1.bf16.msra.mxu0 %v4955
        %6728 = vmatprep.subr.bf16.mxu0 0
        %6729 = vmatpush1.bf16.msra.mxu0 %v4956
        %6730 = vmatprep.subr.bf16.mxu0 0
        %6731 = vmatpush1.bf16.msra.mxu0 %v4957
        %6732 = vmatprep.subr.bf16.mxu0 0
        %6733 = vmatpush1.bf16.msra.mxu0 %v4958
        %6734 = vmatprep.subr.bf16.mxu0 0
        %6735 = vmatpush1.bf16.msra.mxu0 %v4959
        %6736 = vmatprep.mubr.bf16.mxu0 %v744
        %6737 = vmatmul.mubr.bf16.gmra.mrb[0].mxu0 %v743
        %v6738 = vpop.f32.mrb[0].mxu0
        %v6739 = vadd.f32 %v6699, %v6738
        %v6740 = vpop.f32.mrb[0].mxu0
        %v6741 = vpop.f32.mrb[0].mxu0
        %v6742 = vpop.f32.mrb[0].mxu0
        %6743 = vdwg.mxu0
        %6744 = vmatprep.subr.bf16.mxu0 0
        %6745 = vmatpush1.bf16.msra.mxu0 %v4960
        %6746 = vmatprep.subr.bf16.mxu0 0
        %6747 = vmatpush1.bf16.msra.mxu0 %v4961
        %6748 = vmatprep.subr.bf16.mxu0 0
        %6749 = vmatpush1.bf16.msra.mxu0 %v4962
        %6750 = vmatprep.subr.bf16.mxu0 0
        %6751 = vmatpush1.bf16.msra.mxu0 %v4963
        %6752 = vmatprep.subr.bf16.mxu0 0
        %6753 = vmatpush1.bf16.msra.mxu0 %v4964
        %6754 = vmatprep.subr.bf16.mxu0 0
        %6755 = vmatpush1.bf16.msra.mxu0 %v4965
        %6756 = vmatprep.subr.bf16.mxu0 0
        %6757 = vmatpush1.bf16.msra.mxu0 %v4966
        %6758 = vmatprep.subr.bf16.mxu0 0
        %6759 = vmatpush1.bf16.msra.mxu0 %v4967
        %6760 = vmatprep.subr.bf16.mxu0 0
        %6761 = vmatpush1.bf16.msra.mxu0 %v4968
        %6762 = vmatprep.subr.bf16.mxu0 0
        %6763 = vmatpush1.bf16.msra.mxu0 %v4969
        %6764 = vmatprep.subr.bf16.mxu0 0
        %6765 = vmatpush1.bf16.msra.mxu0 %v4970
        %6766 = vmatprep.subr.bf16.mxu0 0
        %6767 = vmatpush1.bf16.msra.mxu0 %v4971
        %6768 = vmatprep.subr.bf16.mxu0 0
        %6769 = vmatpush1.bf16.msra.mxu0 %v4972
        %6770 = vmatprep.subr.bf16.mxu0 0
        %6771 = vmatpush1.bf16.msra.mxu0 %v4973
        %6772 = vmatprep.subr.bf16.mxu0 0
        %6773 = vmatpush1.bf16.msra.mxu0 %v4974
        %6774 = vmatprep.subr.bf16.mxu0 0
        %6775 = vmatpush1.bf16.msra.mxu0 %v4975
        %6776 = vmatprep.mubr.bf16.mxu0 %v746
        %6777 = vmatmul.mubr.bf16.gmra.mrb[0].mxu0 %v745
        %v6778 = vpop.f32.mrb[0].mxu0
        %v6779 = vadd.f32 %v6739, %v6778
        %v6780 = vpop.f32.mrb[0].mxu0
        %v6781 = vpop.f32.mrb[0].mxu0
        %v6782 = vpop.f32.mrb[0].mxu0
        %6783 = vdwg.mxu0
        %6784 = vmatprep.subr.bf16.mxu0 0
        %6785 = vmatpush1.bf16.msra.mxu0 %v4976
        %6786 = vmatprep.subr.bf16.mxu0 0
        %6787 = vmatpush1.bf16.msra.mxu0 %v4977
        %6788 = vmatprep.subr.bf16.mxu0 0
        %6789 = vmatpush1.bf16.msra.mxu0 %v4978
        %6790 = vmatprep.subr.bf16.mxu0 0
        %6791 = vmatpush1.bf16.msra.mxu0 %v4979
        %6792 = vmatprep.subr.bf16.mxu0 0
        %6793 = vmatpush1.bf16.msra.mxu0 %v4980
        %6794 = vmatprep.subr.bf16.mxu0 0
        %6795 = vmatpush1.bf16.msra.mxu0 %v4981
        %6796 = vmatprep.subr.bf16.mxu0 0
        %6797 = vmatpush1.bf16.msra.mxu0 %v4982
        %6798 = vmatprep.subr.bf16.mxu0 0
        %6799 = vmatpush1.bf16.msra.mxu0 %v4983
        %6800 = vmatprep.subr.bf16.mxu0 0
        %6801 = vmatpush1.bf16.msra.mxu0 %v4984
        %6802 = vmatprep.subr.bf16.mxu0 0
        %6803 = vmatpush1.bf16.msra.mxu0 %v4985
        %6804 = vmatprep.subr.bf16.mxu0 0
        %6805 = vmatpush1.bf16.msra.mxu0 %v4986
        %6806 = vmatprep.subr.bf16.mxu0 0
        %6807 = vmatpush1.bf16.msra.mxu0 %v4987
        %6808 = vmatprep.subr.bf16.mxu0 0
        %6809 = vmatpush1.bf16.msra.mxu0 %v4988
        %6810 = vmatprep.subr.bf16.mxu0 0
        %6811 = vmatpush1.bf16.msra.mxu0 %v4989
        %6812 = vmatprep.subr.bf16.mxu0 0
        %6813 = vmatpush1.bf16.msra.mxu0 %v4990
        %6814 = vmatprep.subr.bf16.mxu0 0
        %6815 = vmatpush1.bf16.msra.mxu0 %v4991
        %6816 = vmatprep.mubr.bf16.mxu0 %v748
        %6817 = vmatmul.mubr.bf16.gmra.mrb[0].mxu0 %v747
        %v6818 = vpop.f32.mrb[0].mxu0
        %v6819 = vadd.f32 %v6779, %v6818
        %v6820 = vpop.f32.mrb[0].mxu0
        %v6821 = vpop.f32.mrb[0].mxu0
        %v6822 = vpop.f32.mrb[0].mxu0
        %6823 = vdwg.mxu0
        %6824 = vmatprep.subr.bf16.mxu0 0
        %6825 = vmatpush1.bf16.msra.mxu0 %v4992
        %6826 = vmatprep.subr.bf16.mxu0 0
        %6827 = vmatpush1.bf16.msra.mxu0 %v4993
        %6828 = vmatprep.subr.bf16.mxu0 0
        %6829 = vmatpush1.bf16.msra.mxu0 %v4994
        %6830 = vmatprep.subr.bf16.mxu0 0
        %6831 = vmatpush1.bf16.msra.mxu0 %v4995
        %6832 = vmatprep.subr.bf16.mxu0 0
        %6833 = vmatpush1.bf16.msra.mxu0 %v4996
        %6834 = vmatprep.subr.bf16.mxu0 0
        %6835 = vmatpush1.bf16.msra.mxu0 %v4997
        %6836 = vmatprep.subr.bf16.mxu0 0
        %6837 = vmatpush1.bf16.msra.mxu0 %v4998
        %6838 = vmatprep.subr.bf16.mxu0 0
        %6839 = vmatpush1.bf16.msra.mxu0 %v4999
        %6840 = vmatprep.subr.bf16.mxu0 0
        %6841 = vmatpush1.bf16.msra.mxu0 %v5000
        %6842 = vmatprep.subr.bf16.mxu0 0
        %6843 = vmatpush1.bf16.msra.mxu0 %v5001
        %6844 = vmatprep.subr.bf16.mxu0 0
        %6845 = vmatpush1.bf16.msra.mxu0 %v5002
        %6846 = vmatprep.subr.bf16.mxu0 0
        %6847 = vmatpush1.bf16.msra.mxu0 %v5003
        %6848 = vmatprep.subr.bf16.mxu0 0
        %6849 = vmatpush1.bf16.msra.mxu0 %v5004
        %6850 = vmatprep.subr.bf16.mxu0 0
        %6851 = vmatpush1.bf16.msra.mxu0 %v5005
        %6852 = vmatprep.subr.bf16.mxu0 0
        %6853 = vmatpush1.bf16.msra.mxu0 %v5006
        %6854 = vmatprep.subr.bf16.mxu0 0
        %6855 = vmatpush1.bf16.msra.mxu0 %v5007
        %6856 = vmatprep.mubr.bf16.mxu0 %v750
        %6857 = vmatmul.mubr.bf16.gmra.mrb[0].mxu0 %v749
        %v6858 = vpop.f32.mrb[0].mxu0
        %v6859 = vadd.f32 %v6819, %v6858
        %v6860 = vpop.f32.mrb[0].mxu0
        %v6861 = vpop.f32.mrb[0].mxu0
        %v6862 = vpop.f32.mrb[0].mxu0
        %6863 = vdwg.mxu0
        %6864 = vmatprep.subr.bf16.mxu0 0
        %6865 = vmatpush1.bf16.msra.mxu0 %v5008
        %6866 = vmatprep.subr.bf16.mxu0 0
        %6867 = vmatpush1.bf16.msra.mxu0 %v5009
        %6868 = vmatprep.subr.bf16.mxu0 0
        %6869 = vmatpush1.bf16.msra.mxu0 %v5010
        %6870 = vmatprep.subr.bf16.mxu0 0
        %6871 = vmatpush1.bf16.msra.mxu0 %v5011
        %6872 = vmatprep.subr.bf16.mxu0 0
        %6873 = vmatpush1.bf16.msra.mxu0 %v5012
        %6874 = vmatprep.subr.bf16.mxu0 0
        %6875 = vmatpush1.bf16.msra.mxu0 %v5013
        %6876 = vmatprep.subr.bf16.mxu0 0
        %6877 = vmatpush1.bf16.msra.mxu0 %v5014
        %6878 = vmatprep.subr.bf16.mxu0 0
        %6879 = vmatpush1.bf16.msra.mxu0 %v5015
        %6880 = vmatprep.subr.bf16.mxu0 0
        %6881 = vmatpush1.bf16.msra.mxu0 %v5016
        %6882 = vmatprep.subr.bf16.mxu0 0
        %6883 = vmatpush1.bf16.msra.mxu0 %v5017
        %6884 = vmatprep.subr.bf16.mxu0 0
        %6885 = vmatpush1.bf16.msra.mxu0 %v5018
        %6886 = vmatprep.subr.bf16.mxu0 0
        %6887 = vmatpush1.bf16.msra.mxu0 %v5019
        %6888 = vmatprep.subr.bf16.mxu0 0
        %6889 = vmatpush1.bf16.msra.mxu0 %v5020
        %6890 = vmatprep.subr.bf16.mxu0 0
        %6891 = vmatpush1.bf16.msra.mxu0 %v5021
        %6892 = vmatprep.subr.bf16.mxu0 0
        %6893 = vmatpush1.bf16.msra.mxu0 %v5022
        %6894 = vmatprep.subr.bf16.mxu0 0
        %6895 = vmatpush1.bf16.msra.mxu0 %v5023
        %6896 = vmatprep.mubr.bf16.mxu0 %v752
        %6897 = vmatmul.mubr.bf16.gmra.mrb[0].mxu0 %v751
        %v6898 = vpop.f32.mrb[0].mxu0
        %v6899 = vadd.f32 %v6859, %v6898
        %v6900 = vpop.f32.mrb[0].mxu0
        %v6901 = vpop.f32.mrb[0].mxu0
        %v6902 = vpop.f32.mrb[0].mxu0
        %6903 = vdwg.mxu0
        %6904 = vmatprep.subr.bf16.mxu0 0
        %6905 = vmatpush1.bf16.msra.mxu0 %v5024
        %6906 = vmatprep.subr.bf16.mxu0 0
        %6907 = vmatpush1.bf16.msra.mxu0 %v5025
        %6908 = vmatprep.subr.bf16.mxu0 0
        %6909 = vmatpush1.bf16.msra.mxu0 %v5026
        %6910 = vmatprep.subr.bf16.mxu0 0
        %6911 = vmatpush1.bf16.msra.mxu0 %v5027
        %6912 = vmatprep.subr.bf16.mxu0 0
        %6913 = vmatpush1.bf16.msra.mxu0 %v5028
        %6914 = vmatprep.subr.bf16.mxu0 0
        %6915 = vmatpush1.bf16.msra.mxu0 %v5029
        %6916 = vmatprep.subr.bf16.mxu0 0
        %6917 = vmatpush1.bf16.msra.mxu0 %v5030
        %6918 = vmatprep.subr.bf16.mxu0 0
        %6919 = vmatpush1.bf16.msra.mxu0 %v5031
        %6920 = vmatprep.subr.bf16.mxu0 0
        %6921 = vmatpush1.bf16.msra.mxu0 %v5032
        %6922 = vmatprep.subr.bf16.mxu0 0
        %6923 = vmatpush1.bf16.msra.mxu0 %v5033
        %6924 = vmatprep.subr.bf16.mxu0 0
        %6925 = vmatpush1.bf16.msra.mxu0 %v5034
        %6926 = vmatprep.subr.bf16.mxu0 0
        %6927 = vmatpush1.bf16.msra.mxu0 %v5035
        %6928 = vmatprep.subr.bf16.mxu0 0
        %6929 = vmatpush1.bf16.msra.mxu0 %v5036
        %6930 = vmatprep.subr.bf16.mxu0 0
        %6931 = vmatpush1.bf16.msra.mxu0 %v5037
        %6932 = vmatprep.subr.bf16.mxu0 0
        %6933 = vmatpush1.bf16.msra.mxu0 %v5038
        %6934 = vmatprep.subr.bf16.mxu0 0
        %6935 = vmatpush1.bf16.msra.mxu0 %v5039
        %6936 = vmatprep.mubr.bf16.mxu0 %v754
        %6937 = vmatmul.mubr.bf16.gmra.mrb[0].mxu0 %v753
        %v6938 = vpop.f32.mrb[0].mxu0
        %v6939 = vadd.f32 %v6899, %v6938
        %v6940 = vpop.f32.mrb[0].mxu0
        %v6941 = vpop.f32.mrb[0].mxu0
        %v6942 = vpop.f32.mrb[0].mxu0
        %6943 = vdwg.mxu0
        %6944 = vmatprep.subr.bf16.mxu0 0
        %6945 = vmatpush1.bf16.msra.mxu0 %v5040
        %6946 = vmatprep.subr.bf16.mxu0 0
        %6947 = vmatpush1.bf16.msra.mxu0 %v5041
        %6948 = vmatprep.subr.bf16.mxu0 0
        %6949 = vmatpush1.bf16.msra.mxu0 %v5042
        %6950 = vmatprep.subr.bf16.mxu0 0
        %6951 = vmatpush1.bf16.msra.mxu0 %v5043
        %6952 = vmatprep.subr.bf16.mxu0 0
        %6953 = vmatpush1.bf16.msra.mxu0 %v5044
        %6954 = vmatprep.subr.bf16.mxu0 0
        %6955 = vmatpush1.bf16.msra.mxu0 %v5045
        %6956 = vmatprep.subr.bf16.mxu0 0
        %6957 = vmatpush1.bf16.msra.mxu0 %v5046
        %6958 = vmatprep.subr.bf16.mxu0 0
        %6959 = vmatpush1.bf16.msra.mxu0 %v5047
        %6960 = vmatprep.subr.bf16.mxu0 0
        %6961 = vmatpush1.bf16.msra.mxu0 %v5048
        %6962 = vmatprep.subr.bf16.mxu0 0
        %6963 = vmatpush1.bf16.msra.mxu0 %v5049
        %6964 = vmatprep.subr.bf16.mxu0 0
        %6965 = vmatpush1.bf16.msra.mxu0 %v5050
        %6966 = vmatprep.subr.bf16.mxu0 0
        %6967 = vmatpush1.bf16.msra.mxu0 %v5051
        %6968 = vmatprep.subr.bf16.mxu0 0
        %6969 = vmatpush1.bf16.msra.mxu0 %v5052
        %6970 = vmatprep.subr.bf16.mxu0 0
        %6971 = vmatpush1.bf16.msra.mxu0 %v5053
        %6972 = vmatprep.subr.bf16.mxu0 0
        %6973 = vmatpush1.bf16.msra.mxu0 %v5054
        %6974 = vmatprep.subr.bf16.mxu0 0
        %6975 = vmatpush1.bf16.msra.mxu0 %v5055
        %6976 = vmatprep.mubr.bf16.mxu0 %v756
        %6977 = vmatmul.mubr.bf16.gmra.mrb[0].mxu0 %v755
        %v6978 = vpop.f32.mrb[0].mxu0
        %v6979 = vadd.f32 %v6939, %v6978
        %v6980 = vpop.f32.mrb[0].mxu0
        %v6981 = vpop.f32.mrb[0].mxu0
        %v6982 = vpop.f32.mrb[0].mxu0
        %6983 = vdwg.mxu0
        %6984 = vmatprep.subr.bf16.mxu0 0
        %6985 = vmatpush1.bf16.msra.mxu0 %v5056
        %6986 = vmatprep.subr.bf16.mxu0 0
        %6987 = vmatpush1.bf16.msra.mxu0 %v5057
        %6988 = vmatprep.subr.bf16.mxu0 0
        %6989 = vmatpush1.bf16.msra.mxu0 %v5058
        %6990 = vmatprep.subr.bf16.mxu0 0
        %6991 = vmatpush1.bf16.msra.mxu0 %v5059
        %6992 = vmatprep.subr.bf16.mxu0 0
        %6993 = vmatpush1.bf16.msra.mxu0 %v5060
        %6994 = vmatprep.subr.bf16.mxu0 0
        %6995 = vmatpush1.bf16.msra.mxu0 %v5061
        %6996 = vmatprep.subr.bf16.mxu0 0
        %6997 = vmatpush1.bf16.msra.mxu0 %v5062
        %6998 = vmatprep.subr.bf16.mxu0 0
        %6999 = vmatpush1.bf16.msra.mxu0 %v5063
        %7000 = vmatprep.subr.bf16.mxu0 0
        %7001 = vmatpush1.bf16.msra.mxu0 %v5064
        %7002 = vmatprep.subr.bf16.mxu0 0
        %7003 = vmatpush1.bf16.msra.mxu0 %v5065
        %7004 = vmatprep.subr.bf16.mxu0 0
        %7005 = vmatpush1.bf16.msra.mxu0 %v5066
        %7006 = vmatprep.subr.bf16.mxu0 0
        %7007 = vmatpush1.bf16.msra.mxu0 %v5067
        %7008 = vmatprep.subr.bf16.mxu0 0
        %7009 = vmatpush1.bf16.msra.mxu0 %v5068
        %7010 = vmatprep.subr.bf16.mxu0 0
        %7011 = vmatpush1.bf16.msra.mxu0 %v5069
        %7012 = vmatprep.subr.bf16.mxu0 0
        %7013 = vmatpush1.bf16.msra.mxu0 %v5070
        %7014 = vmatprep.subr.bf16.mxu0 0
        %7015 = vmatpush1.bf16.msra.mxu0 %v5071
        %7016 = vmatprep.mubr.bf16.mxu0 %v758
        %7017 = vmatmul.mubr.bf16.gmra.mrb[0].mxu0 %v757
        %v7018 = vpop.f32.mrb[0].mxu0
        %v7019 = vadd.f32 %v6979, %v7018
        %v7020 = vpop.f32.mrb[0].mxu0
        %v7021 = vpop.f32.mrb[0].mxu0
        %v7022 = vpop.f32.mrb[0].mxu0
        %7023 = vdwg.mxu0
        %7024 = vmatprep.subr.bf16.mxu0 0
        %7025 = vmatpush1.bf16.msra.mxu0 %v5072
        %7026 = vmatprep.subr.bf16.mxu0 0
        %7027 = vmatpush1.bf16.msra.mxu0 %v5073
        %7028 = vmatprep.subr.bf16.mxu0 0
        %7029 = vmatpush1.bf16.msra.mxu0 %v5074
        %7030 = vmatprep.subr.bf16.mxu0 0
        %7031 = vmatpush1.bf16.msra.mxu0 %v5075
        %7032 = vmatprep.subr.bf16.mxu0 0
        %7033 = vmatpush1.bf16.msra.mxu0 %v5076
        %7034 = vmatprep.subr.bf16.mxu0 0
        %7035 = vmatpush1.bf16.msra.mxu0 %v5077
        %7036 = vmatprep.subr.bf16.mxu0 0
        %7037 = vmatpush1.bf16.msra.mxu0 %v5078
        %7038 = vmatprep.subr.bf16.mxu0 0
        %7039 = vmatpush1.bf16.msra.mxu0 %v5079
        %7040 = vmatprep.subr.bf16.mxu0 0
        %7041 = vmatpush1.bf16.msra.mxu0 %v5080
        %7042 = vmatprep.subr.bf16.mxu0 0
        %7043 = vmatpush1.bf16.msra.mxu0 %v5081
        %7044 = vmatprep.subr.bf16.mxu0 0
        %7045 = vmatpush1.bf16.msra.mxu0 %v5082
        %7046 = vmatprep.subr.bf16.mxu0 0
        %7047 = vmatpush1.bf16.msra.mxu0 %v5083
        %7048 = vmatprep.subr.bf16.mxu0 0
        %7049 = vmatpush1.bf16.msra.mxu0 %v5084
        %7050 = vmatprep.subr.bf16.mxu0 0
        %7051 = vmatpush1.bf16.msra.mxu0 %v5085
        %7052 = vmatprep.subr.bf16.mxu0 0
        %7053 = vmatpush1.bf16.msra.mxu0 %v5086
        %7054 = vmatprep.subr.bf16.mxu0 0
        %7055 = vmatpush1.bf16.msra.mxu0 %v5087
        %7056 = vmatprep.mubr.bf16.mxu0 %v760
        %7057 = vmatmul.mubr.bf16.gmra.mrb[0].mxu0 %v759
        %v7058 = vpop.f32.mrb[0].mxu0
        %v7059 = vadd.f32 %v7019, %v7058
        %v7060 = vpop.f32.mrb[0].mxu0
        %v7061 = vpop.f32.mrb[0].mxu0
        %v7062 = vpop.f32.mrb[0].mxu0
        %7063 = vdwg.mxu0
        %7064 = vmatprep.subr.bf16.mxu0 0
        %7065 = vmatpush1.bf16.msra.mxu0 %v5088
        %7066 = vmatprep.subr.bf16.mxu0 0
        %7067 = vmatpush1.bf16.msra.mxu0 %v5089
        %7068 = vmatprep.subr.bf16.mxu0 0
        %7069 = vmatpush1.bf16.msra.mxu0 %v5090
        %7070 = vmatprep.subr.bf16.mxu0 0
        %7071 = vmatpush1.bf16.msra.mxu0 %v5091
        %7072 = vmatprep.subr.bf16.mxu0 0
        %7073 = vmatpush1.bf16.msra.mxu0 %v5092
        %7074 = vmatprep.subr.bf16.mxu0 0
        %7075 = vmatpush1.bf16.msra.mxu0 %v5093
        %7076 = vmatprep.subr.bf16.mxu0 0
        %7077 = vmatpush1.bf16.msra.mxu0 %v5094
        %7078 = vmatprep.subr.bf16.mxu0 0
        %7079 = vmatpush1.bf16.msra.mxu0 %v5095
        %7080 = vmatprep.subr.bf16.mxu0 0
        %7081 = vmatpush1.bf16.msra.mxu0 %v5096
        %7082 = vmatprep.subr.bf16.mxu0 0
        %7083 = vmatpush1.bf16.msra.mxu0 %v5097
        %7084 = vmatprep.subr.bf16.mxu0 0
        %7085 = vmatpush1.bf16.msra.mxu0 %v5098
        %7086 = vmatprep.subr.bf16.mxu0 0
        %7087 = vmatpush1.bf16.msra.mxu0 %v5099
        %7088 = vmatprep.subr.bf16.mxu0 0
        %7089 = vmatpush1.bf16.msra.mxu0 %v5100
        %7090 = vmatprep.subr.bf16.mxu0 0
        %7091 = vmatpush1.bf16.msra.mxu0 %v5101
        %7092 = vmatprep.subr.bf16.mxu0 0
        %7093 = vmatpush1.bf16.msra.mxu0 %v5102
        %7094 = vmatprep.subr.bf16.mxu0 0
        %7095 = vmatpush1.bf16.msra.mxu0 %v5103
        %7096 = vmatprep.mubr.bf16.mxu0 %v762
        %7097 = vmatmul.mubr.bf16.gmra.mrb[0].mxu0 %v761
        %v7098 = vpop.f32.mrb[0].mxu0
        %v7099 = vadd.f32 %v7059, %v7098
        %v7100 = vpop.f32.mrb[0].mxu0
        %v7101 = vpop.f32.mrb[0].mxu0
        %v7102 = vpop.f32.mrb[0].mxu0
        %7103 = vdwg.mxu0
        %7104 = vmatprep.subr.bf16.mxu0 0
        %7105 = vmatpush1.bf16.msra.mxu0 %v5104
        %7106 = vmatprep.subr.bf16.mxu0 0
        %7107 = vmatpush1.bf16.msra.mxu0 %v5105
        %7108 = vmatprep.subr.bf16.mxu0 0
        %7109 = vmatpush1.bf16.msra.mxu0 %v5106
        %7110 = vmatprep.subr.bf16.mxu0 0
        %7111 = vmatpush1.bf16.msra.mxu0 %v5107
        %7112 = vmatprep.subr.bf16.mxu0 0
        %7113 = vmatpush1.bf16.msra.mxu0 %v5108
        %7114 = vmatprep.subr.bf16.mxu0 0
        %7115 = vmatpush1.bf16.msra.mxu0 %v5109
        %7116 = vmatprep.subr.bf16.mxu0 0
        %7117 = vmatpush1.bf16.msra.mxu0 %v5110
        %7118 = vmatprep.subr.bf16.mxu0 0
        %7119 = vmatpush1.bf16.msra.mxu0 %v5111
        %7120 = vmatprep.subr.bf16.mxu0 0
        %7121 = vmatpush1.bf16.msra.mxu0 %v5112
        %7122 = vmatprep.subr.bf16.mxu0 0
        %7123 = vmatpush1.bf16.msra.mxu0 %v5113
        %7124 = vmatprep.subr.bf16.mxu0 0
        %7125 = vmatpush1.bf16.msra.mxu0 %v5114
        %7126 = vmatprep.subr.bf16.mxu0 0
        %7127 = vmatpush1.bf16.msra.mxu0 %v5115
        %7128 = vmatprep.subr.bf16.mxu0 0
        %7129 = vmatpush1.bf16.msra.mxu0 %v5116
        %7130 = vmatprep.subr.bf16.mxu0 0
        %7131 = vmatpush1.bf16.msra.mxu0 %v5117
        %7132 = vmatprep.subr.bf16.mxu0 0
        %7133 = vmatpush1.bf16.msra.mxu0 %v5118
        %7134 = vmatprep.subr.bf16.mxu0 0
        %7135 = vmatpush1.bf16.msra.mxu0 %v5119
        %7136 = vmatprep.mubr.bf16.mxu0 %v764
        %7137 = vmatmul.mubr.bf16.gmra.mrb[0].mxu0 %v763
        %v7138 = vpop.f32.mrb[0].mxu0
        %v7139 = vadd.f32 %v7099, %v7138
        %v7140 = vpop.f32.mrb[0].mxu0
        %v7141 = vpop.f32.mrb[0].mxu0
        %v7142 = vpop.f32.mrb[0].mxu0
        %7143 = vdwg.mxu0
        %7144 = vmatprep.subr.bf16.mxu0 0
        %7145 = vmatpush1.bf16.msra.mxu0 %v5120
        %7146 = vmatprep.subr.bf16.mxu0 0
        %7147 = vmatpush1.bf16.msra.mxu0 %v5121
        %7148 = vmatprep.subr.bf16.mxu0 0
        %7149 = vmatpush1.bf16.msra.mxu0 %v5122
        %7150 = vmatprep.subr.bf16.mxu0 0
        %7151 = vmatpush1.bf16.msra.mxu0 %v5123
        %7152 = vmatprep.subr.bf16.mxu0 0
        %7153 = vmatpush1.bf16.msra.mxu0 %v5124
        %7154 = vmatprep.subr.bf16.mxu0 0
        %7155 = vmatpush1.bf16.msra.mxu0 %v5125
        %7156 = vmatprep.subr.bf16.mxu0 0
        %7157 = vmatpush1.bf16.msra.mxu0 %v5126
        %7158 = vmatprep.subr.bf16.mxu0 0
        %7159 = vmatpush1.bf16.msra.mxu0 %v5127
        %7160 = vmatprep.subr.bf16.mxu0 0
        %7161 = vmatpush1.bf16.msra.mxu0 %v5128
        %7162 = vmatprep.subr.bf16.mxu0 0
        %7163 = vmatpush1.bf16.msra.mxu0 %v5129
        %7164 = vmatprep.subr.bf16.mxu0 0
        %7165 = vmatpush1.bf16.msra.mxu0 %v5130
        %7166 = vmatprep.subr.bf16.mxu0 0
        %7167 = vmatpush1.bf16.msra.mxu0 %v5131
        %7168 = vmatprep.subr.bf16.mxu0 0
        %7169 = vmatpush1.bf16.msra.mxu0 %v5132
        %7170 = vmatprep.subr.bf16.mxu0 0
        %7171 = vmatpush1.bf16.msra.mxu0 %v5133
        %7172 = vmatprep.subr.bf16.mxu0 0
        %7173 = vmatpush1.bf16.msra.mxu0 %v5134
        %7174 = vmatprep.subr.bf16.mxu0 0
        %7175 = vmatpush1.bf16.msra.mxu0 %v5135
        %7176 = vmatprep.mubr.bf16.mxu0 %v766
        %7177 = vmatmul.mubr.bf16.gmra.mrb[0].mxu0 %v765
        %v7178 = vpop.f32.mrb[0].mxu0
        %v7179 = vadd.f32 %v7139, %v7178
        %v7180 = vpop.f32.mrb[0].mxu0
        %v7181 = vpop.f32.mrb[0].mxu0
        %v7182 = vpop.f32.mrb[0].mxu0
        %7183 = vdwg.mxu0
        %7184 = vmatprep.subr.bf16.mxu0 0
        %7185 = vmatpush1.bf16.msra.mxu0 %v5136
        %7186 = vmatprep.subr.bf16.mxu0 0
        %7187 = vmatpush1.bf16.msra.mxu0 %v5137
        %7188 = vmatprep.subr.bf16.mxu0 0
        %7189 = vmatpush1.bf16.msra.mxu0 %v5138
        %7190 = vmatprep.subr.bf16.mxu0 0
        %7191 = vmatpush1.bf16.msra.mxu0 %v5139
        %7192 = vmatprep.subr.bf16.mxu0 0
        %7193 = vmatpush1.bf16.msra.mxu0 %v5140
        %7194 = vmatprep.subr.bf16.mxu0 0
        %7195 = vmatpush1.bf16.msra.mxu0 %v5141
        %7196 = vmatprep.subr.bf16.mxu0 0
        %7197 = vmatpush1.bf16.msra.mxu0 %v5142
        %7198 = vmatprep.subr.bf16.mxu0 0
        %7199 = vmatpush1.bf16.msra.mxu0 %v5143
        %7200 = vmatprep.subr.bf16.mxu0 0
        %7201 = vmatpush1.bf16.msra.mxu0 %v5144
        %7202 = vmatprep.subr.bf16.mxu0 0
        %7203 = vmatpush1.bf16.msra.mxu0 %v5145
        %7204 = vmatprep.subr.bf16.mxu0 0
        %7205 = vmatpush1.bf16.msra.mxu0 %v5146
        %7206 = vmatprep.subr.bf16.mxu0 0
        %7207 = vmatpush1.bf16.msra.mxu0 %v5147
        %7208 = vmatprep.subr.bf16.mxu0 0
        %7209 = vmatpush1.bf16.msra.mxu0 %v5148
        %7210 = vmatprep.subr.bf16.mxu0 0
        %7211 = vmatpush1.bf16.msra.mxu0 %v5149
        %7212 = vmatprep.subr.bf16.mxu0 0
        %7213 = vmatpush1.bf16.msra.mxu0 %v5150
        %7214 = vmatprep.subr.bf16.mxu0 0
        %7215 = vmatpush1.bf16.msra.mxu0 %v5151
        %7216 = vmatprep.mubr.bf16.mxu0 %v768
        %7217 = vmatmul.mubr.bf16.gmra.mrb[0].mxu0 %v767
        %v7218 = vpop.f32.mrb[0].mxu0
        %v7219 = vadd.f32 %v7179, %v7218
        %v7220 = vpop.f32.mrb[0].mxu0
        %v7221 = vpop.f32.mrb[0].mxu0
        %v7222 = vpop.f32.mrb[0].mxu0
        %7223 = vdwg.mxu0
        %7224 = vmatprep.subr.bf16.mxu0 0
        %7225 = vmatpush1.bf16.msra.mxu0 %v5152
        %7226 = vmatprep.subr.bf16.mxu0 0
        %7227 = vmatpush1.bf16.msra.mxu0 %v5153
        %7228 = vmatprep.subr.bf16.mxu0 0
        %7229 = vmatpush1.bf16.msra.mxu0 %v5154
        %7230 = vmatprep.subr.bf16.mxu0 0
        %7231 = vmatpush1.bf16.msra.mxu0 %v5155
        %7232 = vmatprep.subr.bf16.mxu0 0
        %7233 = vmatpush1.bf16.msra.mxu0 %v5156
        %7234 = vmatprep.subr.bf16.mxu0 0
        %7235 = vmatpush1.bf16.msra.mxu0 %v5157
        %7236 = vmatprep.subr.bf16.mxu0 0
        %7237 = vmatpush1.bf16.msra.mxu0 %v5158
        %7238 = vmatprep.subr.bf16.mxu0 0
        %7239 = vmatpush1.bf16.msra.mxu0 %v5159
        %7240 = vmatprep.subr.bf16.mxu0 0
        %7241 = vmatpush1.bf16.msra.mxu0 %v5160
        %7242 = vmatprep.subr.bf16.mxu0 0
        %7243 = vmatpush1.bf16.msra.mxu0 %v5161
        %7244 = vmatprep.subr.bf16.mxu0 0
        %7245 = vmatpush1.bf16.msra.mxu0 %v5162
        %7246 = vmatprep.subr.bf16.mxu0 0
        %7247 = vmatpush1.bf16.msra.mxu0 %v5163
        %7248 = vmatprep.subr.bf16.mxu0 0
        %7249 = vmatpush1.bf16.msra.mxu0 %v5164
        %7250 = vmatprep.subr.bf16.mxu0 0
        %7251 = vmatpush1.bf16.msra.mxu0 %v5165
        %7252 = vmatprep.subr.bf16.mxu0 0
        %7253 = vmatpush1.bf16.msra.mxu0 %v5166
        %7254 = vmatprep.subr.bf16.mxu0 0
        %7255 = vmatpush1.bf16.msra.mxu0 %v5167
        %7256 = vmatprep.mubr.bf16.mxu0 %v770
        %7257 = vmatmul.mubr.bf16.gmra.mrb[0].mxu0 %v769
        %v7258 = vpop.f32.mrb[0].mxu0
        %v7259 = vadd.f32 %v7219, %v7258
        %v7260 = vpop.f32.mrb[0].mxu0
        %v7261 = vpop.f32.mrb[0].mxu0
        %v7262 = vpop.f32.mrb[0].mxu0
        %7263 = vdwg.mxu0
        %7264 = vmatprep.subr.bf16.mxu0 0
        %7265 = vmatpush1.bf16.msra.mxu0 %v5168
        %7266 = vmatprep.subr.bf16.mxu0 0
        %7267 = vmatpush1.bf16.msra.mxu0 %v5169
        %7268 = vmatprep.subr.bf16.mxu0 0
        %7269 = vmatpush1.bf16.msra.mxu0 %v5170
        %7270 = vmatprep.subr.bf16.mxu0 0
        %7271 = vmatpush1.bf16.msra.mxu0 %v5171
        %7272 = vmatprep.subr.bf16.mxu0 0
        %7273 = vmatpush1.bf16.msra.mxu0 %v5172
        %7274 = vmatprep.subr.bf16.mxu0 0
        %7275 = vmatpush1.bf16.msra.mxu0 %v5173
        %7276 = vmatprep.subr.bf16.mxu0 0
        %7277 = vmatpush1.bf16.msra.mxu0 %v5174
        %7278 = vmatprep.subr.bf16.mxu0 0
        %7279 = vmatpush1.bf16.msra.mxu0 %v5175
        %7280 = vmatprep.subr.bf16.mxu0 0
        %7281 = vmatpush1.bf16.msra.mxu0 %v5176
        %7282 = vmatprep.subr.bf16.mxu0 0
        %7283 = vmatpush1.bf16.msra.mxu0 %v5177
        %7284 = vmatprep.subr.bf16.mxu0 0
        %7285 = vmatpush1.bf16.msra.mxu0 %v5178
        %7286 = vmatprep.subr.bf16.mxu0 0
        %7287 = vmatpush1.bf16.msra.mxu0 %v5179
        %7288 = vmatprep.subr.bf16.mxu0 0
        %7289 = vmatpush1.bf16.msra.mxu0 %v5180
        %7290 = vmatprep.subr.bf16.mxu0 0
        %7291 = vmatpush1.bf16.msra.mxu0 %v5181
        %7292 = vmatprep.subr.bf16.mxu0 0
        %7293 = vmatpush1.bf16.msra.mxu0 %v5182
        %7294 = vmatprep.subr.bf16.mxu0 0
        %7295 = vmatpush1.bf16.msra.mxu0 %v5183
        %7296 = vmatprep.mubr.bf16.mxu0 %v772
        %7297 = vmatmul.mubr.bf16.gmra.mrb[0].mxu0 %v771
        %v7298 = vpop.f32.mrb[0].mxu0
        %v7299 = vadd.f32 %v7259, %v7298
        %v7300 = vpop.f32.mrb[0].mxu0
        %v7301 = vpop.f32.mrb[0].mxu0
        %v7302 = vpop.f32.mrb[0].mxu0
        %7303 = vdwg.mxu0
        %7304 = vmatprep.subr.bf16.mxu0 0
        %7305 = vmatpush1.bf16.msra.mxu0 %v5184
        %7306 = vmatprep.subr.bf16.mxu0 0
        %7307 = vmatpush1.bf16.msra.mxu0 %v5185
        %7308 = vmatprep.subr.bf16.mxu0 0
        %7309 = vmatpush1.bf16.msra.mxu0 %v5186
        %7310 = vmatprep.subr.bf16.mxu0 0
        %7311 = vmatpush1.bf16.msra.mxu0 %v5187
        %7312 = vmatprep.subr.bf16.mxu0 0
        %7313 = vmatpush1.bf16.msra.mxu0 %v5188
        %7314 = vmatprep.subr.bf16.mxu0 0
        %7315 = vmatpush1.bf16.msra.mxu0 %v5189
        %7316 = vmatprep.subr.bf16.mxu0 0
        %7317 = vmatpush1.bf16.msra.mxu0 %v5190
        %7318 = vmatprep.subr.bf16.mxu0 0
        %7319 = vmatpush1.bf16.msra.mxu0 %v5191
        %7320 = vmatprep.subr.bf16.mxu0 0
        %7321 = vmatpush1.bf16.msra.mxu0 %v5192
        %7322 = vmatprep.subr.bf16.mxu0 0
        %7323 = vmatpush1.bf16.msra.mxu0 %v5193
        %7324 = vmatprep.subr.bf16.mxu0 0
        %7325 = vmatpush1.bf16.msra.mxu0 %v5194
        %7326 = vmatprep.subr.bf16.mxu0 0
        %7327 = vmatpush1.bf16.msra.mxu0 %v5195
        %7328 = vmatprep.subr.bf16.mxu0 0
        %7329 = vmatpush1.bf16.msra.mxu0 %v5196
        %7330 = vmatprep.subr.bf16.mxu0 0
        %7331 = vmatpush1.bf16.msra.mxu0 %v5197
        %7332 = vmatprep.subr.bf16.mxu0 0
        %7333 = vmatpush1.bf16.msra.mxu0 %v5198
        %7334 = vmatprep.subr.bf16.mxu0 0
        %7335 = vmatpush1.bf16.msra.mxu0 %v5199
        %7336 = vmatprep.mubr.bf16.mxu0 %v774
        %7337 = vmatmul.mubr.bf16.gmra.mrb[0].mxu0 %v773
        %v7338 = vpop.f32.mrb[0].mxu0
        %v7339 = vadd.f32 %v7299, %v7338
        %v7340 = vpop.f32.mrb[0].mxu0
        %v7341 = vpop.f32.mrb[0].mxu0
        %v7342 = vpop.f32.mrb[0].mxu0
        %7343 = vdwg.mxu0
        %7344 = vmatprep.subr.bf16.mxu0 0
        %7345 = vmatpush1.bf16.msra.mxu0 %v5200
        %7346 = vmatprep.subr.bf16.mxu0 0
        %7347 = vmatpush1.bf16.msra.mxu0 %v5201
        %7348 = vmatprep.subr.bf16.mxu0 0
        %7349 = vmatpush1.bf16.msra.mxu0 %v5202
        %7350 = vmatprep.subr.bf16.mxu0 0
        %7351 = vmatpush1.bf16.msra.mxu0 %v5203
        %7352 = vmatprep.subr.bf16.mxu0 0
        %7353 = vmatpush1.bf16.msra.mxu0 %v5204
        %7354 = vmatprep.subr.bf16.mxu0 0
        %7355 = vmatpush1.bf16.msra.mxu0 %v5205
        %7356 = vmatprep.subr.bf16.mxu0 0
        %7357 = vmatpush1.bf16.msra.mxu0 %v5206
        %7358 = vmatprep.subr.bf16.mxu0 0
        %7359 = vmatpush1.bf16.msra.mxu0 %v5207
        %7360 = vmatprep.subr.bf16.mxu0 0
        %7361 = vmatpush1.bf16.msra.mxu0 %v5208
        %7362 = vmatprep.subr.bf16.mxu0 0
        %7363 = vmatpush1.bf16.msra.mxu0 %v5209
        %7364 = vmatprep.subr.bf16.mxu0 0
        %7365 = vmatpush1.bf16.msra.mxu0 %v5210
        %7366 = vmatprep.subr.bf16.mxu0 0
        %7367 = vmatpush1.bf16.msra.mxu0 %v5211
        %7368 = vmatprep.subr.bf16.mxu0 0
        %7369 = vmatpush1.bf16.msra.mxu0 %v5212
        %7370 = vmatprep.subr.bf16.mxu0 0
        %7371 = vmatpush1.bf16.msra.mxu0 %v5213
        %7372 = vmatprep.subr.bf16.mxu0 0
        %7373 = vmatpush1.bf16.msra.mxu0 %v5214
        %7374 = vmatprep.subr.bf16.mxu0 0
        %7375 = vmatpush1.bf16.msra.mxu0 %v5215
        %7376 = vmatprep.mubr.bf16.mxu0 %v776
        %7377 = vmatmul.mubr.bf16.gmra.mrb[0].mxu0 %v775
        %v7378 = vpop.f32.mrb[0].mxu0
        %v7379 = vadd.f32 %v7339, %v7378
        %v7380 = vpop.f32.mrb[0].mxu0
        %v7381 = vpop.f32.mrb[0].mxu0
        %v7382 = vpop.f32.mrb[0].mxu0
        %7383 = vdwg.mxu0
        %7384 = vmatprep.subr.bf16.mxu0 0
        %7385 = vmatpush1.bf16.msra.mxu0 %v5216
        %7386 = vmatprep.subr.bf16.mxu0 0
        %7387 = vmatpush1.bf16.msra.mxu0 %v5217
        %7388 = vmatprep.subr.bf16.mxu0 0
        %7389 = vmatpush1.bf16.msra.mxu0 %v5218
        %7390 = vmatprep.subr.bf16.mxu0 0
        %7391 = vmatpush1.bf16.msra.mxu0 %v5219
        %7392 = vmatprep.subr.bf16.mxu0 0
        %7393 = vmatpush1.bf16.msra.mxu0 %v5220
        %7394 = vmatprep.subr.bf16.mxu0 0
        %7395 = vmatpush1.bf16.msra.mxu0 %v5221
        %7396 = vmatprep.subr.bf16.mxu0 0
        %7397 = vmatpush1.bf16.msra.mxu0 %v5222
        %7398 = vmatprep.subr.bf16.mxu0 0
        %7399 = vmatpush1.bf16.msra.mxu0 %v5223
        %7400 = vmatprep.subr.bf16.mxu0 0
        %7401 = vmatpush1.bf16.msra.mxu0 %v5224
        %7402 = vmatprep.subr.bf16.mxu0 0
        %7403 = vmatpush1.bf16.msra.mxu0 %v5225
        %7404 = vmatprep.subr.bf16.mxu0 0
        %7405 = vmatpush1.bf16.msra.mxu0 %v5226
        %7406 = vmatprep.subr.bf16.mxu0 0
        %7407 = vmatpush1.bf16.msra.mxu0 %v5227
        %7408 = vmatprep.subr.bf16.mxu0 0
        %7409 = vmatpush1.bf16.msra.mxu0 %v5228
        %7410 = vmatprep.subr.bf16.mxu0 0
        %7411 = vmatpush1.bf16.msra.mxu0 %v5229
        %7412 = vmatprep.subr.bf16.mxu0 0
        %7413 = vmatpush1.bf16.msra.mxu0 %v5230
        %7414 = vmatprep.subr.bf16.mxu0 0
        %7415 = vmatpush1.bf16.msra.mxu0 %v5231
        %7416 = vmatprep.mubr.bf16.mxu0 %v778
        %7417 = vmatmul.mubr.bf16.gmra.mrb[0].mxu0 %v777
        %v7418 = vpop.f32.mrb[0].mxu0
        %v7419 = vadd.f32 %v7379, %v7418
        %v7420 = vpop.f32.mrb[0].mxu0
        %v7421 = vpop.f32.mrb[0].mxu0
        %v7422 = vpop.f32.mrb[0].mxu0
        %7423 = vdwg.mxu0
        %7424 = vmatprep.subr.bf16.mxu0 0
        %7425 = vmatpush1.bf16.msra.mxu0 %v5232
        %7426 = vmatprep.subr.bf16.mxu0 0
        %7427 = vmatpush1.bf16.msra.mxu0 %v5233
        %7428 = vmatprep.subr.bf16.mxu0 0
        %7429 = vmatpush1.bf16.msra.mxu0 %v5234
        %7430 = vmatprep.subr.bf16.mxu0 0
        %7431 = vmatpush1.bf16.msra.mxu0 %v5235
        %7432 = vmatprep.subr.bf16.mxu0 0
        %7433 = vmatpush1.bf16.msra.mxu0 %v5236
        %7434 = vmatprep.subr.bf16.mxu0 0
        %7435 = vmatpush1.bf16.msra.mxu0 %v5237
        %7436 = vmatprep.subr.bf16.mxu0 0
        %7437 = vmatpush1.bf16.msra.mxu0 %v5238
        %7438 = vmatprep.subr.bf16.mxu0 0
        %7439 = vmatpush1.bf16.msra.mxu0 %v5239
        %7440 = vmatprep.subr.bf16.mxu0 0
        %7441 = vmatpush1.bf16.msra.mxu0 %v5240
        %7442 = vmatprep.subr.bf16.mxu0 0
        %7443 = vmatpush1.bf16.msra.mxu0 %v5241
        %7444 = vmatprep.subr.bf16.mxu0 0
        %7445 = vmatpush1.bf16.msra.mxu0 %v5242
        %7446 = vmatprep.subr.bf16.mxu0 0
        %7447 = vmatpush1.bf16.msra.mxu0 %v5243
        %7448 = vmatprep.subr.bf16.mxu0 0
        %7449 = vmatpush1.bf16.msra.mxu0 %v5244
        %7450 = vmatprep.subr.bf16.mxu0 0
        %7451 = vmatpush1.bf16.msra.mxu0 %v5245
        %7452 = vmatprep.subr.bf16.mxu0 0
        %7453 = vmatpush1.bf16.msra.mxu0 %v5246
        %7454 = vmatprep.subr.bf16.mxu0 0
        %7455 = vmatpush1.bf16.msra.mxu0 %v5247
        %7456 = vmatprep.mubr.bf16.mxu0 %v780
        %7457 = vmatmul.mubr.bf16.gmra.mrb[0].mxu0 %v779
        %v7458 = vpop.f32.mrb[0].mxu0
        %v7459 = vadd.f32 %v7419, %v7458
        %v7460 = vpop.f32.mrb[0].mxu0
        %v7461 = vpop.f32.mrb[0].mxu0
        %v7462 = vpop.f32.mrb[0].mxu0
        %7463 = vdwg.mxu0
        %7464 = vmatprep.subr.bf16.mxu0 0
        %7465 = vmatpush1.bf16.msra.mxu0 %v5248
        %7466 = vmatprep.subr.bf16.mxu0 0
        %7467 = vmatpush1.bf16.msra.mxu0 %v5249
        %7468 = vmatprep.subr.bf16.mxu0 0
        %7469 = vmatpush1.bf16.msra.mxu0 %v5250
        %7470 = vmatprep.subr.bf16.mxu0 0
        %7471 = vmatpush1.bf16.msra.mxu0 %v5251
        %7472 = vmatprep.subr.bf16.mxu0 0
        %7473 = vmatpush1.bf16.msra.mxu0 %v5252
        %7474 = vmatprep.subr.bf16.mxu0 0
        %7475 = vmatpush1.bf16.msra.mxu0 %v5253
        %7476 = vmatprep.subr.bf16.mxu0 0
        %7477 = vmatpush1.bf16.msra.mxu0 %v5254
        %7478 = vmatprep.subr.bf16.mxu0 0
        %7479 = vmatpush1.bf16.msra.mxu0 %v5255
        %7480 = vmatprep.subr.bf16.mxu0 0
        %7481 = vmatpush1.bf16.msra.mxu0 %v5256
        %7482 = vmatprep.subr.bf16.mxu0 0
        %7483 = vmatpush1.bf16.msra.mxu0 %v5257
        %7484 = vmatprep.subr.bf16.mxu0 0
        %7485 = vmatpush1.bf16.msra.mxu0 %v5258
        %7486 = vmatprep.subr.bf16.mxu0 0
        %7487 = vmatpush1.bf16.msra.mxu0 %v5259
        %7488 = vmatprep.subr.bf16.mxu0 0
        %7489 = vmatpush1.bf16.msra.mxu0 %v5260
        %7490 = vmatprep.subr.bf16.mxu0 0
        %7491 = vmatpush1.bf16.msra.mxu0 %v5261
        %7492 = vmatprep.subr.bf16.mxu0 0
        %7493 = vmatpush1.bf16.msra.mxu0 %v5262
        %7494 = vmatprep.subr.bf16.mxu0 0
        %7495 = vmatpush1.bf16.msra.mxu0 %v5263
        %7496 = vmatprep.mubr.bf16.mxu0 %v782
        %7497 = vmatmul.mubr.bf16.gmra.mrb[0].mxu0 %v781
        %v7498 = vpop.f32.mrb[0].mxu0
        %v7499 = vadd.f32 %v7459, %v7498
        %v7500 = vpop.f32.mrb[0].mxu0
        %v7501 = vpop.f32.mrb[0].mxu0
        %v7502 = vpop.f32.mrb[0].mxu0
        %7503 = vdwg.mxu0
        %v7504 = vadd.f32 %v783, %v7499
        %7505 = vst [vmem:[#allocation2] sm:$0x1] %v7504
        %p7506 = scmp.eq.s32.totalorder %s23, 3
        // Predicated region
        $region57: #{baseline_estimator_forward.1} parent=39 // pred_check
          %p7507 = pneg %p7506
        $region58: #{baseline_estimator_forward.1} parent=39 // pred_check_branch
          %7509 = sbr.rel (%p7507) target = $region60
        $region59: #{baseline_estimator_forward.1} parent=39 // pred_region
          %v7510 = vld [vmem:[#allocation2] sm:$0x1]
          %v7511 = vld [vmem:[#allocation7] sm:$0x1]
          %v7512 = vadd.f32 %v7510, %v7511
          %v7513 = vmax.f32 %v7512, 0.0
          %v7514 = vld [vmem:[#allocation9] sm:$0x1]
          %v7515 = vmul.f32 %v7513, %v7514
          %vm7516 = vcmask 1040384
          %v7517 = vsel %vm7516, %v7515, 0.0
          %7518 = vadd.xlane.f32.xlu0 %v7517
          %v7519 = vpop.xlane.xlu0 %7518
          %v7520 = vld [vmem:[#allocation3] sm:$0x1]
          %v7521 = vadd.f32 %v7519, %v7520
          %vm7522 = vcmask 0
          %7523 = vst.msk [vmem:[#allocation10] sm:$0x1] %vm7522, %v7521
        $region60: #{baseline_estimator_forward.1} parent=39 // pred_fallthru
          _
        // Predicated region
        $region61: #{baseline_estimator_forward.1} parent=39 // pred_check
          %p7524 = pneg %p151
        $region62: #{baseline_estimator_forward.1} parent=39 // pred_check_branch
          %7526 = sbr.rel (%p7524) target = $region64
        $region63: #{baseline_estimator_forward.1} parent=39 // pred_region
          %s7528 = ssub.s32 16, 16
          %7529 = vsyncadd [#allocation6], %s7528
          %s7531 = sshll.u32 [#allocation10], 4
          %s7532 = int_to_ptr.vmem [resolvable:$true] %s7531
          %7534 = dma.vmem_to_hbm [thread:$0]  %s7532, 16, %s5, [#allocation6]
        $region64: #{baseline_estimator_forward.1} parent=39 // pred_fallthru
          _
        // Predicated region
        $region65: #{baseline_estimator_forward.1} parent=39 // pred_check
          %p7535 = pneg %p151
        $region66: #{baseline_estimator_forward.1} parent=39 // pred_check_branch
          %7537 = sbr.rel (%p7535) target = $region68
        $region67: #{baseline_estimator_forward.1} parent=39 // pred_region
          %7538 = dma.done [#allocation6], 16
        $region68: #{baseline_estimator_forward.1} parent=39 // pred_fallthru
          _
      $region40: #{baseline_estimator_forward.1} parent=5 // pred_fallthru
        _
      %p7539 = scmp.le.s32.totalorder 2, %s18
      // Predicated region
      $region69: #{baseline_estimator_forward.1} parent=5 // pred_check
        %p7540 = pneg %p7539
      $region70: #{baseline_estimator_forward.1} parent=5 // pred_check_branch
        %7542 = sbr.rel (%p7540) target = $region72
      $region71: #{baseline_estimator_forward.1} parent=5 // pred_region
        %s7543 = ssub.s32 %s18, 2
      $region72: #{baseline_estimator_forward.1} parent=5 // pred_fallthru
        _
    $region6: #{baseline_estimator_forward.1} parent=1 // loop_footer
      %s22 = sadd.s32 1, %s18
    $region7: #{baseline_estimator_forward.1} parent=1 // loop_footer_branch
      %17 = sbr.rel target = $region3
    $region8: #{baseline_estimator_forward.1} parent=1 // loop_exit
      _
    %7544 = vsyncpa [#allocation5], 1
    %s7545 = scalar_lea.sflag [#allocation5], 1
    %7546 = vsyncpa %s7545, 1
    %7547 = vsyncpa [#allocation8], 1
    %7548 = vsyncpa [#allocation6], 1
    %s7549 = scalar_lea.sflag [#allocation6], 1
    %7550 = vsyncpa %s7549, 1

</llo_original>
